<compile_context>
chip_gen: v7x
topology: tpu7x:2x2x1
jax: 0.10.0
libtpu: 0.0.40
codegen_flags: <defaults>
</compile_context>

<pallas_src>
import functools

import jax
import jax.numpy as jnp
import numpy as np
from jax import lax
from jax.experimental import pallas as pl
from jax.experimental.pallas import tpu as pltpu

EPS = 1e-5      # nn.BatchNorm2d default eps
LANE = 128
_PAD = 8        # slack rows so the dx-shifted tap windows stay in-bounds


def _round_up(x, m):
    return (x + m - 1) // m * m


def _vmem_limit_bytes():
    try:
        phys = pltpu.get_tpu_info().vmem_capacity_bytes
    except Exception:
        phys = 64 * 2**20                       # conservative (v7x) fallback
    return int(min(int(0.75 * phys), 100 * 2**20))


def _pick_row_tile(H, W, target_rows=4096):
    th_max = max(1, target_rows // W)
    best = 1
    for th in range(1, H + 1):
        if H % th == 0 and th <= th_max:
            best = th
    return best


# --------------------------------------------------------------------------------------
# conv kernel: (optional fused BN+ReLU of the input) -> 3x3 conv as 9 shifted matmuls
#              -> pre-BN bf16 output + accumulated per-image BN statistics
# --------------------------------------------------------------------------------------
def _conv3x3_kernel(x_ref, top_ref, bot_ref, sc_ref, sh_ref, w_ref,
                    y_ref, s1_ref, s2_ref, a_ref,
                    *, TH, W, Cip, Cop, apply_input_act):
    h = pl.program_id(1)
    n_tiles = pl.num_programs(1)
    RT = TH * W                      # flattened rows handled by this tile
    SLAB = (TH + 2) * W              # tile rows + 1 halo image-row above and below

    def act(v):
        v = v.astype(jnp.float32)
        if apply_input_act:          # BN of the previous conv folded to scale/shift + ReLU
            v = jnp.maximum(v * sc_ref[...] + sh_ref[...], 0.0)
        return v

    # Zero the slack rows once (read only at masked positions, but must not hold
    # NaN/Inf garbage because the masking below is multiplicative).
    a_ref[pl.ds(0, _PAD), :] = jnp.zeros((_PAD, Cip), jnp.float32)
    a_ref[pl.ds(_PAD + SLAB, _PAD), :] = jnp.zeros((_PAD, Cip), jnp.float32)

    # Build the extended row slab: [halo row above | TH tile rows | halo row below].
    top_gate = jnp.where(h == 0, 0.0, 1.0)              # zero padding at the image top
    bot_gate = jnp.where(h == n_tiles - 1, 0.0, 1.0)    # zero padding at the image bottom
    a_ref[pl.ds(_PAD + W, RT), :] = act(x_ref[0])
    a_ref[pl.ds(_PAD, W), :] = act(top_ref[0]) * top_gate
    a_ref[pl.ds(_PAD + (TH + 1) * W, W), :] = act(bot_ref[0]) * bot_gate

    # Column-validity masks for the dx = -1 / +1 taps (hoisted out of the tap loop).
    col = lax.broadcasted_iota(jnp.int32, (RT, Cip), 0) % W
    left_ok = (col != 0).astype(jnp.float32)          # dx = -1: output col 0 reads pad
    right_ok = (col != W - 1).astype(jnp.float32)     # dx = +1: output col W-1 reads pad

    # 9 shifted accumulating matmuls (bf16 MXU operands, f32 accumulation).
    acc = jnp.zeros((RT, Cop), jnp.float32)
    for dy in (-1, 0, 1):
        for dx in (-1, 0, 1):
            t = (dy + 1) * 3 + (dx + 1)
            v = a_ref[pl.ds(_PAD + (dy + 1) * W + dx, RT), :]
            if dx == -1:
                v = v * left_ok
            elif dx == 1:
                v = v * right_ok
            acc = acc + jnp.dot(v.astype(jnp.bfloat16), w_ref[t],
                                preferred_element_type=jnp.float32)

    y_ref[0] = acc.astype(y_ref.dtype)                # pre-BN activation (bf16 in HBM)

    # Partial BatchNorm statistics from the f32 accumulator, accumulated across row
    # tiles in the revisited (1, 1, Cop) output block; finalized outside the kernel so
    # normalization stays global over (N, H, W) despite the tiling.
    @pl.when(h == 0)
    def _init():
        s1_ref[...] = jnp.zeros_like(s1_ref)
        s2_ref[...] = jnp.zeros_like(s2_ref)

    s1_ref[0] = s1_ref[0] + jnp.sum(acc, axis=0, keepdims=True)
    s2_ref[0] = s2_ref[0] + jnp.sum(acc * acc, axis=0, keepdims=True)


def _conv_pass(x2d, sc, sh, w, *, H, W, TH, apply_input_act):
    N, HW, Cip = x2d.shape
    Cop = w.shape[-1]
    nH = H // TH
    RT = TH * W

    kernel = functools.partial(_conv3x3_kernel, TH=TH, W=W, Cip=Cip, Cop=Cop,
                               apply_input_act=apply_input_act)

    flops = 2 * N * HW * 9 * Cip * Cop
    bytes_acc = int(N * HW * Cip * x2d.dtype.itemsize      # input
                    + N * HW * Cop * 2                      # bf16 output
                    + 2 * N * Cop * 4                       # stats
                    + 9 * Cip * Cop * 2 + 2 * Cip * 4)      # weights + scale/shift

    grid_spec = pltpu.PrefetchScalarGridSpec(
        num_scalar_prefetch=0,
        grid=(N, nH),
        in_specs=[
            # row-tile of the image (flattened rows, channel-minor, lane-dense)
            pl.BlockSpec((1, RT, Cip), lambda n, h: (n, h, 0)),
            # 1-row halos above / below (clamped at the image boundary, zeroed in-kernel)
            pl.BlockSpec((1, W, Cip), lambda n, h: (n, jnp.maximum(h * TH - 1, 0), 0)),
            pl.BlockSpec((1, W, Cip), lambda n, h: (n, jnp.minimum(h * TH + TH, H - 1), 0)),
            # fused BN scale/shift of the *input* activation (resident)
            pl.BlockSpec((1, Cip), lambda n, h: (0, 0)),
            pl.BlockSpec((1, Cip), lambda n, h: (0, 0)),
            # 9 tap weight matrices (resident)
            pl.BlockSpec((9, Cip, Cop), lambda n, h: (0, 0, 0)),
        ],
        out_specs=[
            pl.BlockSpec((1, RT, Cop), lambda n, h: (n, h, 0)),
            pl.BlockSpec((1, 1, Cop), lambda n, h: (n, 0, 0)),   # revisited across h
            pl.BlockSpec((1, 1, Cop), lambda n, h: (n, 0, 0)),
        ],
        scratch_shapes=[pltpu.VMEM((2 * _PAD + (TH + 2) * W, Cip), jnp.float32)],
    )

    return pl.pallas_call(
        kernel,
        grid_spec=grid_spec,
        out_shape=(jax.ShapeDtypeStruct((N, HW, Cop), jnp.bfloat16),
                   jax.ShapeDtypeStruct((N, 1, Cop), jnp.float32),
                   jax.ShapeDtypeStruct((N, 1, Cop), jnp.float32)),
        compiler_params=pltpu.CompilerParams(
            dimension_semantics=("parallel", "arbitrary"),
            vmem_limit_bytes=_vmem_limit_bytes()),
        cost_estimate=pl.CostEstimate(flops=flops, transcendentals=0,
                                      bytes_accessed=bytes_acc),
    )(x2d, x2d, x2d, sc, sh, w)


# --------------------------------------------------------------------------------------
# final BN + ReLU kernel (scale/shift already folded from the global statistics)
# --------------------------------------------------------------------------------------
def _bn_relu_kernel(y_ref, sc_ref, sh_ref, o_ref):
    o_ref[0] = jnp.maximum(
        y_ref[0].astype(jnp.float32) * sc_ref[...] + sh_ref[...], 0.0)


def _bn_relu_pass(y2d, sc, sh, *, H, W, TH):
    N, HW, Cop = y2d.shape
    nH = H // TH
    RT = TH * W
    return pl.pallas_call(
        _bn_relu_kernel,
        grid_spec=pltpu.PrefetchScalarGridSpec(
            num_scalar_prefetch=0,
            grid=(N, nH),
            in_specs=[pl.BlockSpec((1, RT, Cop), lambda n, h: (n, h, 0)),
                      pl.BlockSpec((1, Cop), lambda n, h: (0, 0)),
                      pl.BlockSpec((1, Cop), lambda n, h: (0, 0))],
            out_specs=pl.BlockSpec((1, RT, Cop), lambda n, h: (n, h, 0))),
        out_shape=jax.ShapeDtypeStruct((N, HW, Cop), jnp.float32),
        compiler_params=pltpu.CompilerParams(
            dimension_semantics=("parallel", "parallel"),
            vmem_limit_bytes=_vmem_limit_bytes()),
        cost_estimate=pl.CostEstimate(
            flops=3 * N * HW * Cop, transcendentals=0,
            bytes_accessed=int(N * HW * Cop * 6 + 2 * Cop * 4)),
    )(y2d, sc, sh)


def _finalize_bn(s1, s2, gamma_p, beta_p, count):
    """Combine per-image partial sums into global BN scale/shift (training mode)."""
    total = jnp.sum(s1, axis=(0, 1))                      # (Cop,)
    total_sq = jnp.sum(s2, axis=(0, 1))
    mean = total / count
    var = jnp.maximum(total_sq / count - mean * mean, 0.0)   # biased variance
    scale = gamma_p.reshape(-1) * lax.rsqrt(var + EPS)
    shift = beta_p.reshape(-1) - mean * scale
    return scale.reshape(1, -1), shift.reshape(1, -1)


def double_conv(x_nchw, params, *, row_tile=None):
    """x_nchw: (N, Cin, H, W) f32 -> (N, Cout, H, W) f32 (training-mode BatchNorm)."""
    w1, b1, g1, be1, w2, b2, g2, be2 = params
    # b1 / b2 intentionally unused: a per-channel bias ahead of training-mode BatchNorm
    # cancels exactly (it shifts the mean, not the variance), so dropping it leaves the
    # module output unchanged while removing a full (H*W, C) VPU add per grid step.
    N, C_in, H, W = x_nchw.shape
    C_out = w1.shape[-1]
    if W % 8 != 0:
        raise ValueError("W must be a multiple of 8 (sublane tiling)")
    TH = _pick_row_tile(H, W) if row_tile is None else int(row_tile)
    if H % TH != 0:
        raise ValueError("row_tile must divide H")
    Cip = _round_up(C_in, LANE)
    Cop = _round_up(C_out, LANE)
    count = float(N * H * W)

    # NCHW -> channel-minor (N, H*W, Cip), channels zero-padded to the lane width.
    x = jnp.transpose(x_nchw, (0, 2, 3, 1))
    if Cip > C_in:
        x = jnp.pad(x, ((0, 0), (0, 0), (0, 0), (0, Cip - C_in)))
    x2d = x.reshape(N, H * W, Cip)

    def pad_w(w, ci, cip, cop):                            # (9, ci, co) -> (9, cip, cop)
        return jnp.zeros((9, cip, cop), jnp.float32) \
                  .at[:, :ci, :w.shape[-1]].set(w).astype(jnp.bfloat16)

    def pad_c(v, c):                                       # (1, co) -> (1, c)
        return jnp.zeros((1, c), jnp.float32).at[:, :v.shape[-1]].set(v.reshape(1, -1))

    w1p = pad_w(w1, C_in, Cip, Cop)
    w2p = pad_w(w2, C_out, Cop, Cop)

    ident = jnp.ones((1, Cip), jnp.float32)
    zero = jnp.zeros((1, Cip), jnp.float32)

    # conv1 -> pre-BN bf16 activation + BN1 partial statistics
    y1, s1a, s1b = _conv_pass(x2d, ident, zero, w1p, H=H, W=W, TH=TH,
                              apply_input_act=False)
    sc1, sh1 = _finalize_bn(s1a, s1b, pad_c(g1, Cop), pad_c(be1, Cop), count)

    # BN1 + ReLU fused into conv2's input; conv2 -> pre-BN bf16 activation + BN2 partials
    y2, s2a, s2b = _conv_pass(y1, sc1, sh1, w2p, H=H, W=W, TH=TH,
                              apply_input_act=True)
    sc2, sh2 = _finalize_bn(s2a, s2b, pad_c(g2, Cop), pad_c(be2, Cop), count)

    # final BN2 + ReLU (lane-dense f32 output), then slice padded channels + NCHW.
    out2d = _bn_relu_pass(y2, sc2, sh2, H=H, W=W, TH=TH)
    out = out2d.reshape(N, H, W, Cop)[..., :C_out]
    return jnp.transpose(out, (0, 3, 1, 2))


# ----------------------------- pure-JAX reference --------------------------------------
def reference(x_nchw, params, *, matmul_dtype=jnp.bfloat16):
    w1, b1, g1, be1, w2, b2, g2, be2 = params

    def conv(x, w, b):
        w4 = w.reshape(3, 3, w.shape[1], w.shape[2])            # HWIO
        y = lax.conv_general_dilated(
            x.astype(matmul_dtype), w4.astype(matmul_dtype),
            window_strides=(1, 1), padding='SAME',
            dimension_numbers=('NHWC', 'HWIO', 'NHWC'),
            preferred_element_type=jnp.float32)
        return y + b.reshape(1, 1, 1, -1)

    def bn_relu(y, g, be):
        mu = jnp.mean(y, axis=(0, 1, 2), keepdims=True)
        var = jnp.mean((y - mu) ** 2, axis=(0, 1, 2), keepdims=True)
        yn = (y - mu) * g.reshape(1, 1, 1, -1) / jnp.sqrt(var + EPS) \
            + be.reshape(1, 1, 1, -1)
        return jnp.maximum(yn, 0.0)

    x = jnp.transpose(x_nchw, (0, 2, 3, 1))
    y = bn_relu(conv(x, w1, b1), g1, be1)
    z = bn_relu(conv(y, w2, b2), g2, be2)
    return jnp.transpose(z, (0, 3, 1, 2))


if __name__ == "__main__":
    N, Cin, Co, H, W = 2, 4, 8, 16, 16

    key = jax.random.PRNGKey(0)
    ks = jax.random.split(key, 10)

    x = jax.random.normal(ks[0], (N, Cin, H, W), jnp.float32)

    # Synthetic parameters (shapes per nn.Conv2d / nn.BatchNorm2d).
    w1 = 0.1 * jax.random.normal(ks[1], (9, Cin, Co), jnp.float32)   # 3x3 taps flattened
    b1 = 0.1 * jax.random.normal(ks[2], (1, Co), jnp.float32)
    g1 = 1.0 + 0.1 * jax.random.normal(ks[3], (1, Co), jnp.float32)  # BN gamma
    be1 = 0.1 * jax.random.normal(ks[4], (1, Co), jnp.float32)       # BN beta
    w2 = 0.1 * jax.random.normal(ks[5], (9, Co, Co), jnp.float32)
    b2 = 0.1 * jax.random.normal(ks[6], (1, Co), jnp.float32)
    g2 = 1.0 + 0.1 * jax.random.normal(ks[7], (1, Co), jnp.float32)
    be2 = 0.1 * jax.random.normal(ks[8], (1, Co), jnp.float32)
    params = (w1, b1, g1, be1, w2, b2, g2, be2)

    # Row-tiled path (4 row tiles per image -> exercises the halo handling).
    out_tiled = jax.jit(functools.partial(double_conv, row_tile=4))(x, params)
    jax.block_until_ready(out_tiled)
    assert out_tiled.shape == (N, Co, H, W), out_tiled.shape

    # Default tiling (whole image per step at this size).
    out_whole = jax.jit(double_conv)(x, params)
    jax.block_until_ready(out_whole)
    np.testing.assert_allclose(np.asarray(out_tiled), np.asarray(out_whole),
                               atol=1e-4, rtol=1e-4)

    # Matched-precision reference (bf16 matmul operands / bf16 inter-conv activation).
    ref_bf16 = reference(x, params, matmul_dtype=jnp.bfloat16)
    np.testing.assert_allclose(np.asarray(out_tiled), np.asarray(ref_bf16),
                               atol=2e-2, rtol=2e-2)
    # Sanity check against the full-f32 reference (bf16 MXU operands and bf16 pre-BN
    # intermediates are deliberate performance tradeoffs, hence the looser tolerance).
    ref_f32 = reference(x, params, matmul_dtype=jnp.float32)
    np.testing.assert_allclose(np.asarray(out_tiled), np.asarray(ref_f32),
                               atol=5e-2, rtol=5e-2)
    print("KERNEL_OK")
</pallas_src>

<mosaic_0001>
module attributes {stable_mosaic.version = 11 : i64} {
  func.func @_conv3x3_kernel(%arg0: i32, %arg1: i32, %arg2: memref<1x64x128xf32, #tpu.memory_space<vmem>>, %arg3: memref<1x16x128xf32, #tpu.memory_space<vmem>>, %arg4: memref<1x16x128xf32, #tpu.memory_space<vmem>>, %arg5: memref<1x128xf32, #tpu.memory_space<vmem>>, %arg6: memref<1x128xf32, #tpu.memory_space<vmem>>, %arg7: memref<9x128x128xbf16, #tpu.memory_space<vmem>>, %arg8: memref<1x64x128xbf16, #tpu.memory_space<vmem>>, %arg9: memref<1x1x128xf32, #tpu.memory_space<vmem>>, %arg10: memref<1x1x128xf32, #tpu.memory_space<vmem>>, %arg11: memref<112x128xf32, #tpu.memory_space<vmem>>) attributes {dimension_semantics = [#tpu.dimension_semantics<parallel>, #tpu.dimension_semantics<arbitrary>], iteration_bounds = array<i64: 2, 4>, scalar_prefetch = 0 : i64, scratch_operands = 1 : i64, tpu.core_type = #tpu.core_type<tc>, window_params = [{transform_indices = @transform_0, window_bounds = array<i64: 1, 64, 128>}, {transform_indices = @transform_1, window_bounds = array<i64: 1, 16, 128>}, {transform_indices = @transform_2, window_bounds = array<i64: 1, 16, 128>}, {pipeline_mode = #tpu.pipeline_mode<synchronous>, transform_indices = @transform_3, window_bounds = array<i64: 1, 128>}, {pipeline_mode = #tpu.pipeline_mode<synchronous>, transform_indices = @transform_4, window_bounds = array<i64: 1, 128>}, {pipeline_mode = #tpu.pipeline_mode<synchronous>, transform_indices = @transform_5, window_bounds = array<i64: 9, 128, 128>}, {transform_indices = @transform_6, window_bounds = array<i64: 1, 64, 128>}, {transform_indices = @transform_7, window_bounds = array<i64: 1, 1, 128>}, {transform_indices = @transform_8, window_bounds = array<i64: 1, 1, 128>}]} {
    %cst = arith.constant 0.000000e+00 : f32
    %0 = vector.broadcast %cst : f32 to vector<8x128xf32>
    %c0 = arith.constant 0 : index
    %c0_0 = arith.constant 0 : index
    %1 = vector.load %arg11[%c0, %c0_0] : memref<112x128xf32, #tpu.memory_space<vmem>>, vector<8x128xf32>
    tpu.vector_store %arg11[%c0, %c0_0], %0 {strides = array<i32>} : memref<112x128xf32, #tpu.memory_space<vmem>>, vector<8x128xf32>,
    %cst_1 = arith.constant 0.000000e+00 : f32
    %2 = vector.broadcast %cst_1 : f32 to vector<8x128xf32>
    %c104 = arith.constant 104 : index
    %c0_2 = arith.constant 0 : index
    %3 = vector.load %arg11[%c104, %c0_2] : memref<112x128xf32, #tpu.memory_space<vmem>>, vector<8x128xf32>
    tpu.vector_store %arg11[%c104, %c0_2], %2 {strides = array<i32>} : memref<112x128xf32, #tpu.memory_space<vmem>>, vector<8x128xf32>,
    %c0_i32 = arith.constant 0 : i32
    %4 = arith.cmpi eq, %arg1, %c0_i32 : i32
    %cst_3 = arith.constant 0.000000e+00 : f32
    %cst_4 = arith.constant 1.000000e+00 : f32
    %5 = arith.select %4, %cst_3, %cst_4 : f32
    %c3_i32 = arith.constant 3 : i32
    %6 = arith.cmpi eq, %arg1, %c3_i32 : i32
    %cst_5 = arith.constant 0.000000e+00 : f32
    %cst_6 = arith.constant 1.000000e+00 : f32
    %7 = arith.select %6, %cst_5, %cst_6 : f32
    %c0_7 = arith.constant 0 : index
    %c0_8 = arith.constant 0 : index
    %c0_9 = arith.constant 0 : index
    %8 = vector.load %arg2[%c0_7, %c0_8, %c0_9] : memref<1x64x128xf32, #tpu.memory_space<vmem>>, vector<1x64x128xf32>
    %9 = vector.shape_cast %8 : vector<1x64x128xf32> to vector<64x128xf32>
    %c24 = arith.constant 24 : index
    %c0_10 = arith.constant 0 : index
    %10 = vector.load %arg11[%c24, %c0_10] : memref<112x128xf32, #tpu.memory_space<vmem>>, vector<64x128xf32>
    tpu.vector_store %arg11[%c24, %c0_10], %9 {strides = array<i32>} : memref<112x128xf32, #tpu.memory_space<vmem>>, vector<64x128xf32>,
    %c0_11 = arith.constant 0 : index
    %c0_12 = arith.constant 0 : index
    %c0_13 = arith.constant 0 : index
    %11 = vector.load %arg3[%c0_11, %c0_12, %c0_13] : memref<1x16x128xf32, #tpu.memory_space<vmem>>, vector<1x16x128xf32>
    %12 = vector.shape_cast %11 : vector<1x16x128xf32> to vector<16x128xf32>
    %13 = vector.broadcast %5 : f32 to vector<16x128xf32>
    %14 = arith.mulf %12, %13 : vector<16x128xf32>
    %c8 = arith.constant 8 : index
    %c0_14 = arith.constant 0 : index
    %15 = vector.load %arg11[%c8, %c0_14] : memref<112x128xf32, #tpu.memory_space<vmem>>, vector<16x128xf32>
    tpu.vector_store %arg11[%c8, %c0_14], %14 {strides = array<i32>} : memref<112x128xf32, #tpu.memory_space<vmem>>, vector<16x128xf32>,
    %c0_15 = arith.constant 0 : index
    %c0_16 = arith.constant 0 : index
    %c0_17 = arith.constant 0 : index
    %16 = vector.load %arg4[%c0_15, %c0_16, %c0_17] : memref<1x16x128xf32, #tpu.memory_space<vmem>>, vector<1x16x128xf32>
    %17 = vector.shape_cast %16 : vector<1x16x128xf32> to vector<16x128xf32>
    %18 = vector.broadcast %7 : f32 to vector<16x128xf32>
    %19 = arith.mulf %17, %18 : vector<16x128xf32>
    %c88 = arith.constant 88 : index
    %c0_18 = arith.constant 0 : index
    %20 = vector.load %arg11[%c88, %c0_18] : memref<112x128xf32, #tpu.memory_space<vmem>>, vector<16x128xf32>
    tpu.vector_store %arg11[%c88, %c0_18], %19 {strides = array<i32>} : memref<112x128xf32, #tpu.memory_space<vmem>>, vector<16x128xf32>,
    %21 = tpu.iota {dimensions = array<i32: 0>} : vector<64x128xi32>
    %c16_i32 = arith.constant 16 : i32
    %c0_i32_19 = arith.constant 0 : i32
    %22 = arith.cmpi eq, %c16_i32, %c0_i32_19 : i32
    %c1_i32 = arith.constant 1 : i32
    %23 = arith.select %22, %c1_i32, %c16_i32 : i32
    %24 = vector.broadcast %23 : i32 to vector<64x128xi32>
    %25 = arith.remsi %21, %24 : vector<64x128xi32>
    %c0_i32_20 = arith.constant 0 : i32
    %26 = vector.broadcast %c0_i32_20 : i32 to vector<64x128xi32>
    %27 = arith.cmpi ne, %25, %26 : vector<64x128xi32>
    %c0_i32_21 = arith.constant 0 : i32
    %28 = vector.broadcast %c0_i32_21 : i32 to vector<64x128xi32>
    %29 = arith.cmpi slt, %25, %28 : vector<64x128xi32>
    %c0_i32_22 = arith.constant 0 : i32
    %30 = arith.cmpi slt, %23, %c0_i32_22 : i32
    %31 = vector.broadcast %30 : i1 to vector<64x128xi1>
    %32 = vector.broadcast %31 : vector<64x128xi1> to vector<64x128xi1>
    %33 = arith.xori %29, %32 : vector<64x128xi1>
    %34 = arith.andi %33, %27 : vector<64x128xi1>
    %35 = vector.broadcast %23 : i32 to vector<64x128xi32>
    %36 = arith.addi %25, %35 : vector<64x128xi32>
    %37 = arith.select %34, %36, %25 : vector<64x128xi1>, vector<64x128xi32>
    %c0_i32_23 = arith.constant 0 : i32
    %38 = vector.broadcast %c0_i32_23 : i32 to vector<64x128xi32>
    %39 = arith.cmpi ne, %37, %38 : vector<64x128xi32>
    %40 = arith.extui %39 : vector<64x128xi1> to vector<64x128xi32>
    %41 = arith.sitofp %40 : vector<64x128xi32> to vector<64x128xf32>
    %c15_i32 = arith.constant 15 : i32
    %42 = vector.broadcast %c15_i32 : i32 to vector<64x128xi32>
    %43 = arith.cmpi ne, %37, %42 : vector<64x128xi32>
    %44 = arith.extui %43 : vector<64x128xi1> to vector<64x128xi32>
    %45 = arith.sitofp %44 : vector<64x128xi32> to vector<64x128xf32>
    %cst_24 = arith.constant 0.000000e+00 : f32
    %46 = vector.broadcast %cst_24 : f32 to vector<64x128xf32>
    %c7 = arith.constant 7 : index
    %c0_25 = arith.constant 0 : index
    %47 = vector.load %arg11[%c7, %c0_25] : memref<112x128xf32, #tpu.memory_space<vmem>>, vector<64x128xf32>
    %48 = arith.mulf %47, %41 : vector<64x128xf32>
    %49 = arith.truncf %48 : vector<64x128xf32> to vector<64x128xbf16>
    %c0_26 = arith.constant 0 : index
    %c0_27 = arith.constant 0 : index
    %c0_28 = arith.constant 0 : index
    %50 = vector.load %arg7[%c0_26, %c0_27, %c0_28] : memref<9x128x128xbf16, #tpu.memory_space<vmem>>, vector<1x128x128xbf16>
    %51 = vector.shape_cast %50 : vector<1x128x128xbf16> to vector<128x128xbf16>
    %cst_29 = arith.constant dense<0.000000e+00> : vector<64x128xf32>
    %52 = tpu.matmul %49, %51, %cst_29 {dimension_numbers = #tpu.dot_dimension_numbers<[1], [0], [0], [1], [0, 0, 1, 1], [], []>} : vector<64x128xbf16>, vector<128x128xbf16>, vector<64x128xf32> -> vector<64x128xf32>
    %53 = arith.addf %46, %52 : vector<64x128xf32>
    %c8_30 = arith.constant 8 : index
    %c0_31 = arith.constant 0 : index
    %54 = vector.load %arg11[%c8_30, %c0_31] : memref<112x128xf32, #tpu.memory_space<vmem>>, vector<64x128xf32>
    %55 = arith.truncf %54 : vector<64x128xf32> to vector<64x128xbf16>
    %c1 = arith.constant 1 : index
    %c0_32 = arith.constant 0 : index
    %c0_33 = arith.constant 0 : index
    %56 = vector.load %arg7[%c1, %c0_32, %c0_33] : memref<9x128x128xbf16, #tpu.memory_space<vmem>>, vector<1x128x128xbf16>
    %57 = vector.shape_cast %56 : vector<1x128x128xbf16> to vector<128x128xbf16>
    %cst_34 = arith.constant dense<0.000000e+00> : vector<64x128xf32>
    %58 = tpu.matmul %55, %57, %cst_34 {dimension_numbers = #tpu.dot_dimension_numbers<[1], [0], [0], [1], [0, 0, 1, 1], [], []>} : vector<64x128xbf16>, vector<128x128xbf16>, vector<64x128xf32> -> vector<64x128xf32>
    %59 = arith.addf %53, %58 : vector<64x128xf32>
    %c9 = arith.constant 9 : index
    %c0_35 = arith.constant 0 : index
    %60 = vector.load %arg11[%c9, %c0_35] : memref<112x128xf32, #tpu.memory_space<vmem>>, vector<64x128xf32>
    %61 = arith.mulf %60, %45 : vector<64x128xf32>
    %62 = arith.truncf %61 : vector<64x128xf32> to vector<64x128xbf16>
    %c2 = arith.constant 2 : index
    %c0_36 = arith.constant 0 : index
    %c0_37 = arith.constant 0 : index
    %63 = vector.load %arg7[%c2, %c0_36, %c0_37] : memref<9x128x128xbf16, #tpu.memory_space<vmem>>, vector<1x128x128xbf16>
    %64 = vector.shape_cast %63 : vector<1x128x128xbf16> to vector<128x128xbf16>
    %cst_38 = arith.constant dense<0.000000e+00> : vector<64x128xf32>
    %65 = tpu.matmul %62, %64, %cst_38 {dimension_numbers = #tpu.dot_dimension_numbers<[1], [0], [0], [1], [0, 0, 1, 1], [], []>} : vector<64x128xbf16>, vector<128x128xbf16>, vector<64x128xf32> -> vector<64x128xf32>
    %66 = arith.addf %59, %65 : vector<64x128xf32>
    %c23 = arith.constant 23 : index
    %c0_39 = arith.constant 0 : index
    %67 = vector.load %arg11[%c23, %c0_39] : memref<112x128xf32, #tpu.memory_space<vmem>>, vector<64x128xf32>
    %68 = arith.mulf %67, %41 : vector<64x128xf32>
    %69 = arith.truncf %68 : vector<64x128xf32> to vector<64x128xbf16>
    %c3 = arith.constant 3 : index
    %c0_40 = arith.constant 0 : index
    %c0_41 = arith.constant 0 : index
    %70 = vector.load %arg7[%c3, %c0_40, %c0_41] : memref<9x128x128xbf16, #tpu.memory_space<vmem>>, vector<1x128x128xbf16>
    %71 = vector.shape_cast %70 : vector<1x128x128xbf16> to vector<128x128xbf16>
    %cst_42 = arith.constant dense<0.000000e+00> : vector<64x128xf32>
    %72 = tpu.matmul %69, %71, %cst_42 {dimension_numbers = #tpu.dot_dimension_numbers<[1], [0], [0], [1], [0, 0, 1, 1], [], []>} : vector<64x128xbf16>, vector<128x128xbf16>, vector<64x128xf32> -> vector<64x128xf32>
    %73 = arith.addf %66, %72 : vector<64x128xf32>
    %c24_43 = arith.constant 24 : index
    %c0_44 = arith.constant 0 : index
    %74 = vector.load %arg11[%c24_43, %c0_44] : memref<112x128xf32, #tpu.memory_space<vmem>>, vector<64x128xf32>
    %75 = arith.truncf %74 : vector<64x128xf32> to vector<64x128xbf16>
    %c4 = arith.constant 4 : index
    %c0_45 = arith.constant 0 : index
    %c0_46 = arith.constant 0 : index
    %76 = vector.load %arg7[%c4, %c0_45, %c0_46] : memref<9x128x128xbf16, #tpu.memory_space<vmem>>, vector<1x128x128xbf16>
    %77 = vector.shape_cast %76 : vector<1x128x128xbf16> to vector<128x128xbf16>
    %cst_47 = arith.constant dense<0.000000e+00> : vector<64x128xf32>
    %78 = tpu.matmul %75, %77, %cst_47 {dimension_numbers = #tpu.dot_dimension_numbers<[1], [0], [0], [1], [0, 0, 1, 1], [], []>} : vector<64x128xbf16>, vector<128x128xbf16>, vector<64x128xf32> -> vector<64x128xf32>
    %79 = arith.addf %73, %78 : vector<64x128xf32>
    %c25 = arith.constant 25 : index
    %c0_48 = arith.constant 0 : index
    %80 = vector.load %arg11[%c25, %c0_48] : memref<112x128xf32, #tpu.memory_space<vmem>>, vector<64x128xf32>
    %81 = arith.mulf %80, %45 : vector<64x128xf32>
    %82 = arith.truncf %81 : vector<64x128xf32> to vector<64x128xbf16>
    %c5 = arith.constant 5 : index
    %c0_49 = arith.constant 0 : index
    %c0_50 = arith.constant 0 : index
    %83 = vector.load %arg7[%c5, %c0_49, %c0_50] : memref<9x128x128xbf16, #tpu.memory_space<vmem>>, vector<1x128x128xbf16>
    %84 = vector.shape_cast %83 : vector<1x128x128xbf16> to vector<128x128xbf16>
    %cst_51 = arith.constant dense<0.000000e+00> : vector<64x128xf32>
    %85 = tpu.matmul %82, %84, %cst_51 {dimension_numbers = #tpu.dot_dimension_numbers<[1], [0], [0], [1], [0, 0, 1, 1], [], []>} : vector<64x128xbf16>, vector<128x128xbf16>, vector<64x128xf32> -> vector<64x128xf32>
    %86 = arith.addf %79, %85 : vector<64x128xf32>
    %c39 = arith.constant 39 : index
    %c0_52 = arith.constant 0 : index
    %87 = vector.load %arg11[%c39, %c0_52] : memref<112x128xf32, #tpu.memory_space<vmem>>, vector<64x128xf32>
    %88 = arith.mulf %87, %41 : vector<64x128xf32>
    %89 = arith.truncf %88 : vector<64x128xf32> to vector<64x128xbf16>
    %c6 = arith.constant 6 : index
    %c0_53 = arith.constant 0 : index
    %c0_54 = arith.constant 0 : index
    %90 = vector.load %arg7[%c6, %c0_53, %c0_54] : memref<9x128x128xbf16, #tpu.memory_space<vmem>>, vector<1x128x128xbf16>
    %91 = vector.shape_cast %90 : vector<1x128x128xbf16> to vector<128x128xbf16>
    %cst_55 = arith.constant dense<0.000000e+00> : vector<64x128xf32>
    %92 = tpu.matmul %89, %91, %cst_55 {dimension_numbers = #tpu.dot_dimension_numbers<[1], [0], [0], [1], [0, 0, 1, 1], [], []>} : vector<64x128xbf16>, vector<128x128xbf16>, vector<64x128xf32> -> vector<64x128xf32>
    %93 = arith.addf %86, %92 : vector<64x128xf32>
    %c40 = arith.constant 40 : index
    %c0_56 = arith.constant 0 : index
    %94 = vector.load %arg11[%c40, %c0_56] : memref<112x128xf32, #tpu.memory_space<vmem>>, vector<64x128xf32>
    %95 = arith.truncf %94 : vector<64x128xf32> to vector<64x128xbf16>
    %c7_57 = arith.constant 7 : index
    %c0_58 = arith.constant 0 : index
    %c0_59 = arith.constant 0 : index
    %96 = vector.load %arg7[%c7_57, %c0_58, %c0_59] : memref<9x128x128xbf16, #tpu.memory_space<vmem>>, vector<1x128x128xbf16>
    %97 = vector.shape_cast %96 : vector<1x128x128xbf16> to vector<128x128xbf16>
    %cst_60 = arith.constant dense<0.000000e+00> : vector<64x128xf32>
    %98 = tpu.matmul %95, %97, %cst_60 {dimension_numbers = #tpu.dot_dimension_numbers<[1], [0], [0], [1], [0, 0, 1, 1], [], []>} : vector<64x128xbf16>, vector<128x128xbf16>, vector<64x128xf32> -> vector<64x128xf32>
    %99 = arith.addf %93, %98 : vector<64x128xf32>
    %c41 = arith.constant 41 : index
    %c0_61 = arith.constant 0 : index
    %100 = vector.load %arg11[%c41, %c0_61] : memref<112x128xf32, #tpu.memory_space<vmem>>, vector<64x128xf32>
    %101 = arith.mulf %100, %45 : vector<64x128xf32>
    %102 = arith.truncf %101 : vector<64x128xf32> to vector<64x128xbf16>
    %c8_62 = arith.constant 8 : index
    %c0_63 = arith.constant 0 : index
    %c0_64 = arith.constant 0 : index
    %103 = vector.load %arg7[%c8_62, %c0_63, %c0_64] : memref<9x128x128xbf16, #tpu.memory_space<vmem>>, vector<1x128x128xbf16>
    %104 = vector.shape_cast %103 : vector<1x128x128xbf16> to vector<128x128xbf16>
    %cst_65 = arith.constant dense<0.000000e+00> : vector<64x128xf32>
    %105 = tpu.matmul %102, %104, %cst_65 {dimension_numbers = #tpu.dot_dimension_numbers<[1], [0], [0], [1], [0, 0, 1, 1], [], []>} : vector<64x128xbf16>, vector<128x128xbf16>, vector<64x128xf32> -> vector<64x128xf32>
    %106 = arith.addf %99, %105 : vector<64x128xf32>
    %107 = arith.truncf %106 : vector<64x128xf32> to vector<64x128xbf16>
    %c0_66 = arith.constant 0 : index
    %c0_67 = arith.constant 0 : index
    %c0_68 = arith.constant 0 : index
    %108 = vector.load %arg8[%c0_66, %c0_67, %c0_68] : memref<1x64x128xbf16, #tpu.memory_space<vmem>>, vector<1x64x128xbf16>
    %109 = vector.shape_cast %108 : vector<1x64x128xbf16> to vector<64x128xbf16>
    %110 = vector.shape_cast %107 : vector<64x128xbf16> to vector<1x64x128xbf16>
    tpu.vector_store %arg8[%c0_66, %c0_67, %c0_68], %110 {strides = array<i32>} : memref<1x64x128xbf16, #tpu.memory_space<vmem>>, vector<1x64x128xbf16>,
    %c0_i32_69 = arith.constant 0 : i32
    %111 = arith.cmpi eq, %arg1, %c0_i32_69 : i32
    %112 = arith.extui %111 : i1 to i32
    %c0_i32_70 = arith.constant 0 : i32
    %113 = arith.cmpi ne, %112, %c0_i32_70 : i32
    scf.if %113 {
      %cst_85 = arith.constant 0.000000e+00 : f32
      %131 = vector.broadcast %cst_85 : f32 to vector<1x1x128xf32>
      %c0_86 = arith.constant 0 : index
      %c0_87 = arith.constant 0 : index
      %c0_88 = arith.constant 0 : index
      %132 = vector.load %arg9[%c0_86, %c0_87, %c0_88] : memref<1x1x128xf32, #tpu.memory_space<vmem>>, vector<1x1x128xf32>
      tpu.vector_store %arg9[%c0_86, %c0_87, %c0_88], %131 {strides = array<i32>} : memref<1x1x128xf32, #tpu.memory_space<vmem>>, vector<1x1x128xf32>,
      %cst_89 = arith.constant 0.000000e+00 : f32
      %133 = vector.broadcast %cst_89 : f32 to vector<1x1x128xf32>
      %c0_90 = arith.constant 0 : index
      %c0_91 = arith.constant 0 : index
      %c0_92 = arith.constant 0 : index
      %134 = vector.load %arg10[%c0_90, %c0_91, %c0_92] : memref<1x1x128xf32, #tpu.memory_space<vmem>>, vector<1x1x128xf32>
      tpu.vector_store %arg10[%c0_90, %c0_91, %c0_92], %133 {strides = array<i32>} : memref<1x1x128xf32, #tpu.memory_space<vmem>>, vector<1x1x128xf32>,
    } else {
    }
    %c0_71 = arith.constant 0 : index
    %c0_72 = arith.constant 0 : index
    %c0_73 = arith.constant 0 : index
    %114 = vector.load %arg9[%c0_71, %c0_72, %c0_73] : memref<1x1x128xf32, #tpu.memory_space<vmem>>, vector<1x1x128xf32>
    %115 = vector.shape_cast %114 : vector<1x1x128xf32> to vector<1x128xf32>
    %cst_74 = arith.constant dense<0.000000e+00> : vector<128xf32>
    %116 = vector.multi_reduction <add>, %106, %cst_74 [0] : vector<64x128xf32> to vector<128xf32>
    %117 = vector.shape_cast %116 : vector<128xf32> to vector<1x128xf32>
    %118 = arith.addf %115, %117 : vector<1x128xf32>
    %c0_75 = arith.constant 0 : index
    %c0_76 = arith.constant 0 : index
    %c0_77 = arith.constant 0 : index
    %119 = vector.load %arg9[%c0_75, %c0_76, %c0_77] : memref<1x1x128xf32, #tpu.memory_space<vmem>>, vector<1x1x128xf32>
    %120 = vector.shape_cast %119 : vector<1x1x128xf32> to vector<1x128xf32>
    %121 = vector.shape_cast %118 : vector<1x128xf32> to vector<1x1x128xf32>
    tpu.vector_store %arg9[%c0_75, %c0_76, %c0_77], %121 {strides = array<i32>} : memref<1x1x128xf32, #tpu.memory_space<vmem>>, vector<1x1x128xf32>,
    %c0_78 = arith.constant 0 : index
    %c0_79 = arith.constant 0 : index
    %c0_80 = arith.constant 0 : index
    %122 = vector.load %arg10[%c0_78, %c0_79, %c0_80] : memref<1x1x128xf32, #tpu.memory_space<vmem>>, vector<1x1x128xf32>
    %123 = vector.shape_cast %122 : vector<1x1x128xf32> to vector<1x128xf32>
    %124 = arith.mulf %106, %106 : vector<64x128xf32>
    %cst_81 = arith.constant dense<0.000000e+00> : vector<128xf32>
    %125 = vector.multi_reduction <add>, %124, %cst_81 [0] : vector<64x128xf32> to vector<128xf32>
    %126 = vector.shape_cast %125 : vector<128xf32> to vector<1x128xf32>
    %127 = arith.addf %123, %126 : vector<1x128xf32>
    %c0_82 = arith.constant 0 : index
    %c0_83 = arith.constant 0 : index
    %c0_84 = arith.constant 0 : index
    %128 = vector.load %arg10[%c0_82, %c0_83, %c0_84] : memref<1x1x128xf32, #tpu.memory_space<vmem>>, vector<1x1x128xf32>
    %129 = vector.shape_cast %128 : vector<1x1x128xf32> to vector<1x128xf32>
    %130 = vector.shape_cast %127 : vector<1x128xf32> to vector<1x1x128xf32>
    tpu.vector_store %arg10[%c0_82, %c0_83, %c0_84], %130 {strides = array<i32>} : memref<1x1x128xf32, #tpu.memory_space<vmem>>, vector<1x1x128xf32>,
    return
  }
  func.func @transform_0(%arg0: i32, %arg1: i32) -> (i32, i32, i32) {
    %c0_i32 = arith.constant 0 : i32
    %c0_i32_0 = arith.constant 0 : i32
    return %arg0, %arg1, %c0_i32 : i32, i32, i32
  }
  func.func @transform_1(%arg0: i32, %arg1: i32) -> (i32, i32, i32) {
    %c4_i32 = arith.constant 4 : i32
    %0 = arith.muli %arg1, %c4_i32 : i32
    %c1_i32 = arith.constant 1 : i32
    %1 = arith.subi %0, %c1_i32 : i32
    %c0_i32 = arith.constant 0 : i32
    %2 = arith.maxsi %1, %c0_i32 : i32
    %c0_i32_0 = arith.constant 0 : i32
    %c0_i32_1 = arith.constant 0 : i32
    return %arg0, %2, %c0_i32_0 : i32, i32, i32
  }
  func.func @transform_2(%arg0: i32, %arg1: i32) -> (i32, i32, i32) {
    %c4_i32 = arith.constant 4 : i32
    %0 = arith.muli %arg1, %c4_i32 : i32
    %c4_i32_0 = arith.constant 4 : i32
    %1 = arith.addi %0, %c4_i32_0 : i32
    %c15_i32 = arith.constant 15 : i32
    %2 = arith.minsi %1, %c15_i32 : i32
    %c0_i32 = arith.constant 0 : i32
    %c0_i32_1 = arith.constant 0 : i32
    return %arg0, %2, %c0_i32 : i32, i32, i32
  }
  func.func @transform_3(%arg0: i32, %arg1: i32) -> (i32, i32) {
    %c0_i32 = arith.constant 0 : i32
    %c0_i32_0 = arith.constant 0 : i32
    %c0_i32_1 = arith.constant 0 : i32
    return %c0_i32, %c0_i32_0 : i32, i32
  }
  func.func @transform_4(%arg0: i32, %arg1: i32) -> (i32, i32) {
    %c0_i32 = arith.constant 0 : i32
    %c0_i32_0 = arith.constant 0 : i32
    %c0_i32_1 = arith.constant 0 : i32
    return %c0_i32, %c0_i32_0 : i32, i32
  }
  func.func @transform_5(%arg0: i32, %arg1: i32) -> (i32, i32, i32) {
    %c0_i32 = arith.constant 0 : i32
    %c0_i32_0 = arith.constant 0 : i32
    %c0_i32_1 = arith.constant 0 : i32
    %c0_i32_2 = arith.constant 0 : i32
    return %c0_i32, %c0_i32_0, %c0_i32_1 : i32, i32, i32
  }
  func.func @transform_6(%arg0: i32, %arg1: i32) -> (i32, i32, i32) {
    %c0_i32 = arith.constant 0 : i32
    %c0_i32_0 = arith.constant 0 : i32
    return %arg0, %arg1, %c0_i32 : i32, i32, i32
  }
  func.func @transform_7(%arg0: i32, %arg1: i32) -> (i32, i32, i32) {
    %c0_i32 = arith.constant 0 : i32
    %c0_i32_0 = arith.constant 0 : i32
    %c0_i32_1 = arith.constant 0 : i32
    return %arg0, %c0_i32, %c0_i32_0 : i32, i32, i32
  }
  func.func @transform_8(%arg0: i32, %arg1: i32) -> (i32, i32, i32) {
    %c0_i32 = arith.constant 0 : i32
    %c0_i32_0 = arith.constant 0 : i32
    %c0_i32_1 = arith.constant 0 : i32
    return %arg0, %c0_i32, %c0_i32_0 : i32, i32, i32
  }
}

module attributes {stable_mosaic.version = 11 : i64} {
  func.func @_bn_relu_kernel(%arg0: i32, %arg1: i32, %arg2: memref<1x64x128xbf16, #tpu.memory_space<vmem>>, %arg3: memref<1x128xf32, #tpu.memory_space<vmem>>, %arg4: memref<1x128xf32, #tpu.memory_space<vmem>>, %arg5: memref<1x64x128xf32, #tpu.memory_space<vmem>>) attributes {dimension_semantics = [#tpu.dimension_semantics<parallel>, #tpu.dimension_semantics<parallel>], iteration_bounds = array<i64: 2, 4>, scalar_prefetch = 0 : i64, scratch_operands = 0 : i64, tpu.core_type = #tpu.core_type<tc>, window_params = [{transform_indices = @transform_0, window_bounds = array<i64: 1, 64, 128>}, {pipeline_mode = #tpu.pipeline_mode<synchronous>, transform_indices = @transform_1, window_bounds = array<i64: 1, 128>}, {pipeline_mode = #tpu.pipeline_mode<synchronous>, transform_indices = @transform_2, window_bounds = array<i64: 1, 128>}, {transform_indices = @transform_3, window_bounds = array<i64: 1, 64, 128>}]} {
    %c0 = arith.constant 0 : index
    %c0_0 = arith.constant 0 : index
    %c0_1 = arith.constant 0 : index
    %0 = vector.load %arg2[%c0, %c0_0, %c0_1] : memref<1x64x128xbf16, #tpu.memory_space<vmem>>, vector<1x64x128xbf16>
    %1 = vector.shape_cast %0 : vector<1x64x128xbf16> to vector<64x128xbf16>
    %2 = arith.extf %1 : vector<64x128xbf16> to vector<64x128xf32>
    %c0_2 = arith.constant 0 : index
    %c0_3 = arith.constant 0 : index
    %3 = vector.load %arg3[%c0_2, %c0_3] : memref<1x128xf32, #tpu.memory_space<vmem>>, vector<1x128xf32>
    %4 = vector.broadcast %3 : vector<1x128xf32> to vector<64x128xf32>
    %5 = arith.mulf %2, %4 : vector<64x128xf32>
    %c0_4 = arith.constant 0 : index
    %c0_5 = arith.constant 0 : index
    %6 = vector.load %arg4[%c0_4, %c0_5] : memref<1x128xf32, #tpu.memory_space<vmem>>, vector<1x128xf32>
    %7 = vector.broadcast %6 : vector<1x128xf32> to vector<64x128xf32>
    %8 = arith.addf %5, %7 : vector<64x128xf32>
    %cst = arith.constant 0.000000e+00 : f32
    %9 = vector.broadcast %cst : f32 to vector<64x128xf32>
    %10 = arith.maximumf %8, %9 : vector<64x128xf32>
    %c0_6 = arith.constant 0 : index
    %c0_7 = arith.constant 0 : index
    %c0_8 = arith.constant 0 : index
    %11 = vector.load %arg5[%c0_6, %c0_7, %c0_8] : memref<1x64x128xf32, #tpu.memory_space<vmem>>, vector<1x64x128xf32>
    %12 = vector.shape_cast %11 : vector<1x64x128xf32> to vector<64x128xf32>
    %13 = vector.shape_cast %10 : vector<64x128xf32> to vector<1x64x128xf32>
    tpu.vector_store %arg5[%c0_6, %c0_7, %c0_8], %13 {strides = array<i32>} : memref<1x64x128xf32, #tpu.memory_space<vmem>>, vector<1x64x128xf32>,
    return
  }
  func.func @transform_0(%arg0: i32, %arg1: i32) -> (i32, i32, i32) {
    %c0_i32 = arith.constant 0 : i32
    %c0_i32_0 = arith.constant 0 : i32
    return %arg0, %arg1, %c0_i32 : i32, i32, i32
  }
  func.func @transform_1(%arg0: i32, %arg1: i32) -> (i32, i32) {
    %c0_i32 = arith.constant 0 : i32
    %c0_i32_0 = arith.constant 0 : i32
    %c0_i32_1 = arith.constant 0 : i32
    return %c0_i32, %c0_i32_0 : i32, i32
  }
  func.func @transform_2(%arg0: i32, %arg1: i32) -> (i32, i32) {
    %c0_i32 = arith.constant 0 : i32
    %c0_i32_0 = arith.constant 0 : i32
    %c0_i32_1 = arith.constant 0 : i32
    return %c0_i32, %c0_i32_0 : i32, i32
  }
  func.func @transform_3(%arg0: i32, %arg1: i32) -> (i32, i32, i32) {
    %c0_i32 = arith.constant 0 : i32
    %c0_i32_0 = arith.constant 0 : i32
    return %arg0, %arg1, %c0_i32 : i32, i32, i32
  }
}

module attributes {stable_mosaic.version = 11 : i64} {
  func.func @_conv3x3_kernel(%arg0: i32, %arg1: i32, %arg2: memref<1x64x128xbf16, #tpu.memory_space<vmem>>, %arg3: memref<1x16x128xbf16, #tpu.memory_space<vmem>>, %arg4: memref<1x16x128xbf16, #tpu.memory_space<vmem>>, %arg5: memref<1x128xf32, #tpu.memory_space<vmem>>, %arg6: memref<1x128xf32, #tpu.memory_space<vmem>>, %arg7: memref<9x128x128xbf16, #tpu.memory_space<vmem>>, %arg8: memref<1x64x128xbf16, #tpu.memory_space<vmem>>, %arg9: memref<1x1x128xf32, #tpu.memory_space<vmem>>, %arg10: memref<1x1x128xf32, #tpu.memory_space<vmem>>, %arg11: memref<112x128xf32, #tpu.memory_space<vmem>>) attributes {dimension_semantics = [#tpu.dimension_semantics<parallel>, #tpu.dimension_semantics<arbitrary>], iteration_bounds = array<i64: 2, 4>, scalar_prefetch = 0 : i64, scratch_operands = 1 : i64, tpu.core_type = #tpu.core_type<tc>, window_params = [{transform_indices = @transform_0, window_bounds = array<i64: 1, 64, 128>}, {transform_indices = @transform_1, window_bounds = array<i64: 1, 16, 128>}, {transform_indices = @transform_2, window_bounds = array<i64: 1, 16, 128>}, {pipeline_mode = #tpu.pipeline_mode<synchronous>, transform_indices = @transform_3, window_bounds = array<i64: 1, 128>}, {pipeline_mode = #tpu.pipeline_mode<synchronous>, transform_indices = @transform_4, window_bounds = array<i64: 1, 128>}, {pipeline_mode = #tpu.pipeline_mode<synchronous>, transform_indices = @transform_5, window_bounds = array<i64: 9, 128, 128>}, {transform_indices = @transform_6, window_bounds = array<i64: 1, 64, 128>}, {transform_indices = @transform_7, window_bounds = array<i64: 1, 1, 128>}, {transform_indices = @transform_8, window_bounds = array<i64: 1, 1, 128>}]} {
    %cst = arith.constant 0.000000e+00 : f32
    %0 = vector.broadcast %cst : f32 to vector<8x128xf32>
    %c0 = arith.constant 0 : index
    %c0_0 = arith.constant 0 : index
    %1 = vector.load %arg11[%c0, %c0_0] : memref<112x128xf32, #tpu.memory_space<vmem>>, vector<8x128xf32>
    tpu.vector_store %arg11[%c0, %c0_0], %0 {strides = array<i32>} : memref<112x128xf32, #tpu.memory_space<vmem>>, vector<8x128xf32>,
    %cst_1 = arith.constant 0.000000e+00 : f32
    %2 = vector.broadcast %cst_1 : f32 to vector<8x128xf32>
    %c104 = arith.constant 104 : index
    %c0_2 = arith.constant 0 : index
    %3 = vector.load %arg11[%c104, %c0_2] : memref<112x128xf32, #tpu.memory_space<vmem>>, vector<8x128xf32>
    tpu.vector_store %arg11[%c104, %c0_2], %2 {strides = array<i32>} : memref<112x128xf32, #tpu.memory_space<vmem>>, vector<8x128xf32>,
    %c0_i32 = arith.constant 0 : i32
    %4 = arith.cmpi eq, %arg1, %c0_i32 : i32
    %cst_3 = arith.constant 0.000000e+00 : f32
    %cst_4 = arith.constant 1.000000e+00 : f32
    %5 = arith.select %4, %cst_3, %cst_4 : f32
    %c3_i32 = arith.constant 3 : i32
    %6 = arith.cmpi eq, %arg1, %c3_i32 : i32
    %cst_5 = arith.constant 0.000000e+00 : f32
    %cst_6 = arith.constant 1.000000e+00 : f32
    %7 = arith.select %6, %cst_5, %cst_6 : f32
    %c0_7 = arith.constant 0 : index
    %c0_8 = arith.constant 0 : index
    %c0_9 = arith.constant 0 : index
    %8 = vector.load %arg2[%c0_7, %c0_8, %c0_9] : memref<1x64x128xbf16, #tpu.memory_space<vmem>>, vector<1x64x128xbf16>
    %9 = vector.shape_cast %8 : vector<1x64x128xbf16> to vector<64x128xbf16>
    %10 = arith.extf %9 : vector<64x128xbf16> to vector<64x128xf32>
    %c0_10 = arith.constant 0 : index
    %c0_11 = arith.constant 0 : index
    %11 = vector.load %arg5[%c0_10, %c0_11] : memref<1x128xf32, #tpu.memory_space<vmem>>, vector<1x128xf32>
    %12 = vector.broadcast %11 : vector<1x128xf32> to vector<64x128xf32>
    %13 = arith.mulf %10, %12 : vector<64x128xf32>
    %c0_12 = arith.constant 0 : index
    %c0_13 = arith.constant 0 : index
    %14 = vector.load %arg6[%c0_12, %c0_13] : memref<1x128xf32, #tpu.memory_space<vmem>>, vector<1x128xf32>
    %15 = vector.broadcast %14 : vector<1x128xf32> to vector<64x128xf32>
    %16 = arith.addf %13, %15 : vector<64x128xf32>
    %cst_14 = arith.constant 0.000000e+00 : f32
    %17 = vector.broadcast %cst_14 : f32 to vector<64x128xf32>
    %18 = arith.maximumf %16, %17 : vector<64x128xf32>
    %c24 = arith.constant 24 : index
    %c0_15 = arith.constant 0 : index
    %19 = vector.load %arg11[%c24, %c0_15] : memref<112x128xf32, #tpu.memory_space<vmem>>, vector<64x128xf32>
    tpu.vector_store %arg11[%c24, %c0_15], %18 {strides = array<i32>} : memref<112x128xf32, #tpu.memory_space<vmem>>, vector<64x128xf32>,
    %c0_16 = arith.constant 0 : index
    %c0_17 = arith.constant 0 : index
    %c0_18 = arith.constant 0 : index
    %20 = vector.load %arg3[%c0_16, %c0_17, %c0_18] : memref<1x16x128xbf16, #tpu.memory_space<vmem>>, vector<1x16x128xbf16>
    %21 = vector.shape_cast %20 : vector<1x16x128xbf16> to vector<16x128xbf16>
    %22 = arith.extf %21 : vector<16x128xbf16> to vector<16x128xf32>
    %c0_19 = arith.constant 0 : index
    %c0_20 = arith.constant 0 : index
    %23 = vector.load %arg5[%c0_19, %c0_20] : memref<1x128xf32, #tpu.memory_space<vmem>>, vector<1x128xf32>
    %24 = vector.broadcast %23 : vector<1x128xf32> to vector<16x128xf32>
    %25 = arith.mulf %22, %24 : vector<16x128xf32>
    %c0_21 = arith.constant 0 : index
    %c0_22 = arith.constant 0 : index
    %26 = vector.load %arg6[%c0_21, %c0_22] : memref<1x128xf32, #tpu.memory_space<vmem>>, vector<1x128xf32>
    %27 = vector.broadcast %26 : vector<1x128xf32> to vector<16x128xf32>
    %28 = arith.addf %25, %27 : vector<16x128xf32>
    %cst_23 = arith.constant 0.000000e+00 : f32
    %29 = vector.broadcast %cst_23 : f32 to vector<16x128xf32>
    %30 = arith.maximumf %28, %29 : vector<16x128xf32>
    %31 = vector.broadcast %5 : f32 to vector<16x128xf32>
    %32 = arith.mulf %30, %31 : vector<16x128xf32>
    %c8 = arith.constant 8 : index
    %c0_24 = arith.constant 0 : index
    %33 = vector.load %arg11[%c8, %c0_24] : memref<112x128xf32, #tpu.memory_space<vmem>>, vector<16x128xf32>
    tpu.vector_store %arg11[%c8, %c0_24], %32 {strides = array<i32>} : memref<112x128xf32, #tpu.memory_space<vmem>>, vector<16x128xf32>,
    %c0_25 = arith.constant 0 : index
    %c0_26 = arith.constant 0 : index
    %c0_27 = arith.constant 0 : index
    %34 = vector.load %arg4[%c0_25, %c0_26, %c0_27] : memref<1x16x128xbf16, #tpu.memory_space<vmem>>, vector<1x16x128xbf16>
    %35 = vector.shape_cast %34 : vector<1x16x128xbf16> to vector<16x128xbf16>
    %36 = arith.extf %35 : vector<16x128xbf16> to vector<16x128xf32>
    %c0_28 = arith.constant 0 : index
    %c0_29 = arith.constant 0 : index
    %37 = vector.load %arg5[%c0_28, %c0_29] : memref<1x128xf32, #tpu.memory_space<vmem>>, vector<1x128xf32>
    %38 = vector.broadcast %37 : vector<1x128xf32> to vector<16x128xf32>
    %39 = arith.mulf %36, %38 : vector<16x128xf32>
    %c0_30 = arith.constant 0 : index
    %c0_31 = arith.constant 0 : index
    %40 = vector.load %arg6[%c0_30, %c0_31] : memref<1x128xf32, #tpu.memory_space<vmem>>, vector<1x128xf32>
    %41 = vector.broadcast %40 : vector<1x128xf32> to vector<16x128xf32>
    %42 = arith.addf %39, %41 : vector<16x128xf32>
    %cst_32 = arith.constant 0.000000e+00 : f32
    %43 = vector.broadcast %cst_32 : f32 to vector<16x128xf32>
    %44 = arith.maximumf %42, %43 : vector<16x128xf32>
    %45 = vector.broadcast %7 : f32 to vector<16x128xf32>
    %46 = arith.mulf %44, %45 : vector<16x128xf32>
    %c88 = arith.constant 88 : index
    %c0_33 = arith.constant 0 : index
    %47 = vector.load %arg11[%c88, %c0_33] : memref<112x128xf32, #tpu.memory_space<vmem>>, vector<16x128xf32>
    tpu.vector_store %arg11[%c88, %c0_33], %46 {strides = array<i32>} : memref<112x128xf32, #tpu.memory_space<vmem>>, vector<16x128xf32>,
    %48 = tpu.iota {dimensions = array<i32: 0>} : vector<64x128xi32>
    %c16_i32 = arith.constant 16 : i32
    %c0_i32_34 = arith.constant 0 : i32
    %49 = arith.cmpi eq, %c16_i32, %c0_i32_34 : i32
    %c1_i32 = arith.constant 1 : i32
    %50 = arith.select %49, %c1_i32, %c16_i32 : i32
    %51 = vector.broadcast %50 : i32 to vector<64x128xi32>
    %52 = arith.remsi %48, %51 : vector<64x128xi32>
    %c0_i32_35 = arith.constant 0 : i32
    %53 = vector.broadcast %c0_i32_35 : i32 to vector<64x128xi32>
    %54 = arith.cmpi ne, %52, %53 : vector<64x128xi32>
    %c0_i32_36 = arith.constant 0 : i32
    %55 = vector.broadcast %c0_i32_36 : i32 to vector<64x128xi32>
    %56 = arith.cmpi slt, %52, %55 : vector<64x128xi32>
    %c0_i32_37 = arith.constant 0 : i32
    %57 = arith.cmpi slt, %50, %c0_i32_37 : i32
    %58 = vector.broadcast %57 : i1 to vector<64x128xi1>
    %59 = vector.broadcast %58 : vector<64x128xi1> to vector<64x128xi1>
    %60 = arith.xori %56, %59 : vector<64x128xi1>
    %61 = arith.andi %60, %54 : vector<64x128xi1>
    %62 = vector.broadcast %50 : i32 to vector<64x128xi32>
    %63 = arith.addi %52, %62 : vector<64x128xi32>
    %64 = arith.select %61, %63, %52 : vector<64x128xi1>, vector<64x128xi32>
    %c0_i32_38 = arith.constant 0 : i32
    %65 = vector.broadcast %c0_i32_38 : i32 to vector<64x128xi32>
    %66 = arith.cmpi ne, %64, %65 : vector<64x128xi32>
    %67 = arith.extui %66 : vector<64x128xi1> to vector<64x128xi32>
    %68 = arith.sitofp %67 : vector<64x128xi32> to vector<64x128xf32>
    %c15_i32 = arith.constant 15 : i32
    %69 = vector.broadcast %c15_i32 : i32 to vector<64x128xi32>
    %70 = arith.cmpi ne, %64, %69 : vector<64x128xi32>
    %71 = arith.extui %70 : vector<64x128xi1> to vector<64x128xi32>
    %72 = arith.sitofp %71 : vector<64x128xi32> to vector<64x128xf32>
    %cst_39 = arith.constant 0.000000e+00 : f32
    %73 = vector.broadcast %cst_39 : f32 to vector<64x128xf32>
    %c7 = arith.constant 7 : index
    %c0_40 = arith.constant 0 : index
    %74 = vector.load %arg11[%c7, %c0_40] : memref<112x128xf32, #tpu.memory_space<vmem>>, vector<64x128xf32>
    %75 = arith.mulf %74, %68 : vector<64x128xf32>
    %76 = arith.truncf %75 : vector<64x128xf32> to vector<64x128xbf16>
    %c0_41 = arith.constant 0 : index
    %c0_42 = arith.constant 0 : index
    %c0_43 = arith.constant 0 : index
    %77 = vector.load %arg7[%c0_41, %c0_42, %c0_43] : memref<9x128x128xbf16, #tpu.memory_space<vmem>>, vector<1x128x128xbf16>
    %78 = vector.shape_cast %77 : vector<1x128x128xbf16> to vector<128x128xbf16>
    %cst_44 = arith.constant dense<0.000000e+00> : vector<64x128xf32>
    %79 = tpu.matmul %76, %78, %cst_44 {dimension_numbers = #tpu.dot_dimension_numbers<[1], [0], [0], [1], [0, 0, 1, 1], [], []>} : vector<64x128xbf16>, vector<128x128xbf16>, vector<64x128xf32> -> vector<64x128xf32>
    %80 = arith.addf %73, %79 : vector<64x128xf32>
    %c8_45 = arith.constant 8 : index
    %c0_46 = arith.constant 0 : index
    %81 = vector.load %arg11[%c8_45, %c0_46] : memref<112x128xf32, #tpu.memory_space<vmem>>, vector<64x128xf32>
    %82 = arith.truncf %81 : vector<64x128xf32> to vector<64x128xbf16>
    %c1 = arith.constant 1 : index
    %c0_47 = arith.constant 0 : index
    %c0_48 = arith.constant 0 : index
    %83 = vector.load %arg7[%c1, %c0_47, %c0_48] : memref<9x128x128xbf16, #tpu.memory_space<vmem>>, vector<1x128x128xbf16>
    %84 = vector.shape_cast %83 : vector<1x128x128xbf16> to vector<128x128xbf16>
    %cst_49 = arith.constant dense<0.000000e+00> : vector<64x128xf32>
    %85 = tpu.matmul %82, %84, %cst_49 {dimension_numbers = #tpu.dot_dimension_numbers<[1], [0], [0], [1], [0, 0, 1, 1], [], []>} : vector<64x128xbf16>, vector<128x128xbf16>, vector<64x128xf32> -> vector<64x128xf32>
    %86 = arith.addf %80, %85 : vector<64x128xf32>
    %c9 = arith.constant 9 : index
    %c0_50 = arith.constant 0 : index
    %87 = vector.load %arg11[%c9, %c0_50] : memref<112x128xf32, #tpu.memory_space<vmem>>, vector<64x128xf32>
    %88 = arith.mulf %87, %72 : vector<64x128xf32>
    %89 = arith.truncf %88 : vector<64x128xf32> to vector<64x128xbf16>
    %c2 = arith.constant 2 : index
    %c0_51 = arith.constant 0 : index
    %c0_52 = arith.constant 0 : index
    %90 = vector.load %arg7[%c2, %c0_51, %c0_52] : memref<9x128x128xbf16, #tpu.memory_space<vmem>>, vector<1x128x128xbf16>
    %91 = vector.shape_cast %90 : vector<1x128x128xbf16> to vector<128x128xbf16>
    %cst_53 = arith.constant dense<0.000000e+00> : vector<64x128xf32>
    %92 = tpu.matmul %89, %91, %cst_53 {dimension_numbers = #tpu.dot_dimension_numbers<[1], [0], [0], [1], [0, 0, 1, 1], [], []>} : vector<64x128xbf16>, vector<128x128xbf16>, vector<64x128xf32> -> vector<64x128xf32>
    %93 = arith.addf %86, %92 : vector<64x128xf32>
    %c23 = arith.constant 23 : index
    %c0_54 = arith.constant 0 : index
    %94 = vector.load %arg11[%c23, %c0_54] : memref<112x128xf32, #tpu.memory_space<vmem>>, vector<64x128xf32>
    %95 = arith.mulf %94, %68 : vector<64x128xf32>
    %96 = arith.truncf %95 : vector<64x128xf32> to vector<64x128xbf16>
    %c3 = arith.constant 3 : index
    %c0_55 = arith.constant 0 : index
    %c0_56 = arith.constant 0 : index
    %97 = vector.load %arg7[%c3, %c0_55, %c0_56] : memref<9x128x128xbf16, #tpu.memory_space<vmem>>, vector<1x128x128xbf16>
    %98 = vector.shape_cast %97 : vector<1x128x128xbf16> to vector<128x128xbf16>
    %cst_57 = arith.constant dense<0.000000e+00> : vector<64x128xf32>
    %99 = tpu.matmul %96, %98, %cst_57 {dimension_numbers = #tpu.dot_dimension_numbers<[1], [0], [0], [1], [0, 0, 1, 1], [], []>} : vector<64x128xbf16>, vector<128x128xbf16>, vector<64x128xf32> -> vector<64x128xf32>
    %100 = arith.addf %93, %99 : vector<64x128xf32>
    %c24_58 = arith.constant 24 : index
    %c0_59 = arith.constant 0 : index
    %101 = vector.load %arg11[%c24_58, %c0_59] : memref<112x128xf32, #tpu.memory_space<vmem>>, vector<64x128xf32>
    %102 = arith.truncf %101 : vector<64x128xf32> to vector<64x128xbf16>
    %c4 = arith.constant 4 : index
    %c0_60 = arith.constant 0 : index
    %c0_61 = arith.constant 0 : index
    %103 = vector.load %arg7[%c4, %c0_60, %c0_61] : memref<9x128x128xbf16, #tpu.memory_space<vmem>>, vector<1x128x128xbf16>
    %104 = vector.shape_cast %103 : vector<1x128x128xbf16> to vector<128x128xbf16>
    %cst_62 = arith.constant dense<0.000000e+00> : vector<64x128xf32>
    %105 = tpu.matmul %102, %104, %cst_62 {dimension_numbers = #tpu.dot_dimension_numbers<[1], [0], [0], [1], [0, 0, 1, 1], [], []>} : vector<64x128xbf16>, vector<128x128xbf16>, vector<64x128xf32> -> vector<64x128xf32>
    %106 = arith.addf %100, %105 : vector<64x128xf32>
    %c25 = arith.constant 25 : index
    %c0_63 = arith.constant 0 : index
    %107 = vector.load %arg11[%c25, %c0_63] : memref<112x128xf32, #tpu.memory_space<vmem>>, vector<64x128xf32>
    %108 = arith.mulf %107, %72 : vector<64x128xf32>
    %109 = arith.truncf %108 : vector<64x128xf32> to vector<64x128xbf16>
    %c5 = arith.constant 5 : index
    %c0_64 = arith.constant 0 : index
    %c0_65 = arith.constant 0 : index
    %110 = vector.load %arg7[%c5, %c0_64, %c0_65] : memref<9x128x128xbf16, #tpu.memory_space<vmem>>, vector<1x128x128xbf16>
    %111 = vector.shape_cast %110 : vector<1x128x128xbf16> to vector<128x128xbf16>
    %cst_66 = arith.constant dense<0.000000e+00> : vector<64x128xf32>
    %112 = tpu.matmul %109, %111, %cst_66 {dimension_numbers = #tpu.dot_dimension_numbers<[1], [0], [0], [1], [0, 0, 1, 1], [], []>} : vector<64x128xbf16>, vector<128x128xbf16>, vector<64x128xf32> -> vector<64x128xf32>
    %113 = arith.addf %106, %112 : vector<64x128xf32>
    %c39 = arith.constant 39 : index
    %c0_67 = arith.constant 0 : index
    %114 = vector.load %arg11[%c39, %c0_67] : memref<112x128xf32, #tpu.memory_space<vmem>>, vector<64x128xf32>
    %115 = arith.mulf %114, %68 : vector<64x128xf32>
    %116 = arith.truncf %115 : vector<64x128xf32> to vector<64x128xbf16>
    %c6 = arith.constant 6 : index
    %c0_68 = arith.constant 0 : index
    %c0_69 = arith.constant 0 : index
    %117 = vector.load %arg7[%c6, %c0_68, %c0_69] : memref<9x128x128xbf16, #tpu.memory_space<vmem>>, vector<1x128x128xbf16>
    %118 = vector.shape_cast %117 : vector<1x128x128xbf16> to vector<128x128xbf16>
    %cst_70 = arith.constant dense<0.000000e+00> : vector<64x128xf32>
    %119 = tpu.matmul %116, %118, %cst_70 {dimension_numbers = #tpu.dot_dimension_numbers<[1], [0], [0], [1], [0, 0, 1, 1], [], []>} : vector<64x128xbf16>, vector<128x128xbf16>, vector<64x128xf32> -> vector<64x128xf32>
    %120 = arith.addf %113, %119 : vector<64x128xf32>
    %c40 = arith.constant 40 : index
    %c0_71 = arith.constant 0 : index
    %121 = vector.load %arg11[%c40, %c0_71] : memref<112x128xf32, #tpu.memory_space<vmem>>, vector<64x128xf32>
    %122 = arith.truncf %121 : vector<64x128xf32> to vector<64x128xbf16>
    %c7_72 = arith.constant 7 : index
    %c0_73 = arith.constant 0 : index
    %c0_74 = arith.constant 0 : index
    %123 = vector.load %arg7[%c7_72, %c0_73, %c0_74] : memref<9x128x128xbf16, #tpu.memory_space<vmem>>, vector<1x128x128xbf16>
    %124 = vector.shape_cast %123 : vector<1x128x128xbf16> to vector<128x128xbf16>
    %cst_75 = arith.constant dense<0.000000e+00> : vector<64x128xf32>
    %125 = tpu.matmul %122, %124, %cst_75 {dimension_numbers = #tpu.dot_dimension_numbers<[1], [0], [0], [1], [0, 0, 1, 1], [], []>} : vector<64x128xbf16>, vector<128x128xbf16>, vector<64x128xf32> -> vector<64x128xf32>
    %126 = arith.addf %120, %125 : vector<64x128xf32>
    %c41 = arith.constant 41 : index
    %c0_76 = arith.constant 0 : index
    %127 = vector.load %arg11[%c41, %c0_76] : memref<112x128xf32, #tpu.memory_space<vmem>>, vector<64x128xf32>
    %128 = arith.mulf %127, %72 : vector<64x128xf32>
    %129 = arith.truncf %128 : vector<64x128xf32> to vector<64x128xbf16>
    %c8_77 = arith.constant 8 : index
    %c0_78 = arith.constant 0 : index
    %c0_79 = arith.constant 0 : index
    %130 = vector.load %arg7[%c8_77, %c0_78, %c0_79] : memref<9x128x128xbf16, #tpu.memory_space<vmem>>, vector<1x128x128xbf16>
    %131 = vector.shape_cast %130 : vector<1x128x128xbf16> to vector<128x128xbf16>
    %cst_80 = arith.constant dense<0.000000e+00> : vector<64x128xf32>
    %132 = tpu.matmul %129, %131, %cst_80 {dimension_numbers = #tpu.dot_dimension_numbers<[1], [0], [0], [1], [0, 0, 1, 1], [], []>} : vector<64x128xbf16>, vector<128x128xbf16>, vector<64x128xf32> -> vector<64x128xf32>
    %133 = arith.addf %126, %132 : vector<64x128xf32>
    %134 = arith.truncf %133 : vector<64x128xf32> to vector<64x128xbf16>
    %c0_81 = arith.constant 0 : index
    %c0_82 = arith.constant 0 : index
    %c0_83 = arith.constant 0 : index
    %135 = vector.load %arg8[%c0_81, %c0_82, %c0_83] : memref<1x64x128xbf16, #tpu.memory_space<vmem>>, vector<1x64x128xbf16>
    %136 = vector.shape_cast %135 : vector<1x64x128xbf16> to vector<64x128xbf16>
    %137 = vector.shape_cast %134 : vector<64x128xbf16> to vector<1x64x128xbf16>
    tpu.vector_store %arg8[%c0_81, %c0_82, %c0_83], %137 {strides = array<i32>} : memref<1x64x128xbf16, #tpu.memory_space<vmem>>, vector<1x64x128xbf16>,
    %c0_i32_84 = arith.constant 0 : i32
    %138 = arith.cmpi eq, %arg1, %c0_i32_84 : i32
    %139 = arith.extui %138 : i1 to i32
    %c0_i32_85 = arith.constant 0 : i32
    %140 = arith.cmpi ne, %139, %c0_i32_85 : i32
    scf.if %140 {
      %cst_100 = arith.constant 0.000000e+00 : f32
      %158 = vector.broadcast %cst_100 : f32 to vector<1x1x128xf32>
      %c0_101 = arith.constant 0 : index
      %c0_102 = arith.constant 0 : index
      %c0_103 = arith.constant 0 : index
      %159 = vector.load %arg9[%c0_101, %c0_102, %c0_103] : memref<1x1x128xf32, #tpu.memory_space<vmem>>, vector<1x1x128xf32>
      tpu.vector_store %arg9[%c0_101, %c0_102, %c0_103], %158 {strides = array<i32>} : memref<1x1x128xf32, #tpu.memory_space<vmem>>, vector<1x1x128xf32>,
      %cst_104 = arith.constant 0.000000e+00 : f32
      %160 = vector.broadcast %cst_104 : f32 to vector<1x1x128xf32>
      %c0_105 = arith.constant 0 : index
      %c0_106 = arith.constant 0 : index
      %c0_107 = arith.constant 0 : index
      %161 = vector.load %arg10[%c0_105, %c0_106, %c0_107] : memref<1x1x128xf32, #tpu.memory_space<vmem>>, vector<1x1x128xf32>
      tpu.vector_store %arg10[%c0_105, %c0_106, %c0_107], %160 {strides = array<i32>} : memref<1x1x128xf32, #tpu.memory_space<vmem>>, vector<1x1x128xf32>,
    } else {
    }
    %c0_86 = arith.constant 0 : index
    %c0_87 = arith.constant 0 : index
    %c0_88 = arith.constant 0 : index
    %141 = vector.load %arg9[%c0_86, %c0_87, %c0_88] : memref<1x1x128xf32, #tpu.memory_space<vmem>>, vector<1x1x128xf32>
    %142 = vector.shape_cast %141 : vector<1x1x128xf32> to vector<1x128xf32>
    %cst_89 = arith.constant dense<0.000000e+00> : vector<128xf32>
    %143 = vector.multi_reduction <add>, %133, %cst_89 [0] : vector<64x128xf32> to vector<128xf32>
    %144 = vector.shape_cast %143 : vector<128xf32> to vector<1x128xf32>
    %145 = arith.addf %142, %144 : vector<1x128xf32>
    %c0_90 = arith.constant 0 : index
    %c0_91 = arith.constant 0 : index
    %c0_92 = arith.constant 0 : index
    %146 = vector.load %arg9[%c0_90, %c0_91, %c0_92] : memref<1x1x128xf32, #tpu.memory_space<vmem>>, vector<1x1x128xf32>
    %147 = vector.shape_cast %146 : vector<1x1x128xf32> to vector<1x128xf32>
    %148 = vector.shape_cast %145 : vector<1x128xf32> to vector<1x1x128xf32>
    tpu.vector_store %arg9[%c0_90, %c0_91, %c0_92], %148 {strides = array<i32>} : memref<1x1x128xf32, #tpu.memory_space<vmem>>, vector<1x1x128xf32>,
    %c0_93 = arith.constant 0 : index
    %c0_94 = arith.constant 0 : index
    %c0_95 = arith.constant 0 : index
    %149 = vector.load %arg10[%c0_93, %c0_94, %c0_95] : memref<1x1x128xf32, #tpu.memory_space<vmem>>, vector<1x1x128xf32>
    %150 = vector.shape_cast %149 : vector<1x1x128xf32> to vector<1x128xf32>
    %151 = arith.mulf %133, %133 : vector<64x128xf32>
    %cst_96 = arith.constant dense<0.000000e+00> : vector<128xf32>
    %152 = vector.multi_reduction <add>, %151, %cst_96 [0] : vector<64x128xf32> to vector<128xf32>
    %153 = vector.shape_cast %152 : vector<128xf32> to vector<1x128xf32>
    %154 = arith.addf %150, %153 : vector<1x128xf32>
    %c0_97 = arith.constant 0 : index
    %c0_98 = arith.constant 0 : index
    %c0_99 = arith.constant 0 : index
    %155 = vector.load %arg10[%c0_97, %c0_98, %c0_99] : memref<1x1x128xf32, #tpu.memory_space<vmem>>, vector<1x1x128xf32>
    %156 = vector.shape_cast %155 : vector<1x1x128xf32> to vector<1x128xf32>
    %157 = vector.shape_cast %154 : vector<1x128xf32> to vector<1x1x128xf32>
    tpu.vector_store %arg10[%c0_97, %c0_98, %c0_99], %157 {strides = array<i32>} : memref<1x1x128xf32, #tpu.memory_space<vmem>>, vector<1x1x128xf32>,
    return
  }
  func.func @transform_0(%arg0: i32, %arg1: i32) -> (i32, i32, i32) {
    %c0_i32 = arith.constant 0 : i32
    %c0_i32_0 = arith.constant 0 : i32
    return %arg0, %arg1, %c0_i32 : i32, i32, i32
  }
  func.func @transform_1(%arg0: i32, %arg1: i32) -> (i32, i32, i32) {
    %c4_i32 = arith.constant 4 : i32
    %0 = arith.muli %arg1, %c4_i32 : i32
    %c1_i32 = arith.constant 1 : i32
    %1 = arith.subi %0, %c1_i32 : i32
    %c0_i32 = arith.constant 0 : i32
    %2 = arith.maxsi %1, %c0_i32 : i32
    %c0_i32_0 = arith.constant 0 : i32
    %c0_i32_1 = arith.constant 0 : i32
    return %arg0, %2, %c0_i32_0 : i32, i32, i32
  }
  func.func @transform_2(%arg0: i32, %arg1: i32) -> (i32, i32, i32) {
    %c4_i32 = arith.constant 4 : i32
    %0 = arith.muli %arg1, %c4_i32 : i32
    %c4_i32_0 = arith.constant 4 : i32
    %1 = arith.addi %0, %c4_i32_0 : i32
    %c15_i32 = arith.constant 15 : i32
    %2 = arith.minsi %1, %c15_i32 : i32
    %c0_i32 = arith.constant 0 : i32
    %c0_i32_1 = arith.constant 0 : i32
    return %arg0, %2, %c0_i32 : i32, i32, i32
  }
  func.func @transform_3(%arg0: i32, %arg1: i32) -> (i32, i32) {
    %c0_i32 = arith.constant 0 : i32
    %c0_i32_0 = arith.constant 0 : i32
    %c0_i32_1 = arith.constant 0 : i32
    return %c0_i32, %c0_i32_0 : i32, i32
  }
  func.func @transform_4(%arg0: i32, %arg1: i32) -> (i32, i32) {
    %c0_i32 = arith.constant 0 : i32
    %c0_i32_0 = arith.constant 0 : i32
    %c0_i32_1 = arith.constant 0 : i32
    return %c0_i32, %c0_i32_0 : i32, i32
  }
  func.func @transform_5(%arg0: i32, %arg1: i32) -> (i32, i32, i32) {
    %c0_i32 = arith.constant 0 : i32
    %c0_i32_0 = arith.constant 0 : i32
    %c0_i32_1 = arith.constant 0 : i32
    %c0_i32_2 = arith.constant 0 : i32
    return %c0_i32, %c0_i32_0, %c0_i32_1 : i32, i32, i32
  }
  func.func @transform_6(%arg0: i32, %arg1: i32) -> (i32, i32, i32) {
    %c0_i32 = arith.constant 0 : i32
    %c0_i32_0 = arith.constant 0 : i32
    return %arg0, %arg1, %c0_i32 : i32, i32, i32
  }
  func.func @transform_7(%arg0: i32, %arg1: i32) -> (i32, i32, i32) {
    %c0_i32 = arith.constant 0 : i32
    %c0_i32_0 = arith.constant 0 : i32
    %c0_i32_1 = arith.constant 0 : i32
    return %arg0, %c0_i32, %c0_i32_0 : i32, i32, i32
  }
  func.func @transform_8(%arg0: i32, %arg1: i32) -> (i32, i32, i32) {
    %c0_i32 = arith.constant 0 : i32
    %c0_i32_0 = arith.constant 0 : i32
    %c0_i32_1 = arith.constant 0 : i32
    return %arg0, %c0_i32, %c0_i32_0 : i32, i32, i32
  }
}

</mosaic_0001>

<llo_original>
// kernel: double_conv.5
$region0: #{double_conv.5}
  #allocation0 [shape = 'u32[]', space=smem, size = 0x4, offset = 0x4, fixed_abs, tag = 'smem constant byte address 0x4 - core index']
  #allocation1 [shape = 'u32[144,128]{1,0:T(1,128)}', space=vmem, size = 0x12000, scoped, tag = 'internal scratch']
  %s0 = inlined_call_operand.vmem [shape: bf16[2,256,128], index: 0, kind: input, shape index: {}]
  %s1 = inlined_call_operand.vmem [shape: f32[1,128], index: 1, kind: input, shape index: {}]
  %s2 = inlined_call_operand.vmem [shape: f32[1,128], index: 2, kind: input, shape index: {}]
  %s3 = inlined_call_operand.vmem [shape: f32[2,256,128], index: 3, kind: output, shape index: {}]
  %s4 = sld [smem:[#allocation0]]
  $region45: #{double_conv.5} parent=0
    _
  %s6 = ssub.s32 1, %s4
  %s7 = scalar_select 0, %s6, %s4
  loop: start=0, step=1, limit=10
  $region2: #{double_conv.5} parent=0 // loop_pre_header
    _
  $region3: #{double_conv.5} parent=0 // loop_header
    %s9 = sphi 0, %s13
    %p10 = scmp.ge.s32.totalorder %s9, 10
    %s16 = sphi 0, %s28
    %s17 = sphi 0, %s24
    %s18 = sphi 0, %s16
    %s19 = sphi 0, %s17
    %s20 = sphi 0, %s18
    %s21 = sphi 0, %s19
    %s33 = sphi 0, %s35
    %s36 = sphi 0, %s33
    %s37 = sphi 0, %s36
    %s53 = sphi 0, %s37
    %s57 = sphi 0, %s57
    %s59 = sphi 0, %s57
    %s60 = sphi 0, %s59
    %s74 = sphi 0, %s60
    %s78 = sphi 0, %s78
    %s80 = sphi 0, %s78
    %s81 = sphi 0, %s80
    %s95 = sphi 0, %s81
    %s103 = sphi 0, %s105
    %s106 = sphi 0, %s103
    %s107 = sphi 0, %s106
    %s123 = sphi 0, %s107
  $region4: #{double_conv.5} parent=0 // loop_header_branch
    %12 = sbr.rel (%p10) target = $region8
  $region5: #{double_conv.5} parent=0 // loop_body
    %s14 = ssub.s32 %s9, 1
    %s15 = ssub.s32 %s9, 2
    %s22 = sadd.s32 1, %s17
    %p23 = scmp.ge.s32.totalorder %s22, 4
    %s24 = scalar_select %p23, 0, %s22
    %s25 = sadd.s32 1, %s16
    %s26 = scalar_select %p23, %s25, %s16
    %p27 = scmp.ge.s32.totalorder %s26, 2
    %s28 = scalar_select %p27, 0, %s26
    %s29 = ssub.s32 %s16, %s28
    %s30 = ssub.s32 %s17, %s24
    %s31 = sor.u32 %s29, %s30
    %p32 = scmp.eq.s32.totalorder %s31, 0
    %s34 = sadd.s32 %s33, 1
    %s35 = scalar_select %p32, %s33, %s34
    %p38 = pneg %p32
    %p39 = scmp.eq.s32.totalorder %s9, 7
    %p40 = por %p38, %p39
    %p41 = scmp.ne.s32.totalorder %s33, %s36
    %p42 = scmp.eq.s32.totalorder %s9, 0
    %p43 = por %p41, %p42
    %p44 = scmp.ne.s32.totalorder %s33, %s36
    %p45 = scmp.eq.s32.totalorder %s14, 7
    %p46 = por %p44, %p45
    %p47 = scmp.ne.s32.totalorder %s36, %s37
    %p48 = scmp.eq.s32.totalorder %s14, 0
    %p49 = por %p47, %p48
    %p50 = scmp.ne.s32.totalorder %s36, %s37
    %p51 = scmp.eq.s32.totalorder %s15, 7
    %p52 = por %p50, %p51
    %p54 = scmp.ne.s32.totalorder %s37, %s53
    %p55 = scmp.eq.s32.totalorder %s15, 0
    %p56 = por %p54, %p55
    %s58 = sadd.s32 %s57, 1
    %p61 = scmp.eq.s32.totalorder %s9, 7
    %p62 = scmp.ne.s32.totalorder %s57, %s59
    %p63 = scmp.eq.s32.totalorder %s9, 0
    %p64 = por %p62, %p63
    %p65 = scmp.ne.s32.totalorder %s57, %s59
    %p66 = scmp.eq.s32.totalorder %s14, 7
    %p67 = por %p65, %p66
    %p68 = scmp.ne.s32.totalorder %s59, %s60
    %p69 = scmp.eq.s32.totalorder %s14, 0
    %p70 = por %p68, %p69
    %p71 = scmp.ne.s32.totalorder %s59, %s60
    %p72 = scmp.eq.s32.totalorder %s15, 7
    %p73 = por %p71, %p72
    %p75 = scmp.ne.s32.totalorder %s60, %s74
    %p76 = scmp.eq.s32.totalorder %s15, 0
    %p77 = por %p75, %p76
    %s79 = sadd.s32 %s78, 1
    %p82 = scmp.eq.s32.totalorder %s9, 7
    %p83 = scmp.ne.s32.totalorder %s78, %s80
    %p84 = scmp.eq.s32.totalorder %s9, 0
    %p85 = por %p83, %p84
    %p86 = scmp.ne.s32.totalorder %s78, %s80
    %p87 = scmp.eq.s32.totalorder %s14, 7
    %p88 = por %p86, %p87
    %p89 = scmp.ne.s32.totalorder %s80, %s81
    %p90 = scmp.eq.s32.totalorder %s14, 0
    %p91 = por %p89, %p90
    %p92 = scmp.ne.s32.totalorder %s80, %s81
    %p93 = scmp.eq.s32.totalorder %s15, 7
    %p94 = por %p92, %p93
    %p96 = scmp.ne.s32.totalorder %s81, %s95
    %p97 = scmp.eq.s32.totalorder %s15, 0
    %p98 = por %p96, %p97
    %s99 = ssub.s32 %s16, %s28
    %s100 = ssub.s32 %s17, %s24
    %s101 = sor.u32 %s99, %s100
    %p102 = scmp.eq.s32.totalorder %s101, 0
    %s104 = sadd.s32 %s103, 1
    %s105 = scalar_select %p102, %s103, %s104
    %p108 = pneg %p102
    %p109 = scmp.eq.s32.totalorder %s9, 7
    %p110 = por %p108, %p109
    %p111 = scmp.ne.s32.totalorder %s103, %s106
    %p112 = scmp.eq.s32.totalorder %s9, 0
    %p113 = por %p111, %p112
    %p114 = scmp.ne.s32.totalorder %s103, %s106
    %p115 = scmp.eq.s32.totalorder %s14, 7
    %p116 = por %p114, %p115
    %p117 = scmp.ne.s32.totalorder %s106, %s107
    %p118 = scmp.eq.s32.totalorder %s14, 0
    %p119 = por %p117, %p118
    %p120 = scmp.ne.s32.totalorder %s106, %s107
    %p121 = scmp.eq.s32.totalorder %s15, 7
    %p122 = por %p120, %p121
    %p124 = scmp.ne.s32.totalorder %s107, %s123
    %p125 = scmp.eq.s32.totalorder %s15, 0
    %p126 = por %p124, %p125
    %p127 = scmp.le.s32.totalorder 1, %s9
    %p128 = scmp.lt.s32.totalorder %s9, 9
    %p129 = pnand %p127, %p128
    %p130 = pneg %p129
    // Predicated region
    $region9: #{double_conv.5} parent=5 // pred_check
      _
    $region10: #{double_conv.5} parent=5 // pred_check_branch
      %132 = sbr.rel (%p129) target = $region12
    $region11: #{double_conv.5} parent=5 // pred_region
      %s133 = ssub.s32 %s9, 1
      // Predicated region
      $region13: #{double_conv.5} parent=11 // pred_check
        %p134 = pneg %p70
      $region14: #{double_conv.5} parent=11 // pred_check_branch
        %136 = sbr.rel (%p134) target = $region16
      $region15: #{double_conv.5} parent=11 // pred_region
        _
      $region16: #{double_conv.5} parent=11 // pred_fallthru
        _
      // Predicated region
      $region17: #{double_conv.5} parent=11 // pred_check
        %p137 = pneg %p91
      $region18: #{double_conv.5} parent=11 // pred_check_branch
        %139 = sbr.rel (%p137) target = $region20
      $region19: #{double_conv.5} parent=11 // pred_region
        _
      $region20: #{double_conv.5} parent=11 // pred_fallthru
        _
    $region12: #{double_conv.5} parent=5 // pred_fallthru
      _
    %p140 = scmp.lt.s32.totalorder %s9, 8
    // Predicated region
    $region21: #{double_conv.5} parent=5 // pred_check
      %p141 = pneg %p140
    $region22: #{double_conv.5} parent=5 // pred_check_branch
      %143 = sbr.rel (%p141) target = $region24
    $region23: #{double_conv.5} parent=5 // pred_region
      // Predicated region
      $region25: #{double_conv.5} parent=23 // pred_check
        %p144 = pneg %p43
      $region26: #{double_conv.5} parent=23 // pred_check_branch
        %146 = sbr.rel (%p144) target = $region28
      $region27: #{double_conv.5} parent=23 // pred_region
        %s147 = smul.u32 8, %s17
        %p148 = scmp.lt.s32.totalorder %s16, 1
        %s149 = scalar_select %p148, %s16, 1
        %p150 = scmp.lt.s32.totalorder %s147, 31
        %s151 = scalar_select %p150, %s147, 31
        %s152 = smul.addr %s149, 32
        %s153 = sadd.s32 %s151, %s152
        %s154 = smul.addr %s153, 4
        %s155 = scalar_lea.vmem %s0, %s154
        %s156 = smul.u32 8, %s17
      $region28: #{double_conv.5} parent=23 // pred_fallthru
        _
    $region24: #{double_conv.5} parent=5 // pred_fallthru
      _
    %p157 = scmp.le.s32.totalorder 1, %s9
    %p158 = scmp.lt.s32.totalorder %s9, 9
    %p159 = pnand %p157, %p158
    %p160 = pneg %p159
    // Predicated region
    $region29: #{double_conv.5} parent=5 // pred_check
      _
    $region30: #{double_conv.5} parent=5 // pred_check_branch
      %162 = sbr.rel (%p159) target = $region32
    $region31: #{double_conv.5} parent=5 // pred_region
      %s163 = ssub.s32 %s9, 1
      %s164 = smul.u32 8, %s19
      %p165 = scmp.lt.s32.totalorder %s18, 1
      %s166 = scalar_select %p165, %s18, 1
      %p167 = scmp.lt.s32.totalorder %s164, 31
      %s168 = scalar_select %p167, %s164, 31
      %s169 = smul.addr %s166, 32
      %s170 = sadd.s32 %s168, %s169
      %s171 = smul.addr %s170, 4
      %s172 = scalar_lea.vmem %s0, %s171
      %p173 = pneg %p49
      %p174 = pneg %p46
      %p175 = pneg %p70
      %p176 = pneg %p67
      %p177 = pneg %p91
      %p178 = pneg %p88
      %p179 = pneg %p119
      %p180 = pneg %p116
      %s181 = smul.u32 8, %s19
      %p182 = scmp.lt.s32.totalorder %s18, 1
      %s183 = scalar_select %p182, %s18, 1
      %p184 = scmp.lt.s32.totalorder %s181, 31
      %s185 = scalar_select %p184, %s181, 31
      %s186 = smul.addr %s183, 32
      %s187 = sadd.s32 %s185, %s186
      %s188 = smul.addr %s187, 8
      %s189 = scalar_lea.vmem %s3, %s188
      %s190 = smul.u32 8, %s19
      %p191 = scmp.lt.s32.totalorder %s18, 1
      %s192 = scalar_select %p191, %s18, 1
      %p193 = scmp.lt.s32.totalorder %s190, 31
      %s194 = scalar_select %p193, %s190, 31
      %s195 = smul.addr %s192, 32
      %s196 = sadd.s32 %s194, %s195
      %s197 = smul.addr %s196, 4
      %s198 = scalar_lea.vmem %s0, %s197
      %s199 = smul.u32 8, %s19
      %s200 = smul.u32 8, %s19
      %p201 = scmp.lt.s32.totalorder %s18, 1
      %s202 = scalar_select %p201, %s18, 1
      %p203 = scmp.lt.s32.totalorder %s200, 31
      %s204 = scalar_select %p203, %s200, 31
      %s205 = smul.addr %s202, 32
      %s206 = sadd.s32 %s204, %s205
      %s207 = smul.addr %s206, 8
      %s208 = scalar_lea.vmem %s3, %s207
      %s209 = smul.u32 8, %s19
      %v210 = vld [vmem:[%s198] sm:$0xf]
      %v211 = vld [vmem:[%s198 + $0x4] sm:$0xf]
      %v212 = vld [vmem:[%s198 + $0x8] sm:$0xf]
      %v213 = vld [vmem:[%s198 + $0xc] sm:$0xf]
      %v214 = vld [vmem:[%s198 + $0x10] sm:$0xf]
      %v215 = vld [vmem:[%s198 + $0x14] sm:$0xf]
      %v216 = vld [vmem:[%s198 + $0x18] sm:$0xf]
      %v217 = vld [vmem:[%s198 + $0x1c] sm:$0xf]
      %v218 = vunpack.c.l.bf16 %v210
      %v219 = vunpack.c.l.bf16 %v211
      %v220 = vunpack.c.l.bf16 %v212
      %v221 = vunpack.c.l.bf16 %v213
      %v222 = vunpack.c.l.bf16 %v214
      %v223 = vunpack.c.l.bf16 %v215
      %v224 = vunpack.c.l.bf16 %v216
      %v225 = vunpack.c.l.bf16 %v217
      %v226 = vld [vmem:[%s1] sm:$0x1]
      %v228 = vlaneseq
      %v229 = vshrl.u32 %v228, 7
      %v230 = vsub.s32 0, %v229
      %v231 = vrot.slane %v226, %v230
      %v233 = vmul.f32 %v218, %v231
      %v234 = vmul.f32 %v219, %v231
      %v235 = vmul.f32 %v220, %v231
      %v236 = vmul.f32 %v221, %v231
      %v237 = vmul.f32 %v222, %v231
      %v238 = vmul.f32 %v223, %v231
      %v239 = vmul.f32 %v224, %v231
      %v240 = vmul.f32 %v225, %v231
      %v241 = vld [vmem:[%s2] sm:$0x1]
      %v243 = vlaneseq
      %v244 = vshrl.u32 %v243, 7
      %v245 = vsub.s32 0, %v244
      %v246 = vrot.slane %v241, %v245
      %v248 = vadd.f32 %v233, %v246
      %v249 = vadd.f32 %v234, %v246
      %v250 = vadd.f32 %v235, %v246
      %v251 = vadd.f32 %v236, %v246
      %v252 = vadd.f32 %v237, %v246
      %v253 = vadd.f32 %v238, %v246
      %v254 = vadd.f32 %v239, %v246
      %v255 = vadd.f32 %v240, %v246
      %v256 = vmax.f32 %v248, 0.0
      %v257 = vmax.f32 %v249, 0.0
      %v258 = vmax.f32 %v250, 0.0
      %v259 = vmax.f32 %v251, 0.0
      %v260 = vmax.f32 %v252, 0.0
      %v261 = vmax.f32 %v253, 0.0
      %v262 = vmax.f32 %v254, 0.0
      %v263 = vmax.f32 %v255, 0.0
      %264 = vst [vmem:[%s208] sm:$0xff] %v256
      %265 = vst [vmem:[%s208 + $0x8] sm:$0xff] %v257
      %266 = vst [vmem:[%s208 + $0x10] sm:$0xff] %v258
      %267 = vst [vmem:[%s208 + $0x18] sm:$0xff] %v259
      %268 = vst [vmem:[%s208 + $0x20] sm:$0xff] %v260
      %269 = vst [vmem:[%s208 + $0x28] sm:$0xff] %v261
      %270 = vst [vmem:[%s208 + $0x30] sm:$0xff] %v262
      %271 = vst [vmem:[%s208 + $0x38] sm:$0xff] %v263
      %s272 = smul.u32 8, %s19
      %p273 = scmp.lt.s32.totalorder %s18, 1
      %s274 = scalar_select %p273, %s18, 1
      %p275 = scmp.lt.s32.totalorder %s272, 31
      %s276 = scalar_select %p275, %s272, 31
      %s277 = smul.addr %s274, 32
      %s278 = sadd.s32 %s276, %s277
      %s279 = smul.addr %s278, 8
      %s280 = scalar_lea.vmem %s3, %s279
      // Predicated region
      $region33: #{double_conv.5} parent=31 // pred_check
        %p281 = pneg %p116
      $region34: #{double_conv.5} parent=31 // pred_check_branch
        %283 = sbr.rel (%p281) target = $region36
      $region35: #{double_conv.5} parent=31 // pred_region
        %s284 = smul.u32 8, %s19
      $region36: #{double_conv.5} parent=31 // pred_fallthru
        _
    $region32: #{double_conv.5} parent=5 // pred_fallthru
      _
    %p285 = scmp.le.s32.totalorder 2, %s9
    // Predicated region
    $region37: #{double_conv.5} parent=5 // pred_check
      %p286 = pneg %p285
    $region38: #{double_conv.5} parent=5 // pred_check_branch
      %288 = sbr.rel (%p286) target = $region40
    $region39: #{double_conv.5} parent=5 // pred_region
      %s289 = ssub.s32 %s9, 2
      // Predicated region
      $region41: #{double_conv.5} parent=39 // pred_check
        %p290 = pneg %p122
      $region42: #{double_conv.5} parent=39 // pred_check_branch
        %292 = sbr.rel (%p290) target = $region44
      $region43: #{double_conv.5} parent=39 // pred_region
        %s293 = smul.u32 8, %s21
        %p294 = scmp.lt.s32.totalorder %s20, 1
        %s295 = scalar_select %p294, %s20, 1
        %p296 = scmp.lt.s32.totalorder %s293, 31
        %s297 = scalar_select %p296, %s293, 31
        %s298 = smul.addr %s295, 32
        %s299 = sadd.s32 %s297, %s298
        %s300 = smul.addr %s299, 8
        %s301 = scalar_lea.vmem %s3, %s300
      $region44: #{double_conv.5} parent=39 // pred_fallthru
        _
    $region40: #{double_conv.5} parent=5 // pred_fallthru
      _
  $region6: #{double_conv.5} parent=0 // loop_footer
    %s13 = sadd.s32 1, %s9
  $region7: #{double_conv.5} parent=0 // loop_footer_branch
    %8 = sbr.rel target = $region3
  $region8: #{double_conv.5} parent=0 // loop_exit
    _

// kernel: double_conv.3
$region0: #{double_conv.3}
  #allocation0 [shape = 'u32[]', space=smem, size = 0x4, offset = 0x4, fixed_abs, tag = 'smem constant byte address 0x4 - core index']
  #allocation1 [shape = 'u32[144,128]{1,0:T(1,128)}', space=vmem, size = 0x12000, scoped, tag = 'internal scratch']
  #allocation2 [shape = 'f32[112,128]{1,0:T(8,128)}', space=vmem, size = 0xe000, scoped, tag = 'scratch operand']
  %s0 = inlined_call_operand.vmem [shape: f32[2,256,128], index: 0, kind: input, shape index: {}, may-alias: {0,1,2}]
  %s1 = inlined_call_operand.vmem [shape: f32[2,256,128], index: 1, kind: input, shape index: {}, may-alias: {0,1,2}]
  %s2 = inlined_call_operand.vmem [shape: f32[2,256,128], index: 2, kind: input, shape index: {}, may-alias: {0,1,2}]
  %s3 = inlined_call_operand.vmem [shape: f32[1,128], index: 3, kind: input, shape index: {}]
  %s4 = inlined_call_operand.vmem [shape: f32[1,128], index: 4, kind: input, shape index: {}]
  %s5 = inlined_call_operand.vmem [shape: bf16[9,128,128], index: 5, kind: input, shape index: {}]
  %s6 = inlined_call_operand.vmem [shape: bf16[2,256,128], index: 6, kind: output, shape index: {0}]
  %s7 = inlined_call_operand.vmem [shape: f32[2,1,128], index: 7, kind: output, shape index: {1}]
  %s8 = inlined_call_operand.vmem [shape: f32[2,1,128], index: 8, kind: output, shape index: {2}]
  %9 = xla_tuple %s6, %s7, %s8
  %s10 = sld [smem:[#allocation0]]
  $region77: #{double_conv.3} parent=0
    _
  %s12 = ssub.s32 1, %s10
  %s13 = scalar_select 0, %s12, %s10
  loop: start=0, step=1, limit=10
  $region2: #{double_conv.3} parent=0 // loop_pre_header
    _
  $region3: #{double_conv.3} parent=0 // loop_header
    %s15 = sphi 0, %s19
    %p16 = scmp.ge.s32.totalorder %s15, 10
    %s22 = sphi 0, %s34
    %s23 = sphi 0, %s30
    %s24 = sphi 0, %s22
    %s25 = sphi 0, %s23
    %s26 = sphi 0, %s24
    %s27 = sphi 0, %s25
    %s39 = sphi 0, %s41
    %s42 = sphi 0, %s39
    %s43 = sphi 0, %s42
    %s59 = sphi 0, %s43
    %s75 = sphi 0, %s77
    %s78 = sphi 0, %s75
    %s79 = sphi 0, %s78
    %s95 = sphi 0, %s79
    %s111 = sphi 0, %s113
    %s114 = sphi 0, %s111
    %s115 = sphi 0, %s114
    %s131 = sphi 0, %s115
    %s135 = sphi 0, %s135
    %s137 = sphi 0, %s135
    %s138 = sphi 0, %s137
    %s152 = sphi 0, %s138
    %s156 = sphi 0, %s156
    %s158 = sphi 0, %s156
    %s159 = sphi 0, %s158
    %s173 = sphi 0, %s159
    %s177 = sphi 0, %s177
    %s179 = sphi 0, %s177
    %s180 = sphi 0, %s179
    %s194 = sphi 0, %s180
    %s202 = sphi 0, %s204
    %s205 = sphi 0, %s202
    %s206 = sphi 0, %s205
    %s222 = sphi 0, %s206
    %s228 = sphi 0, %s230
    %s231 = sphi 0, %s228
    %s232 = sphi 0, %s231
    %s248 = sphi 0, %s232
    %s254 = sphi 0, %s256
    %s257 = sphi 0, %s254
    %s258 = sphi 0, %s257
    %s274 = sphi 0, %s258
  $region4: #{double_conv.3} parent=0 // loop_header_branch
    %18 = sbr.rel (%p16) target = $region8
  $region5: #{double_conv.3} parent=0 // loop_body
    %s20 = ssub.s32 %s15, 1
    %s21 = ssub.s32 %s15, 2
    %s28 = sadd.s32 1, %s23
    %p29 = scmp.ge.s32.totalorder %s28, 4
    %s30 = scalar_select %p29, 0, %s28
    %s31 = sadd.s32 1, %s22
    %s32 = scalar_select %p29, %s31, %s22
    %p33 = scmp.ge.s32.totalorder %s32, 2
    %s34 = scalar_select %p33, 0, %s32
    %s35 = ssub.s32 %s22, %s34
    %s36 = ssub.s32 %s23, %s30
    %s37 = sor.u32 %s35, %s36
    %p38 = scmp.eq.s32.totalorder %s37, 0
    %s40 = sadd.s32 %s39, 1
    %s41 = scalar_select %p38, %s39, %s40
    %p44 = pneg %p38
    %p45 = scmp.eq.s32.totalorder %s15, 7
    %p46 = por %p44, %p45
    %p47 = scmp.ne.s32.totalorder %s39, %s42
    %p48 = scmp.eq.s32.totalorder %s15, 0
    %p49 = por %p47, %p48
    %p50 = scmp.ne.s32.totalorder %s39, %s42
    %p51 = scmp.eq.s32.totalorder %s20, 7
    %p52 = por %p50, %p51
    %p53 = scmp.ne.s32.totalorder %s42, %s43
    %p54 = scmp.eq.s32.totalorder %s20, 0
    %p55 = por %p53, %p54
    %p56 = scmp.ne.s32.totalorder %s42, %s43
    %p57 = scmp.eq.s32.totalorder %s21, 7
    %p58 = por %p56, %p57
    %p60 = scmp.ne.s32.totalorder %s43, %s59
    %p61 = scmp.eq.s32.totalorder %s21, 0
    %p62 = por %p60, %p61
    %s63 = smul.u32 %s23, 4
    %s64 = ssub.s32 %s63, 1
    %p65 = scmp.gt.s32.totalorder %s64, 0
    %s66 = scalar_select %p65, %s64, 0
    %s67 = smul.u32 %s30, 4
    %s68 = ssub.s32 %s67, 1
    %p69 = scmp.gt.s32.totalorder %s68, 0
    %s70 = scalar_select %p69, %s68, 0
    %s71 = ssub.s32 %s22, %s34
    %s72 = ssub.s32 %s66, %s70
    %s73 = sor.u32 %s71, %s72
    %p74 = scmp.eq.s32.totalorder %s73, 0
    %s76 = sadd.s32 %s75, 1
    %s77 = scalar_select %p74, %s75, %s76
    %p80 = pneg %p74
    %p81 = scmp.eq.s32.totalorder %s15, 7
    %p82 = por %p80, %p81
    %p83 = scmp.ne.s32.totalorder %s75, %s78
    %p84 = scmp.eq.s32.totalorder %s15, 0
    %p85 = por %p83, %p84
    %p86 = scmp.ne.s32.totalorder %s75, %s78
    %p87 = scmp.eq.s32.totalorder %s20, 7
    %p88 = por %p86, %p87
    %p89 = scmp.ne.s32.totalorder %s78, %s79
    %p90 = scmp.eq.s32.totalorder %s20, 0
    %p91 = por %p89, %p90
    %p92 = scmp.ne.s32.totalorder %s78, %s79
    %p93 = scmp.eq.s32.totalorder %s21, 7
    %p94 = por %p92, %p93
    %p96 = scmp.ne.s32.totalorder %s79, %s95
    %p97 = scmp.eq.s32.totalorder %s21, 0
    %p98 = por %p96, %p97
    %s99 = smul.u32 %s23, 4
    %s100 = sadd.s32 %s99, 4
    %p101 = scmp.lt.s32.totalorder %s100, 15
    %s102 = scalar_select %p101, %s100, 15
    %s103 = smul.u32 %s30, 4
    %s104 = sadd.s32 %s103, 4
    %p105 = scmp.lt.s32.totalorder %s104, 15
    %s106 = scalar_select %p105, %s104, 15
    %s107 = ssub.s32 %s22, %s34
    %s108 = ssub.s32 %s102, %s106
    %s109 = sor.u32 %s107, %s108
    %p110 = scmp.eq.s32.totalorder %s109, 0
    %s112 = sadd.s32 %s111, 1
    %s113 = scalar_select %p110, %s111, %s112
    %p116 = pneg %p110
    %p117 = scmp.eq.s32.totalorder %s15, 7
    %p118 = por %p116, %p117
    %p119 = scmp.ne.s32.totalorder %s111, %s114
    %p120 = scmp.eq.s32.totalorder %s15, 0
    %p121 = por %p119, %p120
    %p122 = scmp.ne.s32.totalorder %s111, %s114
    %p123 = scmp.eq.s32.totalorder %s20, 7
    %p124 = por %p122, %p123
    %p125 = scmp.ne.s32.totalorder %s114, %s115
    %p126 = scmp.eq.s32.totalorder %s20, 0
    %p127 = por %p125, %p126
    %p128 = scmp.ne.s32.totalorder %s114, %s115
    %p129 = scmp.eq.s32.totalorder %s21, 7
    %p130 = por %p128, %p129
    %p132 = scmp.ne.s32.totalorder %s115, %s131
    %p133 = scmp.eq.s32.totalorder %s21, 0
    %p134 = por %p132, %p133
    %s136 = sadd.s32 %s135, 1
    %p139 = scmp.eq.s32.totalorder %s15, 7
    %p140 = scmp.ne.s32.totalorder %s135, %s137
    %p141 = scmp.eq.s32.totalorder %s15, 0
    %p142 = por %p140, %p141
    %p143 = scmp.ne.s32.totalorder %s135, %s137
    %p144 = scmp.eq.s32.totalorder %s20, 7
    %p145 = por %p143, %p144
    %p146 = scmp.ne.s32.totalorder %s137, %s138
    %p147 = scmp.eq.s32.totalorder %s20, 0
    %p148 = por %p146, %p147
    %p149 = scmp.ne.s32.totalorder %s137, %s138
    %p150 = scmp.eq.s32.totalorder %s21, 7
    %p151 = por %p149, %p150
    %p153 = scmp.ne.s32.totalorder %s138, %s152
    %p154 = scmp.eq.s32.totalorder %s21, 0
    %p155 = por %p153, %p154
    %s157 = sadd.s32 %s156, 1
    %p160 = scmp.eq.s32.totalorder %s15, 7
    %p161 = scmp.ne.s32.totalorder %s156, %s158
    %p162 = scmp.eq.s32.totalorder %s15, 0
    %p163 = por %p161, %p162
    %p164 = scmp.ne.s32.totalorder %s156, %s158
    %p165 = scmp.eq.s32.totalorder %s20, 7
    %p166 = por %p164, %p165
    %p167 = scmp.ne.s32.totalorder %s158, %s159
    %p168 = scmp.eq.s32.totalorder %s20, 0
    %p169 = por %p167, %p168
    %p170 = scmp.ne.s32.totalorder %s158, %s159
    %p171 = scmp.eq.s32.totalorder %s21, 7
    %p172 = por %p170, %p171
    %p174 = scmp.ne.s32.totalorder %s159, %s173
    %p175 = scmp.eq.s32.totalorder %s21, 0
    %p176 = por %p174, %p175
    %s178 = sadd.s32 %s177, 1
    %p181 = scmp.eq.s32.totalorder %s15, 7
    %p182 = scmp.ne.s32.totalorder %s177, %s179
    %p183 = scmp.eq.s32.totalorder %s15, 0
    %p184 = por %p182, %p183
    %p185 = scmp.ne.s32.totalorder %s177, %s179
    %p186 = scmp.eq.s32.totalorder %s20, 7
    %p187 = por %p185, %p186
    %p188 = scmp.ne.s32.totalorder %s179, %s180
    %p189 = scmp.eq.s32.totalorder %s20, 0
    %p190 = por %p188, %p189
    %p191 = scmp.ne.s32.totalorder %s179, %s180
    %p192 = scmp.eq.s32.totalorder %s21, 7
    %p193 = por %p191, %p192
    %p195 = scmp.ne.s32.totalorder %s180, %s194
    %p196 = scmp.eq.s32.totalorder %s21, 0
    %p197 = por %p195, %p196
    %s198 = ssub.s32 %s22, %s34
    %s199 = ssub.s32 %s23, %s30
    %s200 = sor.u32 %s198, %s199
    %p201 = scmp.eq.s32.totalorder %s200, 0
    %s203 = sadd.s32 %s202, 1
    %s204 = scalar_select %p201, %s202, %s203
    %p207 = pneg %p201
    %p208 = scmp.eq.s32.totalorder %s15, 7
    %p209 = por %p207, %p208
    %p210 = scmp.ne.s32.totalorder %s202, %s205
    %p211 = scmp.eq.s32.totalorder %s15, 0
    %p212 = por %p210, %p211
    %p213 = scmp.ne.s32.totalorder %s202, %s205
    %p214 = scmp.eq.s32.totalorder %s20, 7
    %p215 = por %p213, %p214
    %p216 = scmp.ne.s32.totalorder %s205, %s206
    %p217 = scmp.eq.s32.totalorder %s20, 0
    %p218 = por %p216, %p217
    %p219 = scmp.ne.s32.totalorder %s205, %s206
    %p220 = scmp.eq.s32.totalorder %s21, 7
    %p221 = por %p219, %p220
    %p223 = scmp.ne.s32.totalorder %s206, %s222
    %p224 = scmp.eq.s32.totalorder %s21, 0
    %p225 = por %p223, %p224
    %s226 = ssub.s32 %s22, %s34
    %p227 = scmp.eq.s32.totalorder %s226, 0
    %s229 = sadd.s32 %s228, 1
    %s230 = scalar_select %p227, %s228, %s229
    %p233 = pneg %p227
    %p234 = scmp.eq.s32.totalorder %s15, 7
    %p235 = por %p233, %p234
    %p236 = scmp.ne.s32.totalorder %s228, %s231
    %p237 = scmp.eq.s32.totalorder %s15, 0
    %p238 = por %p236, %p237
    %p239 = scmp.ne.s32.totalorder %s228, %s231
    %p240 = scmp.eq.s32.totalorder %s20, 7
    %p241 = por %p239, %p240
    %p242 = scmp.ne.s32.totalorder %s231, %s232
    %p243 = scmp.eq.s32.totalorder %s20, 0
    %p244 = por %p242, %p243
    %p245 = scmp.ne.s32.totalorder %s231, %s232
    %p246 = scmp.eq.s32.totalorder %s21, 7
    %p247 = por %p245, %p246
    %p249 = scmp.ne.s32.totalorder %s232, %s248
    %p250 = scmp.eq.s32.totalorder %s21, 0
    %p251 = por %p249, %p250
    %s252 = ssub.s32 %s22, %s34
    %p253 = scmp.eq.s32.totalorder %s252, 0
    %s255 = sadd.s32 %s254, 1
    %s256 = scalar_select %p253, %s254, %s255
    %p259 = pneg %p253
    %p260 = scmp.eq.s32.totalorder %s15, 7
    %p261 = por %p259, %p260
    %p262 = scmp.ne.s32.totalorder %s254, %s257
    %p263 = scmp.eq.s32.totalorder %s15, 0
    %p264 = por %p262, %p263
    %p265 = scmp.ne.s32.totalorder %s254, %s257
    %p266 = scmp.eq.s32.totalorder %s20, 7
    %p267 = por %p265, %p266
    %p268 = scmp.ne.s32.totalorder %s257, %s258
    %p269 = scmp.eq.s32.totalorder %s20, 0
    %p270 = por %p268, %p269
    %p271 = scmp.ne.s32.totalorder %s257, %s258
    %p272 = scmp.eq.s32.totalorder %s21, 7
    %p273 = por %p271, %p272
    %p275 = scmp.ne.s32.totalorder %s258, %s274
    %p276 = scmp.eq.s32.totalorder %s21, 0
    %p277 = por %p275, %p276
    %p278 = scmp.le.s32.totalorder 1, %s15
    %p279 = scmp.lt.s32.totalorder %s15, 9
    %p280 = pnand %p278, %p279
    %p281 = pneg %p280
    // Predicated region
    $region9: #{double_conv.3} parent=5 // pred_check
      _
    $region10: #{double_conv.3} parent=5 // pred_check_branch
      %283 = sbr.rel (%p280) target = $region12
    $region11: #{double_conv.3} parent=5 // pred_region
      %s284 = ssub.s32 %s15, 1
      // Predicated region
      $region13: #{double_conv.3} parent=11 // pred_check
        %p285 = pneg %p148
      $region14: #{double_conv.3} parent=11 // pred_check_branch
        %287 = sbr.rel (%p285) target = $region16
      $region15: #{double_conv.3} parent=11 // pred_region
        _
      $region16: #{double_conv.3} parent=11 // pred_fallthru
        _
      // Predicated region
      $region17: #{double_conv.3} parent=11 // pred_check
        %p288 = pneg %p169
      $region18: #{double_conv.3} parent=11 // pred_check_branch
        %290 = sbr.rel (%p288) target = $region20
      $region19: #{double_conv.3} parent=11 // pred_region
        _
      $region20: #{double_conv.3} parent=11 // pred_fallthru
        _
      // Predicated region
      $region21: #{double_conv.3} parent=11 // pred_check
        %p291 = pneg %p190
      $region22: #{double_conv.3} parent=11 // pred_check_branch
        %293 = sbr.rel (%p291) target = $region24
      $region23: #{double_conv.3} parent=11 // pred_region
        _
      $region24: #{double_conv.3} parent=11 // pred_fallthru
        _
    $region12: #{double_conv.3} parent=5 // pred_fallthru
      _
    %p294 = scmp.lt.s32.totalorder %s15, 8
    // Predicated region
    $region25: #{double_conv.3} parent=5 // pred_check
      %p295 = pneg %p294
    $region26: #{double_conv.3} parent=5 // pred_check_branch
      %297 = sbr.rel (%p295) target = $region28
    $region27: #{double_conv.3} parent=5 // pred_region
      // Predicated region
      $region29: #{double_conv.3} parent=27 // pred_check
        %p298 = pneg %p49
      $region30: #{double_conv.3} parent=27 // pred_check_branch
        %300 = sbr.rel (%p298) target = $region32
      $region31: #{double_conv.3} parent=27 // pred_region
        %s301 = smul.u32 8, %s23
        %p302 = scmp.lt.s32.totalorder %s22, 1
        %s303 = scalar_select %p302, %s22, 1
        %p304 = scmp.lt.s32.totalorder %s301, 31
        %s305 = scalar_select %p304, %s301, 31
        %s306 = smul.addr %s303, 32
        %s307 = sadd.s32 %s305, %s306
        %s308 = smul.addr %s307, 8
        %s309 = scalar_lea.vmem %s0, %s308
        %s310 = smul.u32 8, %s23
      $region32: #{double_conv.3} parent=27 // pred_fallthru
        _
      // Predicated region
      $region33: #{double_conv.3} parent=27 // pred_check
        %p311 = pneg %p85
      $region34: #{double_conv.3} parent=27 // pred_check_branch
        %313 = sbr.rel (%p311) target = $region36
      $region35: #{double_conv.3} parent=27 // pred_region
        %s314 = smul.u32 %s23, 4
        %s315 = ssub.s32 %s314, 1
        %p316 = scmp.gt.s32.totalorder %s315, 0
        %s317 = scalar_select %p316, %s315, 0
        %s318 = smul.u32 2, %s317
        %p319 = scmp.lt.s32.totalorder %s22, 1
        %s320 = scalar_select %p319, %s22, 1
        %p321 = scmp.lt.s32.totalorder %s318, 31
        %s322 = scalar_select %p321, %s318, 31
        %s323 = smul.addr %s320, 32
        %s324 = sadd.s32 %s322, %s323
        %s325 = smul.addr %s324, 8
        %s326 = scalar_lea.vmem %s1, %s325
        %s327 = smul.u32 %s23, 4
        %s328 = ssub.s32 %s327, 1
        %p329 = scmp.gt.s32.totalorder %s328, 0
        %s330 = scalar_select %p329, %s328, 0
        %s331 = smul.u32 2, %s330
      $region36: #{double_conv.3} parent=27 // pred_fallthru
        _
      // Predicated region
      $region37: #{double_conv.3} parent=27 // pred_check
        %p332 = pneg %p121
      $region38: #{double_conv.3} parent=27 // pred_check_branch
        %334 = sbr.rel (%p332) target = $region40
      $region39: #{double_conv.3} parent=27 // pred_region
        %s335 = smul.u32 %s23, 4
        %s336 = sadd.s32 %s335, 4
        %p337 = scmp.lt.s32.totalorder %s336, 15
        %s338 = scalar_select %p337, %s336, 15
        %s339 = smul.u32 2, %s338
        %p340 = scmp.lt.s32.totalorder %s22, 1
        %s341 = scalar_select %p340, %s22, 1
        %p342 = scmp.lt.s32.totalorder %s339, 31
        %s343 = scalar_select %p342, %s339, 31
        %s344 = smul.addr %s341, 32
        %s345 = sadd.s32 %s343, %s344
        %s346 = smul.addr %s345, 8
        %s347 = scalar_lea.vmem %s2, %s346
        %s348 = smul.u32 %s23, 4
        %s349 = sadd.s32 %s348, 4
        %p350 = scmp.lt.s32.totalorder %s349, 15
        %s351 = scalar_select %p350, %s349, 15
        %s352 = smul.u32 2, %s351
      $region40: #{double_conv.3} parent=27 // pred_fallthru
        _
    $region28: #{double_conv.3} parent=5 // pred_fallthru
      _
    %p353 = scmp.le.s32.totalorder 1, %s15
    %p354 = scmp.lt.s32.totalorder %s15, 9
    %p355 = pnand %p353, %p354
    %p356 = pneg %p355
    // Predicated region
    $region41: #{double_conv.3} parent=5 // pred_check
      _
    $region42: #{double_conv.3} parent=5 // pred_check_branch
      %358 = sbr.rel (%p355) target = $region44
    $region43: #{double_conv.3} parent=5 // pred_region
      %s359 = ssub.s32 %s15, 1
      %s360 = smul.u32 8, %s25
      %p361 = scmp.lt.s32.totalorder %s24, 1
      %s362 = scalar_select %p361, %s24, 1
      %p363 = scmp.lt.s32.totalorder %s360, 31
      %s364 = scalar_select %p363, %s360, 31
      %s365 = smul.addr %s362, 32
      %s366 = sadd.s32 %s364, %s365
      %s367 = smul.addr %s366, 8
      %s368 = scalar_lea.vmem %s0, %s367
      %p369 = pneg %p55
      %p370 = pneg %p52
      %s371 = smul.u32 %s25, 4
      %s372 = ssub.s32 %s371, 1
      %p373 = scmp.gt.s32.totalorder %s372, 0
      %s374 = scalar_select %p373, %s372, 0
      %s375 = smul.u32 2, %s374
      %p376 = scmp.lt.s32.totalorder %s24, 1
      %s377 = scalar_select %p376, %s24, 1
      %p378 = scmp.lt.s32.totalorder %s375, 31
      %s379 = scalar_select %p378, %s375, 31
      %s380 = smul.addr %s377, 32
      %s381 = sadd.s32 %s379, %s380
      %s382 = smul.addr %s381, 8
      %s383 = scalar_lea.vmem %s1, %s382
      %p384 = pneg %p91
      %p385 = pneg %p88
      %s386 = smul.u32 %s25, 4
      %s387 = sadd.s32 %s386, 4
      %p388 = scmp.lt.s32.totalorder %s387, 15
      %s389 = scalar_select %p388, %s387, 15
      %s390 = smul.u32 2, %s389
      %p391 = scmp.lt.s32.totalorder %s24, 1
      %s392 = scalar_select %p391, %s24, 1
      %p393 = scmp.lt.s32.totalorder %s390, 31
      %s394 = scalar_select %p393, %s390, 31
      %s395 = smul.addr %s392, 32
      %s396 = sadd.s32 %s394, %s395
      %s397 = smul.addr %s396, 8
      %s398 = scalar_lea.vmem %s2, %s397
      %p399 = pneg %p127
      %p400 = pneg %p124
      %p401 = pneg %p148
      %p402 = pneg %p145
      %p403 = pneg %p169
      %p404 = pneg %p166
      %p405 = pneg %p190
      %p406 = pneg %p187
      %p407 = pneg %p218
      %p408 = pneg %p215
      %s409 = smul.u32 8, %s25
      %p410 = scmp.lt.s32.totalorder %s24, 1
      %s411 = scalar_select %p410, %s24, 1
      %p412 = scmp.lt.s32.totalorder %s409, 31
      %s413 = scalar_select %p412, %s409, 31
      %s414 = smul.addr %s411, 32
      %s415 = sadd.s32 %s413, %s414
      %s416 = smul.addr %s415, 4
      %s417 = scalar_lea.vmem %s6, %s416
      %p418 = pneg %p244
      %p419 = pneg %p241
      %p420 = scmp.lt.s32.totalorder %s24, 1
      %s421 = scalar_select %p420, %s24, 1
      %s422 = scalar_lea.vmem %s7, %s421
      %p423 = pneg %p270
      %p424 = pneg %p267
      %p425 = scmp.lt.s32.totalorder %s24, 1
      %s426 = scalar_select %p425, %s24, 1
      %s427 = scalar_lea.vmem %s8, %s426
      %s428 = smul.u32 8, %s25
      %p429 = scmp.lt.s32.totalorder %s24, 1
      %s430 = scalar_select %p429, %s24, 1
      %p431 = scmp.lt.s32.totalorder %s428, 31
      %s432 = scalar_select %p431, %s428, 31
      %s433 = smul.addr %s430, 32
      %s434 = sadd.s32 %s432, %s433
      %s435 = smul.addr %s434, 8
      %s436 = scalar_lea.vmem %s0, %s435
      %s437 = smul.u32 8, %s25
      %s438 = smul.u32 %s25, 4
      %s439 = ssub.s32 %s438, 1
      %p440 = scmp.gt.s32.totalorder %s439, 0
      %s441 = scalar_select %p440, %s439, 0
      %s442 = smul.u32 2, %s441
      %p443 = scmp.lt.s32.totalorder %s24, 1
      %s444 = scalar_select %p443, %s24, 1
      %p445 = scmp.lt.s32.totalorder %s442, 31
      %s446 = scalar_select %p445, %s442, 31
      %s447 = smul.addr %s444, 32
      %s448 = sadd.s32 %s446, %s447
      %s449 = smul.addr %s448, 8
      %s450 = scalar_lea.vmem %s1, %s449
      %s451 = smul.u32 %s25, 4
      %s452 = ssub.s32 %s451, 1
      %p453 = scmp.gt.s32.totalorder %s452, 0
      %s454 = scalar_select %p453, %s452, 0
      %s455 = smul.u32 2, %s454
      %s456 = smul.u32 %s25, 4
      %s457 = sadd.s32 %s456, 4
      %p458 = scmp.lt.s32.totalorder %s457, 15
      %s459 = scalar_select %p458, %s457, 15
      %s460 = smul.u32 2, %s459
      %p461 = scmp.lt.s32.totalorder %s24, 1
      %s462 = scalar_select %p461, %s24, 1
      %p463 = scmp.lt.s32.totalorder %s460, 31
      %s464 = scalar_select %p463, %s460, 31
      %s465 = smul.addr %s462, 32
      %s466 = sadd.s32 %s464, %s465
      %s467 = smul.addr %s466, 8
      %s468 = scalar_lea.vmem %s2, %s467
      %s469 = smul.u32 %s25, 4
      %s470 = sadd.s32 %s469, 4
      %p471 = scmp.lt.s32.totalorder %s470, 15
      %s472 = scalar_select %p471, %s470, 15
      %s473 = smul.u32 2, %s472
      %s474 = smul.u32 8, %s25
      %p475 = scmp.lt.s32.totalorder %s24, 1
      %s476 = scalar_select %p475, %s24, 1
      %p477 = scmp.lt.s32.totalorder %s474, 31
      %s478 = scalar_select %p477, %s474, 31
      %s479 = smul.addr %s476, 32
      %s480 = sadd.s32 %s478, %s479
      %s481 = smul.addr %s480, 4
      %s482 = scalar_lea.vmem %s6, %s481
      %s483 = smul.u32 8, %s25
      %p484 = scmp.lt.s32.totalorder %s24, 1
      %s485 = scalar_select %p484, %s24, 1
      %s486 = scalar_lea.vmem %s7, %s485
      %p487 = scmp.lt.s32.totalorder %s24, 1
      %s488 = scalar_select %p487, %s24, 1
      %s489 = scalar_lea.vmem %s8, %s488
      %491 = vst [vmem:[#allocation2] sm:$0xff] 0.0
      %492 = vst [vmem:[#allocation2 + $0x68] sm:$0xff] 0.0
      %p493 = scmp.eq.s32.totalorder %s25, 0
      %s494 = scalar_select %p493, 0.0, 1.0
      %p495 = scmp.eq.s32.totalorder %s25, 3
      %s496 = scalar_select %p495, 0.0, 1.0
      %v497 = vld [vmem:[%s436] sm:$0xff]
      %v498 = vld [vmem:[%s436 + $0x8] sm:$0xff]
      %v499 = vld [vmem:[%s436 + $0x10] sm:$0xff]
      %v500 = vld [vmem:[%s436 + $0x18] sm:$0xff]
      %v501 = vld [vmem:[%s436 + $0x20] sm:$0xff]
      %v502 = vld [vmem:[%s436 + $0x28] sm:$0xff]
      %v503 = vld [vmem:[%s436 + $0x30] sm:$0xff]
      %v504 = vld [vmem:[%s436 + $0x38] sm:$0xff]
      %505 = vst [vmem:[#allocation2 + $0x18] sm:$0xff] %v497
      %506 = vst [vmem:[#allocation2 + $0x20] sm:$0xff] %v498
      %507 = vst [vmem:[#allocation2 + $0x28] sm:$0xff] %v499
      %508 = vst [vmem:[#allocation2 + $0x30] sm:$0xff] %v500
      %509 = vst [vmem:[#allocation2 + $0x38] sm:$0xff] %v501
      %510 = vst [vmem:[#allocation2 + $0x40] sm:$0xff] %v502
      %511 = vst [vmem:[#allocation2 + $0x48] sm:$0xff] %v503
      %512 = vst [vmem:[#allocation2 + $0x50] sm:$0xff] %v504
      %v513 = vld [vmem:[%s450] sm:$0xff]
      %v514 = vld [vmem:[%s450 + $0x8] sm:$0xff]
      %v515 = vstv %s494
      %v516 = vmul.f32 %v513, %v515
      %v517 = vmul.f32 %v514, %v515
      %518 = vst [vmem:[#allocation2 + $0x8] sm:$0xff] %v516
      %519 = vst [vmem:[#allocation2 + $0x10] sm:$0xff] %v517
      %v520 = vld [vmem:[%s468] sm:$0xff]
      %v521 = vld [vmem:[%s468 + $0x8] sm:$0xff]
      %v522 = vstv %s496
      %v523 = vmul.f32 %v520, %v522
      %v524 = vmul.f32 %v521, %v522
      %525 = vst [vmem:[#allocation2 + $0x58] sm:$0xff] %v523
      %526 = vst [vmem:[#allocation2 + $0x60] sm:$0xff] %v524
      %v527 = vlaneseq
      %v528 = vshrl.u32 %v527, 7
      %v529 = vadd.s32 %v528, 8
      %v530 = vadd.s32 %v528, 16
      %v531 = vadd.s32 %v528, 24
      %v532 = vadd.s32 %v528, 32
      %v533 = vadd.s32 %v528, 40
      %v534 = vadd.s32 %v528, 48
      %v535 = vadd.s32 %v528, 56
      %vm536 = vcmp.lt.s32.totalorder %v528, 0
      %v537 = vsub.s32 0, %v528
      %v538 = vsel %vm536, %v537, %v528
      %v539 = vshrl.u32 %v538, 4
      %v540 = vand.u32 %v538, 15
      %v541 = vsub.s32 0, %v540
      %v542 = vsel %vm536, %v541, %v540
      %vm543 = vcmp.lt.s32.totalorder %v529, 0
      %v544 = vsub.s32 0, %v529
      %v545 = vsel %vm543, %v544, %v529
      %v546 = vshrl.u32 %v545, 4
      %v547 = vand.u32 %v545, 15
      %v548 = vsub.s32 0, %v547
      %v549 = vsel %vm543, %v548, %v547
      %vm550 = vcmp.lt.s32.totalorder %v530, 0
      %v551 = vsub.s32 0, %v530
      %v552 = vsel %vm550, %v551, %v530
      %v553 = vshrl.u32 %v552, 4
      %v554 = vand.u32 %v552, 15
      %v555 = vsub.s32 0, %v554
      %v556 = vsel %vm550, %v555, %v554
      %vm557 = vcmp.lt.s32.totalorder %v531, 0
      %v558 = vsub.s32 0, %v531
      %v559 = vsel %vm557, %v558, %v531
      %v560 = vshrl.u32 %v559, 4
      %v561 = vand.u32 %v559, 15
      %v562 = vsub.s32 0, %v561
      %v563 = vsel %vm557, %v562, %v561
      %vm564 = vcmp.lt.s32.totalorder %v532, 0
      %v565 = vsub.s32 0, %v532
      %v566 = vsel %vm564, %v565, %v532
      %v567 = vshrl.u32 %v566, 4
      %v568 = vand.u32 %v566, 15
      %v569 = vsub.s32 0, %v568
      %v570 = vsel %vm564, %v569, %v568
      %vm571 = vcmp.lt.s32.totalorder %v533, 0
      %v572 = vsub.s32 0, %v533
      %v573 = vsel %vm571, %v572, %v533
      %v574 = vshrl.u32 %v573, 4
      %v575 = vand.u32 %v573, 15
      %v576 = vsub.s32 0, %v575
      %v577 = vsel %vm571, %v576, %v575
      %vm578 = vcmp.lt.s32.totalorder %v534, 0
      %v579 = vsub.s32 0, %v534
      %v580 = vsel %vm578, %v579, %v534
      %v581 = vshrl.u32 %v580, 4
      %v582 = vand.u32 %v580, 15
      %v583 = vsub.s32 0, %v582
      %v584 = vsel %vm578, %v583, %v582
      %vm585 = vcmp.lt.s32.totalorder %v535, 0
      %v586 = vsub.s32 0, %v535
      %v587 = vsel %vm585, %v586, %v535
      %v588 = vshrl.u32 %v587, 4
      %v589 = vand.u32 %v587, 15
      %v590 = vsub.s32 0, %v589
      %v591 = vsel %vm585, %v590, %v589
      %vm592 = vcmp.ne.s32.totalorder %v542, 0
      %vm593 = vcmp.ne.s32.totalorder %v549, 0
      %vm594 = vcmp.ne.s32.totalorder %v556, 0
      %vm595 = vcmp.ne.s32.totalorder %v563, 0
      %vm596 = vcmp.ne.s32.totalorder %v570, 0
      %vm597 = vcmp.ne.s32.totalorder %v577, 0
      %vm598 = vcmp.ne.s32.totalorder %v584, 0
      %vm599 = vcmp.ne.s32.totalorder %v591, 0
      %vm600 = vcmp.lt.s32.totalorder %v542, 0
      %vm601 = vcmp.lt.s32.totalorder %v549, 0
      %vm602 = vcmp.lt.s32.totalorder %v556, 0
      %vm603 = vcmp.lt.s32.totalorder %v563, 0
      %vm604 = vcmp.lt.s32.totalorder %v570, 0
      %vm605 = vcmp.lt.s32.totalorder %v577, 0
      %vm606 = vcmp.lt.s32.totalorder %v584, 0
      %vm607 = vcmp.lt.s32.totalorder %v591, 0
      %vm608 = vmand %vm600, %vm592
      %vm609 = vmand %vm601, %vm593
      %vm610 = vmand %vm602, %vm594
      %vm611 = vmand %vm603, %vm595
      %vm612 = vmand %vm604, %vm596
      %vm613 = vmand %vm605, %vm597
      %vm614 = vmand %vm606, %vm598
      %vm615 = vmand %vm607, %vm599
      %v616 = vadd.s32 %v542, 16
      %v617 = vadd.s32 %v549, 16
      %v618 = vadd.s32 %v556, 16
      %v619 = vadd.s32 %v563, 16
      %v620 = vadd.s32 %v570, 16
      %v621 = vadd.s32 %v577, 16
      %v622 = vadd.s32 %v584, 16
      %v623 = vadd.s32 %v591, 16
      %v624 = vsel %vm608, %v616, %v542
      %v625 = vsel %vm609, %v617, %v549
      %v626 = vsel %vm610, %v618, %v556
      %v627 = vsel %vm611, %v619, %v563
      %v628 = vsel %vm612, %v620, %v570
      %v629 = vsel %vm613, %v621, %v577
      %v630 = vsel %vm614, %v622, %v584
      %v631 = vsel %vm615, %v623, %v591
      %vm632 = vcmp.ne.s32.totalorder %v624, 0
      %vm633 = vcmp.ne.s32.totalorder %v625, 0
      %vm634 = vcmp.ne.s32.totalorder %v626, 0
      %vm635 = vcmp.ne.s32.totalorder %v627, 0
      %vm636 = vcmp.ne.s32.totalorder %v628, 0
      %vm637 = vcmp.ne.s32.totalorder %v629, 0
      %vm638 = vcmp.ne.s32.totalorder %v630, 0
      %vm639 = vcmp.ne.s32.totalorder %v631, 0
      %v640 = vsel %vm632, 1, 0
      %v641 = vsel %vm633, 1, 0
      %v642 = vsel %vm634, 1, 0
      %v643 = vsel %vm635, 1, 0
      %v644 = vsel %vm636, 1, 0
      %v645 = vsel %vm637, 1, 0
      %v646 = vsel %vm638, 1, 0
      %v647 = vsel %vm639, 1, 0
      %v648 = vcvt.s32.f32 %v640
      %v649 = vcvt.s32.f32 %v641
      %v650 = vcvt.s32.f32 %v642
      %v651 = vcvt.s32.f32 %v643
      %v652 = vcvt.s32.f32 %v644
      %v653 = vcvt.s32.f32 %v645
      %v654 = vcvt.s32.f32 %v646
      %v655 = vcvt.s32.f32 %v647
      %vm656 = vcmp.ne.s32.totalorder %v624, 15
      %vm657 = vcmp.ne.s32.totalorder %v625, 15
      %vm658 = vcmp.ne.s32.totalorder %v626, 15
      %vm659 = vcmp.ne.s32.totalorder %v627, 15
      %vm660 = vcmp.ne.s32.totalorder %v628, 15
      %vm661 = vcmp.ne.s32.totalorder %v629, 15
      %vm662 = vcmp.ne.s32.totalorder %v630, 15
      %vm663 = vcmp.ne.s32.totalorder %v631, 15
      %v664 = vsel %vm656, 1, 0
      %v665 = vsel %vm657, 1, 0
      %v666 = vsel %vm658, 1, 0
      %v667 = vsel %vm659, 1, 0
      %v668 = vsel %vm660, 1, 0
      %v669 = vsel %vm661, 1, 0
      %v670 = vsel %vm662, 1, 0
      %v671 = vsel %vm663, 1, 0
      %v672 = vcvt.s32.f32 %v664
      %v673 = vcvt.s32.f32 %v665
      %v674 = vcvt.s32.f32 %v666
      %v675 = vcvt.s32.f32 %v667
      %v676 = vcvt.s32.f32 %v668
      %v677 = vcvt.s32.f32 %v669
      %v678 = vcvt.s32.f32 %v670
      %v679 = vcvt.s32.f32 %v671
      %v680 = vld [vmem:[#allocation2 + $0x7] sm:$0xff]
      %v681 = vld [vmem:[#allocation2 + $0xf] sm:$0xff]
      %v682 = vld [vmem:[#allocation2 + $0x17] sm:$0xff]
      %v683 = vld [vmem:[#allocation2 + $0x1f] sm:$0xff]
      %v684 = vld [vmem:[#allocation2 + $0x27] sm:$0xff]
      %v685 = vld [vmem:[#allocation2 + $0x2f] sm:$0xff]
      %v686 = vld [vmem:[#allocation2 + $0x37] sm:$0xff]
      %v687 = vld [vmem:[#allocation2 + $0x3f] sm:$0xff]
      %v688 = vmul.f32 %v680, %v648
      %v689 = vmul.f32 %v681, %v649
      %v690 = vmul.f32 %v682, %v650
      %v691 = vmul.f32 %v683, %v651
      %v692 = vmul.f32 %v684, %v652
      %v693 = vmul.f32 %v685, %v653
      %v694 = vmul.f32 %v686, %v654
      %v695 = vmul.f32 %v687, %v655
      %v696 = vpack.c.bf16 %v689, %v688
      %v697 = vpack.c.bf16 %v691, %v690
      %v698 = vpack.c.bf16 %v693, %v692
      %v699 = vpack.c.bf16 %v695, %v694
      %v700 = vld [vmem:[%s5] sm:$0xf]
      %v701 = vld [vmem:[%s5 + $0x4] sm:$0xf]
      %v702 = vld [vmem:[%s5 + $0x8] sm:$0xf]
      %v703 = vld [vmem:[%s5 + $0xc] sm:$0xf]
      %v704 = vld [vmem:[%s5 + $0x10] sm:$0xf]
      %v705 = vld [vmem:[%s5 + $0x14] sm:$0xf]
      %v706 = vld [vmem:[%s5 + $0x18] sm:$0xf]
      %v707 = vld [vmem:[%s5 + $0x1c] sm:$0xf]
      %v708 = vld [vmem:[%s5 + $0x20] sm:$0xf]
      %v709 = vld [vmem:[%s5 + $0x24] sm:$0xf]
      %v710 = vld [vmem:[%s5 + $0x28] sm:$0xf]
      %v711 = vld [vmem:[%s5 + $0x2c] sm:$0xf]
      %v712 = vld [vmem:[%s5 + $0x30] sm:$0xf]
      %v713 = vld [vmem:[%s5 + $0x34] sm:$0xf]
      %v714 = vld [vmem:[%s5 + $0x38] sm:$0xf]
      %v715 = vld [vmem:[%s5 + $0x3c] sm:$0xf]
      %v716 = vld [vmem:[#allocation2 + $0x8] sm:$0xff]
      %v717 = vld [vmem:[#allocation2 + $0x10] sm:$0xff]
      %v718 = vld [vmem:[#allocation2 + $0x18] sm:$0xff]
      %v719 = vld [vmem:[#allocation2 + $0x20] sm:$0xff]
      %v720 = vld [vmem:[#allocation2 + $0x28] sm:$0xff]
      %v721 = vld [vmem:[#allocation2 + $0x30] sm:$0xff]
      %v722 = vld [vmem:[#allocation2 + $0x38] sm:$0xff]
      %v723 = vld [vmem:[#allocation2 + $0x40] sm:$0xff]
      %v724 = vpack.c.bf16 %v717, %v716
      %v725 = vpack.c.bf16 %v719, %v718
      %v726 = vpack.c.bf16 %v721, %v720
      %v727 = vpack.c.bf16 %v723, %v722
      %s728 = scalar_lea.vmem %s5, 64
      %v729 = vld [vmem:[%s728] sm:$0xf]
      %v730 = vld [vmem:[%s728 + $0x4] sm:$0xf]
      %v731 = vld [vmem:[%s728 + $0x8] sm:$0xf]
      %v732 = vld [vmem:[%s728 + $0xc] sm:$0xf]
      %v733 = vld [vmem:[%s728 + $0x10] sm:$0xf]
      %v734 = vld [vmem:[%s728 + $0x14] sm:$0xf]
      %v735 = vld [vmem:[%s728 + $0x18] sm:$0xf]
      %v736 = vld [vmem:[%s728 + $0x1c] sm:$0xf]
      %v737 = vld [vmem:[%s728 + $0x20] sm:$0xf]
      %v738 = vld [vmem:[%s728 + $0x24] sm:$0xf]
      %v739 = vld [vmem:[%s728 + $0x28] sm:$0xf]
      %v740 = vld [vmem:[%s728 + $0x2c] sm:$0xf]
      %v741 = vld [vmem:[%s728 + $0x30] sm:$0xf]
      %v742 = vld [vmem:[%s728 + $0x34] sm:$0xf]
      %v743 = vld [vmem:[%s728 + $0x38] sm:$0xf]
      %v744 = vld [vmem:[%s728 + $0x3c] sm:$0xf]
      %v761 = vunpack.c.l.b16 %v729
      %v762 = vunpack.c.l.b16 %v730
      %v763 = vunpack.c.l.b16 %v731
      %v764 = vunpack.c.l.b16 %v732
      %v765 = vunpack.c.l.b16 %v733
      %v766 = vunpack.c.l.b16 %v734
      %v767 = vunpack.c.l.b16 %v735
      %v768 = vunpack.c.l.b16 %v736
      %v769 = vunpack.c.l.b16 %v737
      %v770 = vunpack.c.l.b16 %v738
      %v771 = vunpack.c.l.b16 %v739
      %v772 = vunpack.c.l.b16 %v740
      %v773 = vunpack.c.l.b16 %v741
      %v774 = vunpack.c.l.b16 %v742
      %v775 = vunpack.c.l.b16 %v743
      %v776 = vunpack.c.l.b16 %v744
      %v777 = vpack.c.b16 %v762, %v761
      %v778 = vpack.c.b16 %v764, %v763
      %v779 = vpack.c.b16 %v766, %v765
      %v780 = vpack.c.b16 %v768, %v767
      %v781 = vpack.c.b16 %v770, %v769
      %v782 = vpack.c.b16 %v772, %v771
      %v783 = vpack.c.b16 %v774, %v773
      %v784 = vpack.c.b16 %v776, %v775
      %793 = vmatprep.subr.bf16.mxu0 0
      %794 = vmatpush1.bf16.msra.mxu0 %v777
      %795 = vmatprep.subr.bf16.mxu0 0
      %796 = vmatpush1.bf16.msra.mxu0 %v778
      %797 = vmatprep.subr.bf16.mxu0 0
      %798 = vmatpush1.bf16.msra.mxu0 %v779
      %799 = vmatprep.subr.bf16.mxu0 0
      %800 = vmatpush1.bf16.msra.mxu0 %v780
      %801 = vmatprep.subr.bf16.mxu0 0
      %802 = vmatpush1.bf16.msra.mxu0 %v781
      %803 = vmatprep.subr.bf16.mxu0 0
      %804 = vmatpush1.bf16.msra.mxu0 %v782
      %805 = vmatprep.subr.bf16.mxu0 0
      %806 = vmatpush1.bf16.msra.mxu0 %v783
      %807 = vmatprep.subr.bf16.mxu0 0
      %808 = vmatpush1.bf16.msra.mxu0 %v784
      %809 = vmatprep.subr.bf16.mxu0 0
      %810 = vmatpush1.bf16.msra.mxu0 0
      %811 = vmatprep.subr.bf16.mxu0 0
      %812 = vmatpush1.bf16.msra.mxu0 0
      %813 = vmatprep.subr.bf16.mxu0 0
      %814 = vmatpush1.bf16.msra.mxu0 0
      %815 = vmatprep.subr.bf16.mxu0 0
      %816 = vmatpush1.bf16.msra.mxu0 0
      %817 = vmatprep.subr.bf16.mxu0 0
      %818 = vmatpush1.bf16.msra.mxu0 0
      %819 = vmatprep.subr.bf16.mxu0 0
      %820 = vmatpush1.bf16.msra.mxu0 0
      %821 = vmatprep.subr.bf16.mxu0 0
      %822 = vmatpush1.bf16.msra.mxu0 0
      %823 = vmatprep.subr.bf16.mxu0 0
      %824 = vmatpush1.bf16.msra.mxu0 0
      %825 = vmatprep.mubr.bf16.mxu0 0
      %826 = vmatmul.mubr.bf16.gmra.mrb[0].mxu0 %v724
      %v827 = vpop.f32.mrb[0].mxu0
      %v828 = vadd.f32 0.0, %v827
      %v829 = vpop.f32.mrb[0].mxu0
      %v830 = vpop.f32.mrb[0].mxu0
      %v831 = vadd.f32 0.0, %v830
      %v832 = vpop.f32.mrb[0].mxu0
      %833 = vmatprep.mubr.bf16.mxu0 0
      %834 = vmatmul.mubr.bf16.gmra.mrb[0].mxu0 %v725
      %v835 = vpop.f32.mrb[0].mxu0
      %v836 = vadd.f32 0.0, %v835
      %v837 = vpop.f32.mrb[0].mxu0
      %v838 = vpop.f32.mrb[0].mxu0
      %v839 = vadd.f32 0.0, %v838
      %v840 = vpop.f32.mrb[0].mxu0
      %841 = vmatprep.mubr.bf16.mxu0 0
      %842 = vmatmul.mubr.bf16.gmra.mrb[0].mxu0 %v726
      %v843 = vpop.f32.mrb[0].mxu0
      %v844 = vadd.f32 0.0, %v843
      %v845 = vpop.f32.mrb[0].mxu0
      %v846 = vpop.f32.mrb[0].mxu0
      %v847 = vadd.f32 0.0, %v846
      %v848 = vpop.f32.mrb[0].mxu0
      %849 = vmatprep.mubr.bf16.mxu0 0
      %850 = vmatmul.mubr.bf16.gmra.mrb[0].mxu0 %v727
      %v851 = vpop.f32.mrb[0].mxu0
      %v852 = vadd.f32 0.0, %v851
      %v853 = vpop.f32.mrb[0].mxu0
      %v854 = vpop.f32.mrb[0].mxu0
      %v855 = vadd.f32 0.0, %v854
      %v856 = vpop.f32.mrb[0].mxu0
      %857 = vdwg.mxu0
      %v874 = vunpack.c.l.b16 %v700
      %v875 = vunpack.c.l.b16 %v701
      %v876 = vunpack.c.l.b16 %v702
      %v877 = vunpack.c.l.b16 %v703
      %v878 = vunpack.c.l.b16 %v704
      %v879 = vunpack.c.l.b16 %v705
      %v880 = vunpack.c.l.b16 %v706
      %v881 = vunpack.c.l.b16 %v707
      %v882 = vunpack.c.l.b16 %v708
      %v883 = vunpack.c.l.b16 %v709
      %v884 = vunpack.c.l.b16 %v710
      %v885 = vunpack.c.l.b16 %v711
      %v886 = vunpack.c.l.b16 %v712
      %v887 = vunpack.c.l.b16 %v713
      %v888 = vunpack.c.l.b16 %v714
      %v889 = vunpack.c.l.b16 %v715
      %v890 = vpack.c.b16 %v875, %v874
      %v891 = vpack.c.b16 %v877, %v876
      %v892 = vpack.c.b16 %v879, %v878
      %v893 = vpack.c.b16 %v881, %v880
      %v894 = vpack.c.b16 %v883, %v882
      %v895 = vpack.c.b16 %v885, %v884
      %v896 = vpack.c.b16 %v887, %v886
      %v897 = vpack.c.b16 %v889, %v888
      %906 = vmatprep.subr.bf16.mxu0 0
      %907 = vmatpush1.bf16.msra.mxu0 %v890
      %908 = vmatprep.subr.bf16.mxu0 0
      %909 = vmatpush1.bf16.msra.mxu0 %v891
      %910 = vmatprep.subr.bf16.mxu0 0
      %911 = vmatpush1.bf16.msra.mxu0 %v892
      %912 = vmatprep.subr.bf16.mxu0 0
      %913 = vmatpush1.bf16.msra.mxu0 %v893
      %914 = vmatprep.subr.bf16.mxu0 0
      %915 = vmatpush1.bf16.msra.mxu0 %v894
      %916 = vmatprep.subr.bf16.mxu0 0
      %917 = vmatpush1.bf16.msra.mxu0 %v895
      %918 = vmatprep.subr.bf16.mxu0 0
      %919 = vmatpush1.bf16.msra.mxu0 %v896
      %920 = vmatprep.subr.bf16.mxu0 0
      %921 = vmatpush1.bf16.msra.mxu0 %v897
      %922 = vmatprep.subr.bf16.mxu0 0
      %923 = vmatpush1.bf16.msra.mxu0 0
      %924 = vmatprep.subr.bf16.mxu0 0
      %925 = vmatpush1.bf16.msra.mxu0 0
      %926 = vmatprep.subr.bf16.mxu0 0
      %927 = vmatpush1.bf16.msra.mxu0 0
      %928 = vmatprep.subr.bf16.mxu0 0
      %929 = vmatpush1.bf16.msra.mxu0 0
      %930 = vmatprep.subr.bf16.mxu0 0
      %931 = vmatpush1.bf16.msra.mxu0 0
      %932 = vmatprep.subr.bf16.mxu0 0
      %933 = vmatpush1.bf16.msra.mxu0 0
      %934 = vmatprep.subr.bf16.mxu0 0
      %935 = vmatpush1.bf16.msra.mxu0 0
      %936 = vmatprep.subr.bf16.mxu0 0
      %937 = vmatpush1.bf16.msra.mxu0 0
      %938 = vmatprep.mubr.bf16.mxu0 0
      %939 = vmatmul.mubr.bf16.gmra.mrb[0].mxu0 %v696
      %v940 = vpop.f32.mrb[0].mxu0
      %v941 = vadd.f32 %v828, %v940
      %v942 = vpop.f32.mrb[0].mxu0
      %v943 = vpop.f32.mrb[0].mxu0
      %v944 = vadd.f32 %v831, %v943
      %v945 = vpop.f32.mrb[0].mxu0
      %946 = vmatprep.mubr.bf16.mxu0 0
      %947 = vmatmul.mubr.bf16.gmra.mrb[0].mxu0 %v697
      %v948 = vpop.f32.mrb[0].mxu0
      %v949 = vadd.f32 %v836, %v948
      %v950 = vpop.f32.mrb[0].mxu0
      %v951 = vpop.f32.mrb[0].mxu0
      %v952 = vadd.f32 %v839, %v951
      %v953 = vpop.f32.mrb[0].mxu0
      %954 = vmatprep.mubr.bf16.mxu0 0
      %955 = vmatmul.mubr.bf16.gmra.mrb[0].mxu0 %v698
      %v956 = vpop.f32.mrb[0].mxu0
      %v957 = vadd.f32 %v844, %v956
      %v958 = vpop.f32.mrb[0].mxu0
      %v959 = vpop.f32.mrb[0].mxu0
      %v960 = vadd.f32 %v847, %v959
      %v961 = vpop.f32.mrb[0].mxu0
      %962 = vmatprep.mubr.bf16.mxu0 0
      %963 = vmatmul.mubr.bf16.gmra.mrb[0].mxu0 %v699
      %v964 = vpop.f32.mrb[0].mxu0
      %v965 = vadd.f32 %v852, %v964
      %v966 = vpop.f32.mrb[0].mxu0
      %v967 = vpop.f32.mrb[0].mxu0
      %v968 = vadd.f32 %v855, %v967
      %v969 = vpop.f32.mrb[0].mxu0
      %970 = vdwg.mxu0
      %v971 = vld [vmem:[#allocation2 + $0x9] sm:$0xff]
      %v972 = vld [vmem:[#allocation2 + $0x11] sm:$0xff]
      %v973 = vld [vmem:[#allocation2 + $0x19] sm:$0xff]
      %v974 = vld [vmem:[#allocation2 + $0x21] sm:$0xff]
      %v975 = vld [vmem:[#allocation2 + $0x29] sm:$0xff]
      %v976 = vld [vmem:[#allocation2 + $0x31] sm:$0xff]
      %v977 = vld [vmem:[#allocation2 + $0x39] sm:$0xff]
      %v978 = vld [vmem:[#allocation2 + $0x41] sm:$0xff]
      %v979 = vmul.f32 %v971, %v672
      %v980 = vmul.f32 %v972, %v673
      %v981 = vmul.f32 %v973, %v674
      %v982 = vmul.f32 %v974, %v675
      %v983 = vmul.f32 %v975, %v676
      %v984 = vmul.f32 %v976, %v677
      %v985 = vmul.f32 %v977, %v678
      %v986 = vmul.f32 %v978, %v679
      %v987 = vpack.c.bf16 %v980, %v979
      %v988 = vpack.c.bf16 %v982, %v981
      %v989 = vpack.c.bf16 %v984, %v983
      %v990 = vpack.c.bf16 %v986, %v985
      %s991 = scalar_lea.vmem %s5, 128
      %v992 = vld [vmem:[%s991] sm:$0xf]
      %v993 = vld [vmem:[%s991 + $0x4] sm:$0xf]
      %v994 = vld [vmem:[%s991 + $0x8] sm:$0xf]
      %v995 = vld [vmem:[%s991 + $0xc] sm:$0xf]
      %v996 = vld [vmem:[%s991 + $0x10] sm:$0xf]
      %v997 = vld [vmem:[%s991 + $0x14] sm:$0xf]
      %v998 = vld [vmem:[%s991 + $0x18] sm:$0xf]
      %v999 = vld [vmem:[%s991 + $0x1c] sm:$0xf]
      %v1000 = vld [vmem:[%s991 + $0x20] sm:$0xf]
      %v1001 = vld [vmem:[%s991 + $0x24] sm:$0xf]
      %v1002 = vld [vmem:[%s991 + $0x28] sm:$0xf]
      %v1003 = vld [vmem:[%s991 + $0x2c] sm:$0xf]
      %v1004 = vld [vmem:[%s991 + $0x30] sm:$0xf]
      %v1005 = vld [vmem:[%s991 + $0x34] sm:$0xf]
      %v1006 = vld [vmem:[%s991 + $0x38] sm:$0xf]
      %v1007 = vld [vmem:[%s991 + $0x3c] sm:$0xf]
      %v1024 = vunpack.c.l.b16 %v992
      %v1025 = vunpack.c.l.b16 %v993
      %v1026 = vunpack.c.l.b16 %v994
      %v1027 = vunpack.c.l.b16 %v995
      %v1028 = vunpack.c.l.b16 %v996
      %v1029 = vunpack.c.l.b16 %v997
      %v1030 = vunpack.c.l.b16 %v998
      %v1031 = vunpack.c.l.b16 %v999
      %v1032 = vunpack.c.l.b16 %v1000
      %v1033 = vunpack.c.l.b16 %v1001
      %v1034 = vunpack.c.l.b16 %v1002
      %v1035 = vunpack.c.l.b16 %v1003
      %v1036 = vunpack.c.l.b16 %v1004
      %v1037 = vunpack.c.l.b16 %v1005
      %v1038 = vunpack.c.l.b16 %v1006
      %v1039 = vunpack.c.l.b16 %v1007
      %v1040 = vpack.c.b16 %v1025, %v1024
      %v1041 = vpack.c.b16 %v1027, %v1026
      %v1042 = vpack.c.b16 %v1029, %v1028
      %v1043 = vpack.c.b16 %v1031, %v1030
      %v1044 = vpack.c.b16 %v1033, %v1032
      %v1045 = vpack.c.b16 %v1035, %v1034
      %v1046 = vpack.c.b16 %v1037, %v1036
      %v1047 = vpack.c.b16 %v1039, %v1038
      %1056 = vmatprep.subr.bf16.mxu0 0
      %1057 = vmatpush1.bf16.msra.mxu0 %v1040
      %1058 = vmatprep.subr.bf16.mxu0 0
      %1059 = vmatpush1.bf16.msra.mxu0 %v1041
      %1060 = vmatprep.subr.bf16.mxu0 0
      %1061 = vmatpush1.bf16.msra.mxu0 %v1042
      %1062 = vmatprep.subr.bf16.mxu0 0
      %1063 = vmatpush1.bf16.msra.mxu0 %v1043
      %1064 = vmatprep.subr.bf16.mxu0 0
      %1065 = vmatpush1.bf16.msra.mxu0 %v1044
      %1066 = vmatprep.subr.bf16.mxu0 0
      %1067 = vmatpush1.bf16.msra.mxu0 %v1045
      %1068 = vmatprep.subr.bf16.mxu0 0
      %1069 = vmatpush1.bf16.msra.mxu0 %v1046
      %1070 = vmatprep.subr.bf16.mxu0 0
      %1071 = vmatpush1.bf16.msra.mxu0 %v1047
      %1072 = vmatprep.subr.bf16.mxu0 0
      %1073 = vmatpush1.bf16.msra.mxu0 0
      %1074 = vmatprep.subr.bf16.mxu0 0
      %1075 = vmatpush1.bf16.msra.mxu0 0
      %1076 = vmatprep.subr.bf16.mxu0 0
      %1077 = vmatpush1.bf16.msra.mxu0 0
      %1078 = vmatprep.subr.bf16.mxu0 0
      %1079 = vmatpush1.bf16.msra.mxu0 0
      %1080 = vmatprep.subr.bf16.mxu0 0
      %1081 = vmatpush1.bf16.msra.mxu0 0
      %1082 = vmatprep.subr.bf16.mxu0 0
      %1083 = vmatpush1.bf16.msra.mxu0 0
      %1084 = vmatprep.subr.bf16.mxu0 0
      %1085 = vmatpush1.bf16.msra.mxu0 0
      %1086 = vmatprep.subr.bf16.mxu0 0
      %1087 = vmatpush1.bf16.msra.mxu0 0
      %1088 = vmatprep.mubr.bf16.mxu0 0
      %1089 = vmatmul.mubr.bf16.gmra.mrb[0].mxu0 %v987
      %v1090 = vpop.f32.mrb[0].mxu0
      %v1091 = vadd.f32 0.0, %v1090
      %v1092 = vpop.f32.mrb[0].mxu0
      %v1093 = vpop.f32.mrb[0].mxu0
      %v1094 = vadd.f32 0.0, %v1093
      %v1095 = vpop.f32.mrb[0].mxu0
      %1096 = vmatprep.mubr.bf16.mxu0 0
      %1097 = vmatmul.mubr.bf16.gmra.mrb[0].mxu0 %v988
      %v1098 = vpop.f32.mrb[0].mxu0
      %v1099 = vadd.f32 0.0, %v1098
      %v1100 = vpop.f32.mrb[0].mxu0
      %v1101 = vpop.f32.mrb[0].mxu0
      %v1102 = vadd.f32 0.0, %v1101
      %v1103 = vpop.f32.mrb[0].mxu0
      %1104 = vmatprep.mubr.bf16.mxu0 0
      %1105 = vmatmul.mubr.bf16.gmra.mrb[0].mxu0 %v989
      %v1106 = vpop.f32.mrb[0].mxu0
      %v1107 = vadd.f32 0.0, %v1106
      %v1108 = vpop.f32.mrb[0].mxu0
      %v1109 = vpop.f32.mrb[0].mxu0
      %v1110 = vadd.f32 0.0, %v1109
      %v1111 = vpop.f32.mrb[0].mxu0
      %1112 = vmatprep.mubr.bf16.mxu0 0
      %1113 = vmatmul.mubr.bf16.gmra.mrb[0].mxu0 %v990
      %v1114 = vpop.f32.mrb[0].mxu0
      %v1115 = vadd.f32 0.0, %v1114
      %v1116 = vpop.f32.mrb[0].mxu0
      %v1117 = vpop.f32.mrb[0].mxu0
      %v1118 = vadd.f32 0.0, %v1117
      %v1119 = vpop.f32.mrb[0].mxu0
      %1120 = vdwg.mxu0
      %v1121 = vadd.f32 %v941, %v1091
      %v1122 = vadd.f32 %v944, %v1094
      %v1123 = vadd.f32 %v949, %v1099
      %v1124 = vadd.f32 %v952, %v1102
      %v1125 = vadd.f32 %v957, %v1107
      %v1126 = vadd.f32 %v960, %v1110
      %v1127 = vadd.f32 %v965, %v1115
      %v1128 = vadd.f32 %v968, %v1118
      %v1129 = vld [vmem:[#allocation2 + $0x17] sm:$0xff]
      %v1130 = vld [vmem:[#allocation2 + $0x1f] sm:$0xff]
      %v1131 = vld [vmem:[#allocation2 + $0x27] sm:$0xff]
      %v1132 = vld [vmem:[#allocation2 + $0x2f] sm:$0xff]
      %v1133 = vld [vmem:[#allocation2 + $0x37] sm:$0xff]
      %v1134 = vld [vmem:[#allocation2 + $0x3f] sm:$0xff]
      %v1135 = vld [vmem:[#allocation2 + $0x47] sm:$0xff]
      %v1136 = vld [vmem:[#allocation2 + $0x4f] sm:$0xff]
      %v1137 = vmul.f32 %v1129, %v648
      %v1138 = vmul.f32 %v1130, %v649
      %v1139 = vmul.f32 %v1131, %v650
      %v1140 = vmul.f32 %v1132, %v651
      %v1141 = vmul.f32 %v1133, %v652
      %v1142 = vmul.f32 %v1134, %v653
      %v1143 = vmul.f32 %v1135, %v654
      %v1144 = vmul.f32 %v1136, %v655
      %v1145 = vpack.c.bf16 %v1138, %v1137
      %v1146 = vpack.c.bf16 %v1140, %v1139
      %v1147 = vpack.c.bf16 %v1142, %v1141
      %v1148 = vpack.c.bf16 %v1144, %v1143
      %s1149 = scalar_lea.vmem %s5, 192
      %v1150 = vld [vmem:[%s1149] sm:$0xf]
      %v1151 = vld [vmem:[%s1149 + $0x4] sm:$0xf]
      %v1152 = vld [vmem:[%s1149 + $0x8] sm:$0xf]
      %v1153 = vld [vmem:[%s1149 + $0xc] sm:$0xf]
      %v1154 = vld [vmem:[%s1149 + $0x10] sm:$0xf]
      %v1155 = vld [vmem:[%s1149 + $0x14] sm:$0xf]
      %v1156 = vld [vmem:[%s1149 + $0x18] sm:$0xf]
      %v1157 = vld [vmem:[%s1149 + $0x1c] sm:$0xf]
      %v1158 = vld [vmem:[%s1149 + $0x20] sm:$0xf]
      %v1159 = vld [vmem:[%s1149 + $0x24] sm:$0xf]
      %v1160 = vld [vmem:[%s1149 + $0x28] sm:$0xf]
      %v1161 = vld [vmem:[%s1149 + $0x2c] sm:$0xf]
      %v1162 = vld [vmem:[%s1149 + $0x30] sm:$0xf]
      %v1163 = vld [vmem:[%s1149 + $0x34] sm:$0xf]
      %v1164 = vld [vmem:[%s1149 + $0x38] sm:$0xf]
      %v1165 = vld [vmem:[%s1149 + $0x3c] sm:$0xf]
      %v1182 = vunpack.c.l.b16 %v1150
      %v1183 = vunpack.c.l.b16 %v1151
      %v1184 = vunpack.c.l.b16 %v1152
      %v1185 = vunpack.c.l.b16 %v1153
      %v1186 = vunpack.c.l.b16 %v1154
      %v1187 = vunpack.c.l.b16 %v1155
      %v1188 = vunpack.c.l.b16 %v1156
      %v1189 = vunpack.c.l.b16 %v1157
      %v1190 = vunpack.c.l.b16 %v1158
      %v1191 = vunpack.c.l.b16 %v1159
      %v1192 = vunpack.c.l.b16 %v1160
      %v1193 = vunpack.c.l.b16 %v1161
      %v1194 = vunpack.c.l.b16 %v1162
      %v1195 = vunpack.c.l.b16 %v1163
      %v1196 = vunpack.c.l.b16 %v1164
      %v1197 = vunpack.c.l.b16 %v1165
      %v1198 = vpack.c.b16 %v1183, %v1182
      %v1199 = vpack.c.b16 %v1185, %v1184
      %v1200 = vpack.c.b16 %v1187, %v1186
      %v1201 = vpack.c.b16 %v1189, %v1188
      %v1202 = vpack.c.b16 %v1191, %v1190
      %v1203 = vpack.c.b16 %v1193, %v1192
      %v1204 = vpack.c.b16 %v1195, %v1194
      %v1205 = vpack.c.b16 %v1197, %v1196
      %1214 = vmatprep.subr.bf16.mxu0 0
      %1215 = vmatpush1.bf16.msra.mxu0 %v1198
      %1216 = vmatprep.subr.bf16.mxu0 0
      %1217 = vmatpush1.bf16.msra.mxu0 %v1199
      %1218 = vmatprep.subr.bf16.mxu0 0
      %1219 = vmatpush1.bf16.msra.mxu0 %v1200
      %1220 = vmatprep.subr.bf16.mxu0 0
      %1221 = vmatpush1.bf16.msra.mxu0 %v1201
      %1222 = vmatprep.subr.bf16.mxu0 0
      %1223 = vmatpush1.bf16.msra.mxu0 %v1202
      %1224 = vmatprep.subr.bf16.mxu0 0
      %1225 = vmatpush1.bf16.msra.mxu0 %v1203
      %1226 = vmatprep.subr.bf16.mxu0 0
      %1227 = vmatpush1.bf16.msra.mxu0 %v1204
      %1228 = vmatprep.subr.bf16.mxu0 0
      %1229 = vmatpush1.bf16.msra.mxu0 %v1205
      %1230 = vmatprep.subr.bf16.mxu0 0
      %1231 = vmatpush1.bf16.msra.mxu0 0
      %1232 = vmatprep.subr.bf16.mxu0 0
      %1233 = vmatpush1.bf16.msra.mxu0 0
      %1234 = vmatprep.subr.bf16.mxu0 0
      %1235 = vmatpush1.bf16.msra.mxu0 0
      %1236 = vmatprep.subr.bf16.mxu0 0
      %1237 = vmatpush1.bf16.msra.mxu0 0
      %1238 = vmatprep.subr.bf16.mxu0 0
      %1239 = vmatpush1.bf16.msra.mxu0 0
      %1240 = vmatprep.subr.bf16.mxu0 0
      %1241 = vmatpush1.bf16.msra.mxu0 0
      %1242 = vmatprep.subr.bf16.mxu0 0
      %1243 = vmatpush1.bf16.msra.mxu0 0
      %1244 = vmatprep.subr.bf16.mxu0 0
      %1245 = vmatpush1.bf16.msra.mxu0 0
      %1246 = vmatprep.mubr.bf16.mxu0 0
      %1247 = vmatmul.mubr.bf16.gmra.mrb[0].mxu0 %v1145
      %v1248 = vpop.f32.mrb[0].mxu0
      %v1249 = vadd.f32 0.0, %v1248
      %v1250 = vpop.f32.mrb[0].mxu0
      %v1251 = vpop.f32.mrb[0].mxu0
      %v1252 = vadd.f32 0.0, %v1251
      %v1253 = vpop.f32.mrb[0].mxu0
      %1254 = vmatprep.mubr.bf16.mxu0 0
      %1255 = vmatmul.mubr.bf16.gmra.mrb[0].mxu0 %v1146
      %v1256 = vpop.f32.mrb[0].mxu0
      %v1257 = vadd.f32 0.0, %v1256
      %v1258 = vpop.f32.mrb[0].mxu0
      %v1259 = vpop.f32.mrb[0].mxu0
      %v1260 = vadd.f32 0.0, %v1259
      %v1261 = vpop.f32.mrb[0].mxu0
      %1262 = vmatprep.mubr.bf16.mxu0 0
      %1263 = vmatmul.mubr.bf16.gmra.mrb[0].mxu0 %v1147
      %v1264 = vpop.f32.mrb[0].mxu0
      %v1265 = vadd.f32 0.0, %v1264
      %v1266 = vpop.f32.mrb[0].mxu0
      %v1267 = vpop.f32.mrb[0].mxu0
      %v1268 = vadd.f32 0.0, %v1267
      %v1269 = vpop.f32.mrb[0].mxu0
      %1270 = vmatprep.mubr.bf16.mxu0 0
      %1271 = vmatmul.mubr.bf16.gmra.mrb[0].mxu0 %v1148
      %v1272 = vpop.f32.mrb[0].mxu0
      %v1273 = vadd.f32 0.0, %v1272
      %v1274 = vpop.f32.mrb[0].mxu0
      %v1275 = vpop.f32.mrb[0].mxu0
      %v1276 = vadd.f32 0.0, %v1275
      %v1277 = vpop.f32.mrb[0].mxu0
      %1278 = vdwg.mxu0
      %v1279 = vadd.f32 %v1121, %v1249
      %v1280 = vadd.f32 %v1122, %v1252
      %v1281 = vadd.f32 %v1123, %v1257
      %v1282 = vadd.f32 %v1124, %v1260
      %v1283 = vadd.f32 %v1125, %v1265
      %v1284 = vadd.f32 %v1126, %v1268
      %v1285 = vadd.f32 %v1127, %v1273
      %v1286 = vadd.f32 %v1128, %v1276
      %v1287 = vld [vmem:[#allocation2 + $0x18] sm:$0xff]
      %v1288 = vld [vmem:[#allocation2 + $0x20] sm:$0xff]
      %v1289 = vld [vmem:[#allocation2 + $0x28] sm:$0xff]
      %v1290 = vld [vmem:[#allocation2 + $0x30] sm:$0xff]
      %v1291 = vld [vmem:[#allocation2 + $0x38] sm:$0xff]
      %v1292 = vld [vmem:[#allocation2 + $0x40] sm:$0xff]
      %v1293 = vld [vmem:[#allocation2 + $0x48] sm:$0xff]
      %v1294 = vld [vmem:[#allocation2 + $0x50] sm:$0xff]
      %v1295 = vpack.c.bf16 %v1288, %v1287
      %v1296 = vpack.c.bf16 %v1290, %v1289
      %v1297 = vpack.c.bf16 %v1292, %v1291
      %v1298 = vpack.c.bf16 %v1294, %v1293
      %s1299 = scalar_lea.vmem %s5, 256
      %v1300 = vld [vmem:[%s1299] sm:$0xf]
      %v1301 = vld [vmem:[%s1299 + $0x4] sm:$0xf]
      %v1302 = vld [vmem:[%s1299 + $0x8] sm:$0xf]
      %v1303 = vld [vmem:[%s1299 + $0xc] sm:$0xf]
      %v1304 = vld [vmem:[%s1299 + $0x10] sm:$0xf]
      %v1305 = vld [vmem:[%s1299 + $0x14] sm:$0xf]
      %v1306 = vld [vmem:[%s1299 + $0x18] sm:$0xf]
      %v1307 = vld [vmem:[%s1299 + $0x1c] sm:$0xf]
      %v1308 = vld [vmem:[%s1299 + $0x20] sm:$0xf]
      %v1309 = vld [vmem:[%s1299 + $0x24] sm:$0xf]
      %v1310 = vld [vmem:[%s1299 + $0x28] sm:$0xf]
      %v1311 = vld [vmem:[%s1299 + $0x2c] sm:$0xf]
      %v1312 = vld [vmem:[%s1299 + $0x30] sm:$0xf]
      %v1313 = vld [vmem:[%s1299 + $0x34] sm:$0xf]
      %v1314 = vld [vmem:[%s1299 + $0x38] sm:$0xf]
      %v1315 = vld [vmem:[%s1299 + $0x3c] sm:$0xf]
      %v1332 = vunpack.c.l.b16 %v1300
      %v1333 = vunpack.c.l.b16 %v1301
      %v1334 = vunpack.c.l.b16 %v1302
      %v1335 = vunpack.c.l.b16 %v1303
      %v1336 = vunpack.c.l.b16 %v1304
      %v1337 = vunpack.c.l.b16 %v1305
      %v1338 = vunpack.c.l.b16 %v1306
      %v1339 = vunpack.c.l.b16 %v1307
      %v1340 = vunpack.c.l.b16 %v1308
      %v1341 = vunpack.c.l.b16 %v1309
      %v1342 = vunpack.c.l.b16 %v1310
      %v1343 = vunpack.c.l.b16 %v1311
      %v1344 = vunpack.c.l.b16 %v1312
      %v1345 = vunpack.c.l.b16 %v1313
      %v1346 = vunpack.c.l.b16 %v1314
      %v1347 = vunpack.c.l.b16 %v1315
      %v1348 = vpack.c.b16 %v1333, %v1332
      %v1349 = vpack.c.b16 %v1335, %v1334
      %v1350 = vpack.c.b16 %v1337, %v1336
      %v1351 = vpack.c.b16 %v1339, %v1338
      %v1352 = vpack.c.b16 %v1341, %v1340
      %v1353 = vpack.c.b16 %v1343, %v1342
      %v1354 = vpack.c.b16 %v1345, %v1344
      %v1355 = vpack.c.b16 %v1347, %v1346
      %1364 = vmatprep.subr.bf16.mxu0 0
      %1365 = vmatpush1.bf16.msra.mxu0 %v1348
      %1366 = vmatprep.subr.bf16.mxu0 0
      %1367 = vmatpush1.bf16.msra.mxu0 %v1349
      %1368 = vmatprep.subr.bf16.mxu0 0
      %1369 = vmatpush1.bf16.msra.mxu0 %v1350
      %1370 = vmatprep.subr.bf16.mxu0 0
      %1371 = vmatpush1.bf16.msra.mxu0 %v1351
      %1372 = vmatprep.subr.bf16.mxu0 0
      %1373 = vmatpush1.bf16.msra.mxu0 %v1352
      %1374 = vmatprep.subr.bf16.mxu0 0
      %1375 = vmatpush1.bf16.msra.mxu0 %v1353
      %1376 = vmatprep.subr.bf16.mxu0 0
      %1377 = vmatpush1.bf16.msra.mxu0 %v1354
      %1378 = vmatprep.subr.bf16.mxu0 0
      %1379 = vmatpush1.bf16.msra.mxu0 %v1355
      %1380 = vmatprep.subr.bf16.mxu0 0
      %1381 = vmatpush1.bf16.msra.mxu0 0
      %1382 = vmatprep.subr.bf16.mxu0 0
      %1383 = vmatpush1.bf16.msra.mxu0 0
      %1384 = vmatprep.subr.bf16.mxu0 0
      %1385 = vmatpush1.bf16.msra.mxu0 0
      %1386 = vmatprep.subr.bf16.mxu0 0
      %1387 = vmatpush1.bf16.msra.mxu0 0
      %1388 = vmatprep.subr.bf16.mxu0 0
      %1389 = vmatpush1.bf16.msra.mxu0 0
      %1390 = vmatprep.subr.bf16.mxu0 0
      %1391 = vmatpush1.bf16.msra.mxu0 0
      %1392 = vmatprep.subr.bf16.mxu0 0
      %1393 = vmatpush1.bf16.msra.mxu0 0
      %1394 = vmatprep.subr.bf16.mxu0 0
      %1395 = vmatpush1.bf16.msra.mxu0 0
      %1396 = vmatprep.mubr.bf16.mxu0 0
      %1397 = vmatmul.mubr.bf16.gmra.mrb[0].mxu0 %v1295
      %v1398 = vpop.f32.mrb[0].mxu0
      %v1399 = vadd.f32 0.0, %v1398
      %v1400 = vpop.f32.mrb[0].mxu0
      %v1401 = vpop.f32.mrb[0].mxu0
      %v1402 = vadd.f32 0.0, %v1401
      %v1403 = vpop.f32.mrb[0].mxu0
      %1404 = vmatprep.mubr.bf16.mxu0 0
      %1405 = vmatmul.mubr.bf16.gmra.mrb[0].mxu0 %v1296
      %v1406 = vpop.f32.mrb[0].mxu0
      %v1407 = vadd.f32 0.0, %v1406
      %v1408 = vpop.f32.mrb[0].mxu0
      %v1409 = vpop.f32.mrb[0].mxu0
      %v1410 = vadd.f32 0.0, %v1409
      %v1411 = vpop.f32.mrb[0].mxu0
      %1412 = vmatprep.mubr.bf16.mxu0 0
      %1413 = vmatmul.mubr.bf16.gmra.mrb[0].mxu0 %v1297
      %v1414 = vpop.f32.mrb[0].mxu0
      %v1415 = vadd.f32 0.0, %v1414
      %v1416 = vpop.f32.mrb[0].mxu0
      %v1417 = vpop.f32.mrb[0].mxu0
      %v1418 = vadd.f32 0.0, %v1417
      %v1419 = vpop.f32.mrb[0].mxu0
      %1420 = vmatprep.mubr.bf16.mxu0 0
      %1421 = vmatmul.mubr.bf16.gmra.mrb[0].mxu0 %v1298
      %v1422 = vpop.f32.mrb[0].mxu0
      %v1423 = vadd.f32 0.0, %v1422
      %v1424 = vpop.f32.mrb[0].mxu0
      %v1425 = vpop.f32.mrb[0].mxu0
      %v1426 = vadd.f32 0.0, %v1425
      %v1427 = vpop.f32.mrb[0].mxu0
      %1428 = vdwg.mxu0
      %v1429 = vadd.f32 %v1279, %v1399
      %v1430 = vadd.f32 %v1280, %v1402
      %v1431 = vadd.f32 %v1281, %v1407
      %v1432 = vadd.f32 %v1282, %v1410
      %v1433 = vadd.f32 %v1283, %v1415
      %v1434 = vadd.f32 %v1284, %v1418
      %v1435 = vadd.f32 %v1285, %v1423
      %v1436 = vadd.f32 %v1286, %v1426
      %v1437 = vld [vmem:[#allocation2 + $0x19] sm:$0xff]
      %v1438 = vld [vmem:[#allocation2 + $0x21] sm:$0xff]
      %v1439 = vld [vmem:[#allocation2 + $0x29] sm:$0xff]
      %v1440 = vld [vmem:[#allocation2 + $0x31] sm:$0xff]
      %v1441 = vld [vmem:[#allocation2 + $0x39] sm:$0xff]
      %v1442 = vld [vmem:[#allocation2 + $0x41] sm:$0xff]
      %v1443 = vld [vmem:[#allocation2 + $0x49] sm:$0xff]
      %v1444 = vld [vmem:[#allocation2 + $0x51] sm:$0xff]
      %v1445 = vmul.f32 %v1437, %v672
      %v1446 = vmul.f32 %v1438, %v673
      %v1447 = vmul.f32 %v1439, %v674
      %v1448 = vmul.f32 %v1440, %v675
      %v1449 = vmul.f32 %v1441, %v676
      %v1450 = vmul.f32 %v1442, %v677
      %v1451 = vmul.f32 %v1443, %v678
      %v1452 = vmul.f32 %v1444, %v679
      %v1453 = vpack.c.bf16 %v1446, %v1445
      %v1454 = vpack.c.bf16 %v1448, %v1447
      %v1455 = vpack.c.bf16 %v1450, %v1449
      %v1456 = vpack.c.bf16 %v1452, %v1451
      %s1457 = scalar_lea.vmem %s5, 320
      %v1458 = vld [vmem:[%s1457] sm:$0xf]
      %v1459 = vld [vmem:[%s1457 + $0x4] sm:$0xf]
      %v1460 = vld [vmem:[%s1457 + $0x8] sm:$0xf]
      %v1461 = vld [vmem:[%s1457 + $0xc] sm:$0xf]
      %v1462 = vld [vmem:[%s1457 + $0x10] sm:$0xf]
      %v1463 = vld [vmem:[%s1457 + $0x14] sm:$0xf]
      %v1464 = vld [vmem:[%s1457 + $0x18] sm:$0xf]
      %v1465 = vld [vmem:[%s1457 + $0x1c] sm:$0xf]
      %v1466 = vld [vmem:[%s1457 + $0x20] sm:$0xf]
      %v1467 = vld [vmem:[%s1457 + $0x24] sm:$0xf]
      %v1468 = vld [vmem:[%s1457 + $0x28] sm:$0xf]
      %v1469 = vld [vmem:[%s1457 + $0x2c] sm:$0xf]
      %v1470 = vld [vmem:[%s1457 + $0x30] sm:$0xf]
      %v1471 = vld [vmem:[%s1457 + $0x34] sm:$0xf]
      %v1472 = vld [vmem:[%s1457 + $0x38] sm:$0xf]
      %v1473 = vld [vmem:[%s1457 + $0x3c] sm:$0xf]
      %v1490 = vunpack.c.l.b16 %v1458
      %v1491 = vunpack.c.l.b16 %v1459
      %v1492 = vunpack.c.l.b16 %v1460
      %v1493 = vunpack.c.l.b16 %v1461
      %v1494 = vunpack.c.l.b16 %v1462
      %v1495 = vunpack.c.l.b16 %v1463
      %v1496 = vunpack.c.l.b16 %v1464
      %v1497 = vunpack.c.l.b16 %v1465
      %v1498 = vunpack.c.l.b16 %v1466
      %v1499 = vunpack.c.l.b16 %v1467
      %v1500 = vunpack.c.l.b16 %v1468
      %v1501 = vunpack.c.l.b16 %v1469
      %v1502 = vunpack.c.l.b16 %v1470
      %v1503 = vunpack.c.l.b16 %v1471
      %v1504 = vunpack.c.l.b16 %v1472
      %v1505 = vunpack.c.l.b16 %v1473
      %v1506 = vpack.c.b16 %v1491, %v1490
      %v1507 = vpack.c.b16 %v1493, %v1492
      %v1508 = vpack.c.b16 %v1495, %v1494
      %v1509 = vpack.c.b16 %v1497, %v1496
      %v1510 = vpack.c.b16 %v1499, %v1498
      %v1511 = vpack.c.b16 %v1501, %v1500
      %v1512 = vpack.c.b16 %v1503, %v1502
      %v1513 = vpack.c.b16 %v1505, %v1504
      %1522 = vmatprep.subr.bf16.mxu0 0
      %1523 = vmatpush1.bf16.msra.mxu0 %v1506
      %1524 = vmatprep.subr.bf16.mxu0 0
      %1525 = vmatpush1.bf16.msra.mxu0 %v1507
      %1526 = vmatprep.subr.bf16.mxu0 0
      %1527 = vmatpush1.bf16.msra.mxu0 %v1508
      %1528 = vmatprep.subr.bf16.mxu0 0
      %1529 = vmatpush1.bf16.msra.mxu0 %v1509
      %1530 = vmatprep.subr.bf16.mxu0 0
      %1531 = vmatpush1.bf16.msra.mxu0 %v1510
      %1532 = vmatprep.subr.bf16.mxu0 0
      %1533 = vmatpush1.bf16.msra.mxu0 %v1511
      %1534 = vmatprep.subr.bf16.mxu0 0
      %1535 = vmatpush1.bf16.msra.mxu0 %v1512
      %1536 = vmatprep.subr.bf16.mxu0 0
      %1537 = vmatpush1.bf16.msra.mxu0 %v1513
      %1538 = vmatprep.subr.bf16.mxu0 0
      %1539 = vmatpush1.bf16.msra.mxu0 0
      %1540 = vmatprep.subr.bf16.mxu0 0
      %1541 = vmatpush1.bf16.msra.mxu0 0
      %1542 = vmatprep.subr.bf16.mxu0 0
      %1543 = vmatpush1.bf16.msra.mxu0 0
      %1544 = vmatprep.subr.bf16.mxu0 0
      %1545 = vmatpush1.bf16.msra.mxu0 0
      %1546 = vmatprep.subr.bf16.mxu0 0
      %1547 = vmatpush1.bf16.msra.mxu0 0
      %1548 = vmatprep.subr.bf16.mxu0 0
      %1549 = vmatpush1.bf16.msra.mxu0 0
      %1550 = vmatprep.subr.bf16.mxu0 0
      %1551 = vmatpush1.bf16.msra.mxu0 0
      %1552 = vmatprep.subr.bf16.mxu0 0
      %1553 = vmatpush1.bf16.msra.mxu0 0
      %1554 = vmatprep.mubr.bf16.mxu0 0
      %1555 = vmatmul.mubr.bf16.gmra.mrb[0].mxu0 %v1453
      %v1556 = vpop.f32.mrb[0].mxu0
      %v1557 = vadd.f32 0.0, %v1556
      %v1558 = vpop.f32.mrb[0].mxu0
      %v1559 = vpop.f32.mrb[0].mxu0
      %v1560 = vadd.f32 0.0, %v1559
      %v1561 = vpop.f32.mrb[0].mxu0
      %1562 = vmatprep.mubr.bf16.mxu0 0
      %1563 = vmatmul.mubr.bf16.gmra.mrb[0].mxu0 %v1454
      %v1564 = vpop.f32.mrb[0].mxu0
      %v1565 = vadd.f32 0.0, %v1564
      %v1566 = vpop.f32.mrb[0].mxu0
      %v1567 = vpop.f32.mrb[0].mxu0
      %v1568 = vadd.f32 0.0, %v1567
      %v1569 = vpop.f32.mrb[0].mxu0
      %1570 = vmatprep.mubr.bf16.mxu0 0
      %1571 = vmatmul.mubr.bf16.gmra.mrb[0].mxu0 %v1455
      %v1572 = vpop.f32.mrb[0].mxu0
      %v1573 = vadd.f32 0.0, %v1572
      %v1574 = vpop.f32.mrb[0].mxu0
      %v1575 = vpop.f32.mrb[0].mxu0
      %v1576 = vadd.f32 0.0, %v1575
      %v1577 = vpop.f32.mrb[0].mxu0
      %1578 = vmatprep.mubr.bf16.mxu0 0
      %1579 = vmatmul.mubr.bf16.gmra.mrb[0].mxu0 %v1456
      %v1580 = vpop.f32.mrb[0].mxu0
      %v1581 = vadd.f32 0.0, %v1580
      %v1582 = vpop.f32.mrb[0].mxu0
      %v1583 = vpop.f32.mrb[0].mxu0
      %v1584 = vadd.f32 0.0, %v1583
      %v1585 = vpop.f32.mrb[0].mxu0
      %1586 = vdwg.mxu0
      %v1587 = vadd.f32 %v1429, %v1557
      %v1588 = vadd.f32 %v1430, %v1560
      %v1589 = vadd.f32 %v1431, %v1565
      %v1590 = vadd.f32 %v1432, %v1568
      %v1591 = vadd.f32 %v1433, %v1573
      %v1592 = vadd.f32 %v1434, %v1576
      %v1593 = vadd.f32 %v1435, %v1581
      %v1594 = vadd.f32 %v1436, %v1584
      %v1595 = vld [vmem:[#allocation2 + $0x27] sm:$0xff]
      %v1596 = vld [vmem:[#allocation2 + $0x2f] sm:$0xff]
      %v1597 = vld [vmem:[#allocation2 + $0x37] sm:$0xff]
      %v1598 = vld [vmem:[#allocation2 + $0x3f] sm:$0xff]
      %v1599 = vld [vmem:[#allocation2 + $0x47] sm:$0xff]
      %v1600 = vld [vmem:[#allocation2 + $0x4f] sm:$0xff]
      %v1601 = vld [vmem:[#allocation2 + $0x57] sm:$0xff]
      %v1602 = vld [vmem:[#allocation2 + $0x5f] sm:$0xff]
      %v1603 = vmul.f32 %v1595, %v648
      %v1604 = vmul.f32 %v1596, %v649
      %v1605 = vmul.f32 %v1597, %v650
      %v1606 = vmul.f32 %v1598, %v651
      %v1607 = vmul.f32 %v1599, %v652
      %v1608 = vmul.f32 %v1600, %v653
      %v1609 = vmul.f32 %v1601, %v654
      %v1610 = vmul.f32 %v1602, %v655
      %v1611 = vpack.c.bf16 %v1604, %v1603
      %v1612 = vpack.c.bf16 %v1606, %v1605
      %v1613 = vpack.c.bf16 %v1608, %v1607
      %v1614 = vpack.c.bf16 %v1610, %v1609
      %s1615 = scalar_lea.vmem %s5, 384
      %v1616 = vld [vmem:[%s1615] sm:$0xf]
      %v1617 = vld [vmem:[%s1615 + $0x4] sm:$0xf]
      %v1618 = vld [vmem:[%s1615 + $0x8] sm:$0xf]
      %v1619 = vld [vmem:[%s1615 + $0xc] sm:$0xf]
      %v1620 = vld [vmem:[%s1615 + $0x10] sm:$0xf]
      %v1621 = vld [vmem:[%s1615 + $0x14] sm:$0xf]
      %v1622 = vld [vmem:[%s1615 + $0x18] sm:$0xf]
      %v1623 = vld [vmem:[%s1615 + $0x1c] sm:$0xf]
      %v1624 = vld [vmem:[%s1615 + $0x20] sm:$0xf]
      %v1625 = vld [vmem:[%s1615 + $0x24] sm:$0xf]
      %v1626 = vld [vmem:[%s1615 + $0x28] sm:$0xf]
      %v1627 = vld [vmem:[%s1615 + $0x2c] sm:$0xf]
      %v1628 = vld [vmem:[%s1615 + $0x30] sm:$0xf]
      %v1629 = vld [vmem:[%s1615 + $0x34] sm:$0xf]
      %v1630 = vld [vmem:[%s1615 + $0x38] sm:$0xf]
      %v1631 = vld [vmem:[%s1615 + $0x3c] sm:$0xf]
      %v1648 = vunpack.c.l.b16 %v1616
      %v1649 = vunpack.c.l.b16 %v1617
      %v1650 = vunpack.c.l.b16 %v1618
      %v1651 = vunpack.c.l.b16 %v1619
      %v1652 = vunpack.c.l.b16 %v1620
      %v1653 = vunpack.c.l.b16 %v1621
      %v1654 = vunpack.c.l.b16 %v1622
      %v1655 = vunpack.c.l.b16 %v1623
      %v1656 = vunpack.c.l.b16 %v1624
      %v1657 = vunpack.c.l.b16 %v1625
      %v1658 = vunpack.c.l.b16 %v1626
      %v1659 = vunpack.c.l.b16 %v1627
      %v1660 = vunpack.c.l.b16 %v1628
      %v1661 = vunpack.c.l.b16 %v1629
      %v1662 = vunpack.c.l.b16 %v1630
      %v1663 = vunpack.c.l.b16 %v1631
      %v1664 = vpack.c.b16 %v1649, %v1648
      %v1665 = vpack.c.b16 %v1651, %v1650
      %v1666 = vpack.c.b16 %v1653, %v1652
      %v1667 = vpack.c.b16 %v1655, %v1654
      %v1668 = vpack.c.b16 %v1657, %v1656
      %v1669 = vpack.c.b16 %v1659, %v1658
      %v1670 = vpack.c.b16 %v1661, %v1660
      %v1671 = vpack.c.b16 %v1663, %v1662
      %1680 = vmatprep.subr.bf16.mxu0 0
      %1681 = vmatpush1.bf16.msra.mxu0 %v1664
      %1682 = vmatprep.subr.bf16.mxu0 0
      %1683 = vmatpush1.bf16.msra.mxu0 %v1665
      %1684 = vmatprep.subr.bf16.mxu0 0
      %1685 = vmatpush1.bf16.msra.mxu0 %v1666
      %1686 = vmatprep.subr.bf16.mxu0 0
      %1687 = vmatpush1.bf16.msra.mxu0 %v1667
      %1688 = vmatprep.subr.bf16.mxu0 0
      %1689 = vmatpush1.bf16.msra.mxu0 %v1668
      %1690 = vmatprep.subr.bf16.mxu0 0
      %1691 = vmatpush1.bf16.msra.mxu0 %v1669
      %1692 = vmatprep.subr.bf16.mxu0 0
      %1693 = vmatpush1.bf16.msra.mxu0 %v1670
      %1694 = vmatprep.subr.bf16.mxu0 0
      %1695 = vmatpush1.bf16.msra.mxu0 %v1671
      %1696 = vmatprep.subr.bf16.mxu0 0
      %1697 = vmatpush1.bf16.msra.mxu0 0
      %1698 = vmatprep.subr.bf16.mxu0 0
      %1699 = vmatpush1.bf16.msra.mxu0 0
      %1700 = vmatprep.subr.bf16.mxu0 0
      %1701 = vmatpush1.bf16.msra.mxu0 0
      %1702 = vmatprep.subr.bf16.mxu0 0
      %1703 = vmatpush1.bf16.msra.mxu0 0
      %1704 = vmatprep.subr.bf16.mxu0 0
      %1705 = vmatpush1.bf16.msra.mxu0 0
      %1706 = vmatprep.subr.bf16.mxu0 0
      %1707 = vmatpush1.bf16.msra.mxu0 0
      %1708 = vmatprep.subr.bf16.mxu0 0
      %1709 = vmatpush1.bf16.msra.mxu0 0
      %1710 = vmatprep.subr.bf16.mxu0 0
      %1711 = vmatpush1.bf16.msra.mxu0 0
      %1712 = vmatprep.mubr.bf16.mxu0 0
      %1713 = vmatmul.mubr.bf16.gmra.mrb[0].mxu0 %v1611
      %v1714 = vpop.f32.mrb[0].mxu0
      %v1715 = vadd.f32 0.0, %v1714
      %v1716 = vpop.f32.mrb[0].mxu0
      %v1717 = vpop.f32.mrb[0].mxu0
      %v1718 = vadd.f32 0.0, %v1717
      %v1719 = vpop.f32.mrb[0].mxu0
      %1720 = vmatprep.mubr.bf16.mxu0 0
      %1721 = vmatmul.mubr.bf16.gmra.mrb[0].mxu0 %v1612
      %v1722 = vpop.f32.mrb[0].mxu0
      %v1723 = vadd.f32 0.0, %v1722
      %v1724 = vpop.f32.mrb[0].mxu0
      %v1725 = vpop.f32.mrb[0].mxu0
      %v1726 = vadd.f32 0.0, %v1725
      %v1727 = vpop.f32.mrb[0].mxu0
      %1728 = vmatprep.mubr.bf16.mxu0 0
      %1729 = vmatmul.mubr.bf16.gmra.mrb[0].mxu0 %v1613
      %v1730 = vpop.f32.mrb[0].mxu0
      %v1731 = vadd.f32 0.0, %v1730
      %v1732 = vpop.f32.mrb[0].mxu0
      %v1733 = vpop.f32.mrb[0].mxu0
      %v1734 = vadd.f32 0.0, %v1733
      %v1735 = vpop.f32.mrb[0].mxu0
      %1736 = vmatprep.mubr.bf16.mxu0 0
      %1737 = vmatmul.mubr.bf16.gmra.mrb[0].mxu0 %v1614
      %v1738 = vpop.f32.mrb[0].mxu0
      %v1739 = vadd.f32 0.0, %v1738
      %v1740 = vpop.f32.mrb[0].mxu0
      %v1741 = vpop.f32.mrb[0].mxu0
      %v1742 = vadd.f32 0.0, %v1741
      %v1743 = vpop.f32.mrb[0].mxu0
      %1744 = vdwg.mxu0
      %v1745 = vadd.f32 %v1587, %v1715
      %v1746 = vadd.f32 %v1588, %v1718
      %v1747 = vadd.f32 %v1589, %v1723
      %v1748 = vadd.f32 %v1590, %v1726
      %v1749 = vadd.f32 %v1591, %v1731
      %v1750 = vadd.f32 %v1592, %v1734
      %v1751 = vadd.f32 %v1593, %v1739
      %v1752 = vadd.f32 %v1594, %v1742
      %v1753 = vld [vmem:[#allocation2 + $0x28] sm:$0xff]
      %v1754 = vld [vmem:[#allocation2 + $0x30] sm:$0xff]
      %v1755 = vld [vmem:[#allocation2 + $0x38] sm:$0xff]
      %v1756 = vld [vmem:[#allocation2 + $0x40] sm:$0xff]
      %v1757 = vld [vmem:[#allocation2 + $0x48] sm:$0xff]
      %v1758 = vld [vmem:[#allocation2 + $0x50] sm:$0xff]
      %v1759 = vld [vmem:[#allocation2 + $0x58] sm:$0xff]
      %v1760 = vld [vmem:[#allocation2 + $0x60] sm:$0xff]
      %v1761 = vpack.c.bf16 %v1754, %v1753
      %v1762 = vpack.c.bf16 %v1756, %v1755
      %v1763 = vpack.c.bf16 %v1758, %v1757
      %v1764 = vpack.c.bf16 %v1760, %v1759
      %s1765 = scalar_lea.vmem %s5, 448
      %v1766 = vld [vmem:[%s1765] sm:$0xf]
      %v1767 = vld [vmem:[%s1765 + $0x4] sm:$0xf]
      %v1768 = vld [vmem:[%s1765 + $0x8] sm:$0xf]
      %v1769 = vld [vmem:[%s1765 + $0xc] sm:$0xf]
      %v1770 = vld [vmem:[%s1765 + $0x10] sm:$0xf]
      %v1771 = vld [vmem:[%s1765 + $0x14] sm:$0xf]
      %v1772 = vld [vmem:[%s1765 + $0x18] sm:$0xf]
      %v1773 = vld [vmem:[%s1765 + $0x1c] sm:$0xf]
      %v1774 = vld [vmem:[%s1765 + $0x20] sm:$0xf]
      %v1775 = vld [vmem:[%s1765 + $0x24] sm:$0xf]
      %v1776 = vld [vmem:[%s1765 + $0x28] sm:$0xf]
      %v1777 = vld [vmem:[%s1765 + $0x2c] sm:$0xf]
      %v1778 = vld [vmem:[%s1765 + $0x30] sm:$0xf]
      %v1779 = vld [vmem:[%s1765 + $0x34] sm:$0xf]
      %v1780 = vld [vmem:[%s1765 + $0x38] sm:$0xf]
      %v1781 = vld [vmem:[%s1765 + $0x3c] sm:$0xf]
      %v1798 = vunpack.c.l.b16 %v1766
      %v1799 = vunpack.c.l.b16 %v1767
      %v1800 = vunpack.c.l.b16 %v1768
      %v1801 = vunpack.c.l.b16 %v1769
      %v1802 = vunpack.c.l.b16 %v1770
      %v1803 = vunpack.c.l.b16 %v1771
      %v1804 = vunpack.c.l.b16 %v1772
      %v1805 = vunpack.c.l.b16 %v1773
      %v1806 = vunpack.c.l.b16 %v1774
      %v1807 = vunpack.c.l.b16 %v1775
      %v1808 = vunpack.c.l.b16 %v1776
      %v1809 = vunpack.c.l.b16 %v1777
      %v1810 = vunpack.c.l.b16 %v1778
      %v1811 = vunpack.c.l.b16 %v1779
      %v1812 = vunpack.c.l.b16 %v1780
      %v1813 = vunpack.c.l.b16 %v1781
      %v1814 = vpack.c.b16 %v1799, %v1798
      %v1815 = vpack.c.b16 %v1801, %v1800
      %v1816 = vpack.c.b16 %v1803, %v1802
      %v1817 = vpack.c.b16 %v1805, %v1804
      %v1818 = vpack.c.b16 %v1807, %v1806
      %v1819 = vpack.c.b16 %v1809, %v1808
      %v1820 = vpack.c.b16 %v1811, %v1810
      %v1821 = vpack.c.b16 %v1813, %v1812
      %1830 = vmatprep.subr.bf16.mxu0 0
      %1831 = vmatpush1.bf16.msra.mxu0 %v1814
      %1832 = vmatprep.subr.bf16.mxu0 0
      %1833 = vmatpush1.bf16.msra.mxu0 %v1815
      %1834 = vmatprep.subr.bf16.mxu0 0
      %1835 = vmatpush1.bf16.msra.mxu0 %v1816
      %1836 = vmatprep.subr.bf16.mxu0 0
      %1837 = vmatpush1.bf16.msra.mxu0 %v1817
      %1838 = vmatprep.subr.bf16.mxu0 0
      %1839 = vmatpush1.bf16.msra.mxu0 %v1818
      %1840 = vmatprep.subr.bf16.mxu0 0
      %1841 = vmatpush1.bf16.msra.mxu0 %v1819
      %1842 = vmatprep.subr.bf16.mxu0 0
      %1843 = vmatpush1.bf16.msra.mxu0 %v1820
      %1844 = vmatprep.subr.bf16.mxu0 0
      %1845 = vmatpush1.bf16.msra.mxu0 %v1821
      %1846 = vmatprep.subr.bf16.mxu0 0
      %1847 = vmatpush1.bf16.msra.mxu0 0
      %1848 = vmatprep.subr.bf16.mxu0 0
      %1849 = vmatpush1.bf16.msra.mxu0 0
      %1850 = vmatprep.subr.bf16.mxu0 0
      %1851 = vmatpush1.bf16.msra.mxu0 0
      %1852 = vmatprep.subr.bf16.mxu0 0
      %1853 = vmatpush1.bf16.msra.mxu0 0
      %1854 = vmatprep.subr.bf16.mxu0 0
      %1855 = vmatpush1.bf16.msra.mxu0 0
      %1856 = vmatprep.subr.bf16.mxu0 0
      %1857 = vmatpush1.bf16.msra.mxu0 0
      %1858 = vmatprep.subr.bf16.mxu0 0
      %1859 = vmatpush1.bf16.msra.mxu0 0
      %1860 = vmatprep.subr.bf16.mxu0 0
      %1861 = vmatpush1.bf16.msra.mxu0 0
      %1862 = vmatprep.mubr.bf16.mxu0 0
      %1863 = vmatmul.mubr.bf16.gmra.mrb[0].mxu0 %v1761
      %v1864 = vpop.f32.mrb[0].mxu0
      %v1865 = vadd.f32 0.0, %v1864
      %v1866 = vpop.f32.mrb[0].mxu0
      %v1867 = vpop.f32.mrb[0].mxu0
      %v1868 = vadd.f32 0.0, %v1867
      %v1869 = vpop.f32.mrb[0].mxu0
      %1870 = vmatprep.mubr.bf16.mxu0 0
      %1871 = vmatmul.mubr.bf16.gmra.mrb[0].mxu0 %v1762
      %v1872 = vpop.f32.mrb[0].mxu0
      %v1873 = vadd.f32 0.0, %v1872
      %v1874 = vpop.f32.mrb[0].mxu0
      %v1875 = vpop.f32.mrb[0].mxu0
      %v1876 = vadd.f32 0.0, %v1875
      %v1877 = vpop.f32.mrb[0].mxu0
      %1878 = vmatprep.mubr.bf16.mxu0 0
      %1879 = vmatmul.mubr.bf16.gmra.mrb[0].mxu0 %v1763
      %v1880 = vpop.f32.mrb[0].mxu0
      %v1881 = vadd.f32 0.0, %v1880
      %v1882 = vpop.f32.mrb[0].mxu0
      %v1883 = vpop.f32.mrb[0].mxu0
      %v1884 = vadd.f32 0.0, %v1883
      %v1885 = vpop.f32.mrb[0].mxu0
      %1886 = vmatprep.mubr.bf16.mxu0 0
      %1887 = vmatmul.mubr.bf16.gmra.mrb[0].mxu0 %v1764
      %v1888 = vpop.f32.mrb[0].mxu0
      %v1889 = vadd.f32 0.0, %v1888
      %v1890 = vpop.f32.mrb[0].mxu0
      %v1891 = vpop.f32.mrb[0].mxu0
      %v1892 = vadd.f32 0.0, %v1891
      %v1893 = vpop.f32.mrb[0].mxu0
      %1894 = vdwg.mxu0
      %v1895 = vadd.f32 %v1745, %v1865
      %v1896 = vadd.f32 %v1746, %v1868
      %v1897 = vadd.f32 %v1747, %v1873
      %v1898 = vadd.f32 %v1748, %v1876
      %v1899 = vadd.f32 %v1749, %v1881
      %v1900 = vadd.f32 %v1750, %v1884
      %v1901 = vadd.f32 %v1751, %v1889
      %v1902 = vadd.f32 %v1752, %v1892
      %v1903 = vld [vmem:[#allocation2 + $0x29] sm:$0xff]
      %v1904 = vld [vmem:[#allocation2 + $0x31] sm:$0xff]
      %v1905 = vld [vmem:[#allocation2 + $0x39] sm:$0xff]
      %v1906 = vld [vmem:[#allocation2 + $0x41] sm:$0xff]
      %v1907 = vld [vmem:[#allocation2 + $0x49] sm:$0xff]
      %v1908 = vld [vmem:[#allocation2 + $0x51] sm:$0xff]
      %v1909 = vld [vmem:[#allocation2 + $0x59] sm:$0xff]
      %v1910 = vld [vmem:[#allocation2 + $0x61] sm:$0xff]
      %v1911 = vmul.f32 %v1903, %v672
      %v1912 = vmul.f32 %v1904, %v673
      %v1913 = vmul.f32 %v1905, %v674
      %v1914 = vmul.f32 %v1906, %v675
      %v1915 = vmul.f32 %v1907, %v676
      %v1916 = vmul.f32 %v1908, %v677
      %v1917 = vmul.f32 %v1909, %v678
      %v1918 = vmul.f32 %v1910, %v679
      %v1919 = vpack.c.bf16 %v1912, %v1911
      %v1920 = vpack.c.bf16 %v1914, %v1913
      %v1921 = vpack.c.bf16 %v1916, %v1915
      %v1922 = vpack.c.bf16 %v1918, %v1917
      %s1923 = scalar_lea.vmem %s5, 512
      %v1924 = vld [vmem:[%s1923] sm:$0xf]
      %v1925 = vld [vmem:[%s1923 + $0x4] sm:$0xf]
      %v1926 = vld [vmem:[%s1923 + $0x8] sm:$0xf]
      %v1927 = vld [vmem:[%s1923 + $0xc] sm:$0xf]
      %v1928 = vld [vmem:[%s1923 + $0x10] sm:$0xf]
      %v1929 = vld [vmem:[%s1923 + $0x14] sm:$0xf]
      %v1930 = vld [vmem:[%s1923 + $0x18] sm:$0xf]
      %v1931 = vld [vmem:[%s1923 + $0x1c] sm:$0xf]
      %v1932 = vld [vmem:[%s1923 + $0x20] sm:$0xf]
      %v1933 = vld [vmem:[%s1923 + $0x24] sm:$0xf]
      %v1934 = vld [vmem:[%s1923 + $0x28] sm:$0xf]
      %v1935 = vld [vmem:[%s1923 + $0x2c] sm:$0xf]
      %v1936 = vld [vmem:[%s1923 + $0x30] sm:$0xf]
      %v1937 = vld [vmem:[%s1923 + $0x34] sm:$0xf]
      %v1938 = vld [vmem:[%s1923 + $0x38] sm:$0xf]
      %v1939 = vld [vmem:[%s1923 + $0x3c] sm:$0xf]
      %v1956 = vunpack.c.l.b16 %v1924
      %v1957 = vunpack.c.l.b16 %v1925
      %v1958 = vunpack.c.l.b16 %v1926
      %v1959 = vunpack.c.l.b16 %v1927
      %v1960 = vunpack.c.l.b16 %v1928
      %v1961 = vunpack.c.l.b16 %v1929
      %v1962 = vunpack.c.l.b16 %v1930
      %v1963 = vunpack.c.l.b16 %v1931
      %v1964 = vunpack.c.l.b16 %v1932
      %v1965 = vunpack.c.l.b16 %v1933
      %v1966 = vunpack.c.l.b16 %v1934
      %v1967 = vunpack.c.l.b16 %v1935
      %v1968 = vunpack.c.l.b16 %v1936
      %v1969 = vunpack.c.l.b16 %v1937
      %v1970 = vunpack.c.l.b16 %v1938
      %v1971 = vunpack.c.l.b16 %v1939
      %v1972 = vpack.c.b16 %v1957, %v1956
      %v1973 = vpack.c.b16 %v1959, %v1958
      %v1974 = vpack.c.b16 %v1961, %v1960
      %v1975 = vpack.c.b16 %v1963, %v1962
      %v1976 = vpack.c.b16 %v1965, %v1964
      %v1977 = vpack.c.b16 %v1967, %v1966
      %v1978 = vpack.c.b16 %v1969, %v1968
      %v1979 = vpack.c.b16 %v1971, %v1970
      %1988 = vmatprep.subr.bf16.mxu0 0
      %1989 = vmatpush1.bf16.msra.mxu0 %v1972
      %1990 = vmatprep.subr.bf16.mxu0 0
      %1991 = vmatpush1.bf16.msra.mxu0 %v1973
      %1992 = vmatprep.subr.bf16.mxu0 0
      %1993 = vmatpush1.bf16.msra.mxu0 %v1974
      %1994 = vmatprep.subr.bf16.mxu0 0
      %1995 = vmatpush1.bf16.msra.mxu0 %v1975
      %1996 = vmatprep.subr.bf16.mxu0 0
      %1997 = vmatpush1.bf16.msra.mxu0 %v1976
      %1998 = vmatprep.subr.bf16.mxu0 0
      %1999 = vmatpush1.bf16.msra.mxu0 %v1977
      %2000 = vmatprep.subr.bf16.mxu0 0
      %2001 = vmatpush1.bf16.msra.mxu0 %v1978
      %2002 = vmatprep.subr.bf16.mxu0 0
      %2003 = vmatpush1.bf16.msra.mxu0 %v1979
      %2004 = vmatprep.subr.bf16.mxu0 0
      %2005 = vmatpush1.bf16.msra.mxu0 0
      %2006 = vmatprep.subr.bf16.mxu0 0
      %2007 = vmatpush1.bf16.msra.mxu0 0
      %2008 = vmatprep.subr.bf16.mxu0 0
      %2009 = vmatpush1.bf16.msra.mxu0 0
      %2010 = vmatprep.subr.bf16.mxu0 0
      %2011 = vmatpush1.bf16.msra.mxu0 0
      %2012 = vmatprep.subr.bf16.mxu0 0
      %2013 = vmatpush1.bf16.msra.mxu0 0
      %2014 = vmatprep.subr.bf16.mxu0 0
      %2015 = vmatpush1.bf16.msra.mxu0 0
      %2016 = vmatprep.subr.bf16.mxu0 0
      %2017 = vmatpush1.bf16.msra.mxu0 0
      %2018 = vmatprep.subr.bf16.mxu0 0
      %2019 = vmatpush1.bf16.msra.mxu0 0
      %2020 = vmatprep.mubr.bf16.mxu0 0
      %2021 = vmatmul.mubr.bf16.gmra.mrb[0].mxu0 %v1919
      %v2022 = vpop.f32.mrb[0].mxu0
      %v2023 = vadd.f32 0.0, %v2022
      %v2024 = vpop.f32.mrb[0].mxu0
      %v2025 = vpop.f32.mrb[0].mxu0
      %v2026 = vadd.f32 0.0, %v2025
      %v2027 = vpop.f32.mrb[0].mxu0
      %2028 = vmatprep.mubr.bf16.mxu0 0
      %2029 = vmatmul.mubr.bf16.gmra.mrb[0].mxu0 %v1920
      %v2030 = vpop.f32.mrb[0].mxu0
      %v2031 = vadd.f32 0.0, %v2030
      %v2032 = vpop.f32.mrb[0].mxu0
      %v2033 = vpop.f32.mrb[0].mxu0
      %v2034 = vadd.f32 0.0, %v2033
      %v2035 = vpop.f32.mrb[0].mxu0
      %2036 = vmatprep.mubr.bf16.mxu0 0
      %2037 = vmatmul.mubr.bf16.gmra.mrb[0].mxu0 %v1921
      %v2038 = vpop.f32.mrb[0].mxu0
      %v2039 = vadd.f32 0.0, %v2038
      %v2040 = vpop.f32.mrb[0].mxu0
      %v2041 = vpop.f32.mrb[0].mxu0
      %v2042 = vadd.f32 0.0, %v2041
      %v2043 = vpop.f32.mrb[0].mxu0
      %2044 = vmatprep.mubr.bf16.mxu0 0
      %2045 = vmatmul.mubr.bf16.gmra.mrb[0].mxu0 %v1922
      %v2046 = vpop.f32.mrb[0].mxu0
      %v2047 = vadd.f32 0.0, %v2046
      %v2048 = vpop.f32.mrb[0].mxu0
      %v2049 = vpop.f32.mrb[0].mxu0
      %v2050 = vadd.f32 0.0, %v2049
      %v2051 = vpop.f32.mrb[0].mxu0
      %2052 = vdwg.mxu0
      %v2053 = vadd.f32 %v1895, %v2023
      %v2054 = vadd.f32 %v1896, %v2026
      %v2055 = vadd.f32 %v1897, %v2031
      %v2056 = vadd.f32 %v1898, %v2034
      %v2057 = vadd.f32 %v1899, %v2039
      %v2058 = vadd.f32 %v1900, %v2042
      %v2059 = vadd.f32 %v1901, %v2047
      %v2060 = vadd.f32 %v1902, %v2050
      %v2061 = vpack.c.bf16 %v2054, %v2053
      %v2062 = vpack.c.bf16 %v2056, %v2055
      %v2063 = vpack.c.bf16 %v2058, %v2057
      %v2064 = vpack.c.bf16 %v2060, %v2059
      %v2069 = vunpack.c.l.b16 %v2061
      %v2070 = vunpack.c.h.b16 %v2061
      %v2071 = vunpack.c.l.b16 %v2062
      %v2072 = vunpack.c.h.b16 %v2062
      %v2073 = vunpack.c.l.b16 %v2063
      %v2074 = vunpack.c.h.b16 %v2063
      %v2075 = vunpack.c.l.b16 %v2064
      %v2076 = vunpack.c.h.b16 %v2064
      %v2077 = vpack.c.b16 %v2069, %v2069
      %v2078 = vpack.c.b16 %v2070, %v2070
      %v2079 = vpack.c.b16 %v2071, %v2071
      %v2080 = vpack.c.b16 %v2072, %v2072
      %v2081 = vpack.c.b16 %v2073, %v2073
      %v2082 = vpack.c.b16 %v2074, %v2074
      %v2083 = vpack.c.b16 %v2075, %v2075
      %v2084 = vpack.c.b16 %v2076, %v2076
      %2093 = vst [vmem:[%s482] sm:$0xf] %v2077
      %2094 = vst [vmem:[%s482 + $0x4] sm:$0xf] %v2078
      %2095 = vst [vmem:[%s482 + $0x8] sm:$0xf] %v2079
      %2096 = vst [vmem:[%s482 + $0xc] sm:$0xf] %v2080
      %2097 = vst [vmem:[%s482 + $0x10] sm:$0xf] %v2081
      %2098 = vst [vmem:[%s482 + $0x14] sm:$0xf] %v2082
      %2099 = vst [vmem:[%s482 + $0x18] sm:$0xf] %v2083
      %2100 = vst [vmem:[%s482 + $0x1c] sm:$0xf] %v2084
      // Predicated region
      $region45: #{double_conv.3} parent=43 // pred_check
        %p2101 = pneg %p493
      $region46: #{double_conv.3} parent=43 // pred_check_branch
        %2103 = sbr.rel (%p2101) target = $region48
      $region47: #{double_conv.3} parent=43 // pred_region
        %2104 = vst [vmem:[%s486] sm:$0x1] 0.0
        %2105 = vst [vmem:[%s489] sm:$0x1] 0.0
      $region48: #{double_conv.3} parent=43 // pred_fallthru
        _
      %v2106 = vld [vmem:[%s486] sm:$0x1]
      %v2107 = vadd.f32 %v2053, %v2054
      %v2108 = vadd.f32 %v2107, %v2055
      %v2109 = vadd.f32 %v2108, %v2056
      %v2110 = vadd.f32 %v2109, %v2057
      %v2111 = vadd.f32 %v2110, %v2058
      %v2112 = vadd.f32 %v2111, %v2059
      %v2113 = vadd.f32 %v2112, %v2060
      %v2114 = vrot.slane %v2113, 4
      %v2115 = vadd.f32 %v2113, %v2114
      %v2116 = vrot.slane %v2115, 2
      %v2117 = vadd.f32 %v2115, %v2116
      %v2118 = vrot.slane %v2117, 1
      %v2119 = vadd.f32 %v2117, %v2118
      %v2120 = vadd.f32 %v2106, %v2119
      %2121 = vst [vmem:[%s486] sm:$0x1] %v2120
      %v2122 = vld [vmem:[%s489] sm:$0x1]
      %v2123 = vmul.f32 %v2053, %v2053
      %v2124 = vmul.f32 %v2054, %v2054
      %v2125 = vmul.f32 %v2055, %v2055
      %v2126 = vmul.f32 %v2056, %v2056
      %v2127 = vmul.f32 %v2057, %v2057
      %v2128 = vmul.f32 %v2058, %v2058
      %v2129 = vmul.f32 %v2059, %v2059
      %v2130 = vmul.f32 %v2060, %v2060
      %v2131 = vadd.f32 %v2123, %v2124
      %v2132 = vadd.f32 %v2131, %v2125
      %v2133 = vadd.f32 %v2132, %v2126
      %v2134 = vadd.f32 %v2133, %v2127
      %v2135 = vadd.f32 %v2134, %v2128
      %v2136 = vadd.f32 %v2135, %v2129
      %v2137 = vadd.f32 %v2136, %v2130
      %v2138 = vrot.slane %v2137, 4
      %v2139 = vadd.f32 %v2137, %v2138
      %v2140 = vrot.slane %v2139, 2
      %v2141 = vadd.f32 %v2139, %v2140
      %v2142 = vrot.slane %v2141, 1
      %v2143 = vadd.f32 %v2141, %v2142
      %v2144 = vadd.f32 %v2122, %v2143
      %2145 = vst [vmem:[%s489] sm:$0x1] %v2144
      %s2146 = smul.u32 8, %s25
      %p2147 = scmp.lt.s32.totalorder %s24, 1
      %s2148 = scalar_select %p2147, %s24, 1
      %p2149 = scmp.lt.s32.totalorder %s2146, 31
      %s2150 = scalar_select %p2149, %s2146, 31
      %s2151 = smul.addr %s2148, 32
      %s2152 = sadd.s32 %s2150, %s2151
      %s2153 = smul.addr %s2152, 4
      %s2154 = scalar_lea.vmem %s6, %s2153
      %p2155 = scmp.lt.s32.totalorder %s24, 1
      %s2156 = scalar_select %p2155, %s24, 1
      %s2157 = scalar_lea.vmem %s7, %s2156
      %p2158 = scmp.lt.s32.totalorder %s24, 1
      %s2159 = scalar_select %p2158, %s24, 1
      %s2160 = scalar_lea.vmem %s8, %s2159
      // Predicated region
      $region49: #{double_conv.3} parent=43 // pred_check
        %p2161 = pneg %p215
      $region50: #{double_conv.3} parent=43 // pred_check_branch
        %2163 = sbr.rel (%p2161) target = $region52
      $region51: #{double_conv.3} parent=43 // pred_region
        %s2164 = smul.u32 8, %s25
      $region52: #{double_conv.3} parent=43 // pred_fallthru
        _
      // Predicated region
      $region53: #{double_conv.3} parent=43 // pred_check
        %p2165 = pneg %p241
      $region54: #{double_conv.3} parent=43 // pred_check_branch
        %2167 = sbr.rel (%p2165) target = $region56
      $region55: #{double_conv.3} parent=43 // pred_region
        _
      $region56: #{double_conv.3} parent=43 // pred_fallthru
        _
      // Predicated region
      $region57: #{double_conv.3} parent=43 // pred_check
        %p2168 = pneg %p267
      $region58: #{double_conv.3} parent=43 // pred_check_branch
        %2170 = sbr.rel (%p2168) target = $region60
      $region59: #{double_conv.3} parent=43 // pred_region
        _
      $region60: #{double_conv.3} parent=43 // pred_fallthru
        _
    $region44: #{double_conv.3} parent=5 // pred_fallthru
      _
    %p2171 = scmp.le.s32.totalorder 2, %s15
    // Predicated region
    $region61: #{double_conv.3} parent=5 // pred_check
      %p2172 = pneg %p2171
    $region62: #{double_conv.3} parent=5 // pred_check_branch
      %2174 = sbr.rel (%p2172) target = $region64
    $region63: #{double_conv.3} parent=5 // pred_region
      %s2175 = ssub.s32 %s15, 2
      // Predicated region
      $region65: #{double_conv.3} parent=63 // pred_check
        %p2176 = pneg %p221
      $region66: #{double_conv.3} parent=63 // pred_check_branch
        %2178 = sbr.rel (%p2176) target = $region68
      $region67: #{double_conv.3} parent=63 // pred_region
        %s2179 = smul.u32 8, %s27
        %p2180 = scmp.lt.s32.totalorder %s26, 1
        %s2181 = scalar_select %p2180, %s26, 1
        %p2182 = scmp.lt.s32.totalorder %s2179, 31
        %s2183 = scalar_select %p2182, %s2179, 31
        %s2184 = smul.addr %s2181, 32
        %s2185 = sadd.s32 %s2183, %s2184
        %s2186 = smul.addr %s2185, 4
        %s2187 = scalar_lea.vmem %s6, %s2186
      $region68: #{double_conv.3} parent=63 // pred_fallthru
        _
      // Predicated region
      $region69: #{double_conv.3} parent=63 // pred_check
        %p2188 = pneg %p247
      $region70: #{double_conv.3} parent=63 // pred_check_branch
        %2190 = sbr.rel (%p2188) target = $region72
      $region71: #{double_conv.3} parent=63 // pred_region
        %p2191 = scmp.lt.s32.totalorder %s26, 1
        %s2192 = scalar_select %p2191, %s26, 1
        %s2193 = scalar_lea.vmem %s7, %s2192
      $region72: #{double_conv.3} parent=63 // pred_fallthru
        _
      // Predicated region
      $region73: #{double_conv.3} parent=63 // pred_check
        %p2194 = pneg %p273
      $region74: #{double_conv.3} parent=63 // pred_check_branch
        %2196 = sbr.rel (%p2194) target = $region76
      $region75: #{double_conv.3} parent=63 // pred_region
        %p2197 = scmp.lt.s32.totalorder %s26, 1
        %s2198 = scalar_select %p2197, %s26, 1
        %s2199 = scalar_lea.vmem %s8, %s2198
      $region76: #{double_conv.3} parent=63 // pred_fallthru
        _
    $region64: #{double_conv.3} parent=5 // pred_fallthru
      _
  $region6: #{double_conv.3} parent=0 // loop_footer
    %s19 = sadd.s32 1, %s15
  $region7: #{double_conv.3} parent=0 // loop_footer_branch
    %14 = sbr.rel target = $region3
  $region8: #{double_conv.3} parent=0 // loop_exit
    _

// kernel: double_conv.4
$region0: #{double_conv.4}
  #allocation0 [shape = 'u32[]', space=smem, size = 0x4, offset = 0x4, fixed_abs, tag = 'smem constant byte address 0x4 - core index']
  #allocation1 [shape = 'u32[144,128]{1,0:T(1,128)}', space=vmem, size = 0x12000, scoped, tag = 'internal scratch']
  #allocation2 [shape = 'f32[112,128]{1,0:T(8,128)}', space=vmem, size = 0xe000, scoped, tag = 'scratch operand']
  %s0 = inlined_call_operand.vmem [shape: bf16[2,256,128], index: 0, kind: input, shape index: {}, may-alias: {0,1,2}]
  %s1 = inlined_call_operand.vmem [shape: bf16[2,256,128], index: 1, kind: input, shape index: {}, may-alias: {0,1,2}]
  %s2 = inlined_call_operand.vmem [shape: bf16[2,256,128], index: 2, kind: input, shape index: {}, may-alias: {0,1,2}]
  %s3 = inlined_call_operand.vmem [shape: f32[1,128], index: 3, kind: input, shape index: {}]
  %s4 = inlined_call_operand.vmem [shape: f32[1,128], index: 4, kind: input, shape index: {}]
  %s5 = inlined_call_operand.vmem [shape: bf16[9,128,128], index: 5, kind: input, shape index: {}]
  %s6 = inlined_call_operand.vmem [shape: bf16[2,256,128], index: 6, kind: output, shape index: {0}]
  %s7 = inlined_call_operand.vmem [shape: f32[2,1,128], index: 7, kind: output, shape index: {1}]
  %s8 = inlined_call_operand.vmem [shape: f32[2,1,128], index: 8, kind: output, shape index: {2}]
  %9 = xla_tuple %s6, %s7, %s8
  %s10 = sld [smem:[#allocation0]]
  $region77: #{double_conv.4} parent=0
    _
  %s12 = ssub.s32 1, %s10
  %s13 = scalar_select 0, %s12, %s10
  loop: start=0, step=1, limit=10
  $region2: #{double_conv.4} parent=0 // loop_pre_header
    _
  $region3: #{double_conv.4} parent=0 // loop_header
    %s15 = sphi 0, %s19
    %p16 = scmp.ge.s32.totalorder %s15, 10
    %s22 = sphi 0, %s34
    %s23 = sphi 0, %s30
    %s24 = sphi 0, %s22
    %s25 = sphi 0, %s23
    %s26 = sphi 0, %s24
    %s27 = sphi 0, %s25
    %s39 = sphi 0, %s41
    %s42 = sphi 0, %s39
    %s43 = sphi 0, %s42
    %s59 = sphi 0, %s43
    %s75 = sphi 0, %s77
    %s78 = sphi 0, %s75
    %s79 = sphi 0, %s78
    %s95 = sphi 0, %s79
    %s111 = sphi 0, %s113
    %s114 = sphi 0, %s111
    %s115 = sphi 0, %s114
    %s131 = sphi 0, %s115
    %s135 = sphi 0, %s135
    %s137 = sphi 0, %s135
    %s138 = sphi 0, %s137
    %s152 = sphi 0, %s138
    %s156 = sphi 0, %s156
    %s158 = sphi 0, %s156
    %s159 = sphi 0, %s158
    %s173 = sphi 0, %s159
    %s177 = sphi 0, %s177
    %s179 = sphi 0, %s177
    %s180 = sphi 0, %s179
    %s194 = sphi 0, %s180
    %s202 = sphi 0, %s204
    %s205 = sphi 0, %s202
    %s206 = sphi 0, %s205
    %s222 = sphi 0, %s206
    %s228 = sphi 0, %s230
    %s231 = sphi 0, %s228
    %s232 = sphi 0, %s231
    %s248 = sphi 0, %s232
    %s254 = sphi 0, %s256
    %s257 = sphi 0, %s254
    %s258 = sphi 0, %s257
    %s274 = sphi 0, %s258
  $region4: #{double_conv.4} parent=0 // loop_header_branch
    %18 = sbr.rel (%p16) target = $region8
  $region5: #{double_conv.4} parent=0 // loop_body
    %s20 = ssub.s32 %s15, 1
    %s21 = ssub.s32 %s15, 2
    %s28 = sadd.s32 1, %s23
    %p29 = scmp.ge.s32.totalorder %s28, 4
    %s30 = scalar_select %p29, 0, %s28
    %s31 = sadd.s32 1, %s22
    %s32 = scalar_select %p29, %s31, %s22
    %p33 = scmp.ge.s32.totalorder %s32, 2
    %s34 = scalar_select %p33, 0, %s32
    %s35 = ssub.s32 %s22, %s34
    %s36 = ssub.s32 %s23, %s30
    %s37 = sor.u32 %s35, %s36
    %p38 = scmp.eq.s32.totalorder %s37, 0
    %s40 = sadd.s32 %s39, 1
    %s41 = scalar_select %p38, %s39, %s40
    %p44 = pneg %p38
    %p45 = scmp.eq.s32.totalorder %s15, 7
    %p46 = por %p44, %p45
    %p47 = scmp.ne.s32.totalorder %s39, %s42
    %p48 = scmp.eq.s32.totalorder %s15, 0
    %p49 = por %p47, %p48
    %p50 = scmp.ne.s32.totalorder %s39, %s42
    %p51 = scmp.eq.s32.totalorder %s20, 7
    %p52 = por %p50, %p51
    %p53 = scmp.ne.s32.totalorder %s42, %s43
    %p54 = scmp.eq.s32.totalorder %s20, 0
    %p55 = por %p53, %p54
    %p56 = scmp.ne.s32.totalorder %s42, %s43
    %p57 = scmp.eq.s32.totalorder %s21, 7
    %p58 = por %p56, %p57
    %p60 = scmp.ne.s32.totalorder %s43, %s59
    %p61 = scmp.eq.s32.totalorder %s21, 0
    %p62 = por %p60, %p61
    %s63 = smul.u32 %s23, 4
    %s64 = ssub.s32 %s63, 1
    %p65 = scmp.gt.s32.totalorder %s64, 0
    %s66 = scalar_select %p65, %s64, 0
    %s67 = smul.u32 %s30, 4
    %s68 = ssub.s32 %s67, 1
    %p69 = scmp.gt.s32.totalorder %s68, 0
    %s70 = scalar_select %p69, %s68, 0
    %s71 = ssub.s32 %s22, %s34
    %s72 = ssub.s32 %s66, %s70
    %s73 = sor.u32 %s71, %s72
    %p74 = scmp.eq.s32.totalorder %s73, 0
    %s76 = sadd.s32 %s75, 1
    %s77 = scalar_select %p74, %s75, %s76
    %p80 = pneg %p74
    %p81 = scmp.eq.s32.totalorder %s15, 7
    %p82 = por %p80, %p81
    %p83 = scmp.ne.s32.totalorder %s75, %s78
    %p84 = scmp.eq.s32.totalorder %s15, 0
    %p85 = por %p83, %p84
    %p86 = scmp.ne.s32.totalorder %s75, %s78
    %p87 = scmp.eq.s32.totalorder %s20, 7
    %p88 = por %p86, %p87
    %p89 = scmp.ne.s32.totalorder %s78, %s79
    %p90 = scmp.eq.s32.totalorder %s20, 0
    %p91 = por %p89, %p90
    %p92 = scmp.ne.s32.totalorder %s78, %s79
    %p93 = scmp.eq.s32.totalorder %s21, 7
    %p94 = por %p92, %p93
    %p96 = scmp.ne.s32.totalorder %s79, %s95
    %p97 = scmp.eq.s32.totalorder %s21, 0
    %p98 = por %p96, %p97
    %s99 = smul.u32 %s23, 4
    %s100 = sadd.s32 %s99, 4
    %p101 = scmp.lt.s32.totalorder %s100, 15
    %s102 = scalar_select %p101, %s100, 15
    %s103 = smul.u32 %s30, 4
    %s104 = sadd.s32 %s103, 4
    %p105 = scmp.lt.s32.totalorder %s104, 15
    %s106 = scalar_select %p105, %s104, 15
    %s107 = ssub.s32 %s22, %s34
    %s108 = ssub.s32 %s102, %s106
    %s109 = sor.u32 %s107, %s108
    %p110 = scmp.eq.s32.totalorder %s109, 0
    %s112 = sadd.s32 %s111, 1
    %s113 = scalar_select %p110, %s111, %s112
    %p116 = pneg %p110
    %p117 = scmp.eq.s32.totalorder %s15, 7
    %p118 = por %p116, %p117
    %p119 = scmp.ne.s32.totalorder %s111, %s114
    %p120 = scmp.eq.s32.totalorder %s15, 0
    %p121 = por %p119, %p120
    %p122 = scmp.ne.s32.totalorder %s111, %s114
    %p123 = scmp.eq.s32.totalorder %s20, 7
    %p124 = por %p122, %p123
    %p125 = scmp.ne.s32.totalorder %s114, %s115
    %p126 = scmp.eq.s32.totalorder %s20, 0
    %p127 = por %p125, %p126
    %p128 = scmp.ne.s32.totalorder %s114, %s115
    %p129 = scmp.eq.s32.totalorder %s21, 7
    %p130 = por %p128, %p129
    %p132 = scmp.ne.s32.totalorder %s115, %s131
    %p133 = scmp.eq.s32.totalorder %s21, 0
    %p134 = por %p132, %p133
    %s136 = sadd.s32 %s135, 1
    %p139 = scmp.eq.s32.totalorder %s15, 7
    %p140 = scmp.ne.s32.totalorder %s135, %s137
    %p141 = scmp.eq.s32.totalorder %s15, 0
    %p142 = por %p140, %p141
    %p143 = scmp.ne.s32.totalorder %s135, %s137
    %p144 = scmp.eq.s32.totalorder %s20, 7
    %p145 = por %p143, %p144
    %p146 = scmp.ne.s32.totalorder %s137, %s138
    %p147 = scmp.eq.s32.totalorder %s20, 0
    %p148 = por %p146, %p147
    %p149 = scmp.ne.s32.totalorder %s137, %s138
    %p150 = scmp.eq.s32.totalorder %s21, 7
    %p151 = por %p149, %p150
    %p153 = scmp.ne.s32.totalorder %s138, %s152
    %p154 = scmp.eq.s32.totalorder %s21, 0
    %p155 = por %p153, %p154
    %s157 = sadd.s32 %s156, 1
    %p160 = scmp.eq.s32.totalorder %s15, 7
    %p161 = scmp.ne.s32.totalorder %s156, %s158
    %p162 = scmp.eq.s32.totalorder %s15, 0
    %p163 = por %p161, %p162
    %p164 = scmp.ne.s32.totalorder %s156, %s158
    %p165 = scmp.eq.s32.totalorder %s20, 7
    %p166 = por %p164, %p165
    %p167 = scmp.ne.s32.totalorder %s158, %s159
    %p168 = scmp.eq.s32.totalorder %s20, 0
    %p169 = por %p167, %p168
    %p170 = scmp.ne.s32.totalorder %s158, %s159
    %p171 = scmp.eq.s32.totalorder %s21, 7
    %p172 = por %p170, %p171
    %p174 = scmp.ne.s32.totalorder %s159, %s173
    %p175 = scmp.eq.s32.totalorder %s21, 0
    %p176 = por %p174, %p175
    %s178 = sadd.s32 %s177, 1
    %p181 = scmp.eq.s32.totalorder %s15, 7
    %p182 = scmp.ne.s32.totalorder %s177, %s179
    %p183 = scmp.eq.s32.totalorder %s15, 0
    %p184 = por %p182, %p183
    %p185 = scmp.ne.s32.totalorder %s177, %s179
    %p186 = scmp.eq.s32.totalorder %s20, 7
    %p187 = por %p185, %p186
    %p188 = scmp.ne.s32.totalorder %s179, %s180
    %p189 = scmp.eq.s32.totalorder %s20, 0
    %p190 = por %p188, %p189
    %p191 = scmp.ne.s32.totalorder %s179, %s180
    %p192 = scmp.eq.s32.totalorder %s21, 7
    %p193 = por %p191, %p192
    %p195 = scmp.ne.s32.totalorder %s180, %s194
    %p196 = scmp.eq.s32.totalorder %s21, 0
    %p197 = por %p195, %p196
    %s198 = ssub.s32 %s22, %s34
    %s199 = ssub.s32 %s23, %s30
    %s200 = sor.u32 %s198, %s199
    %p201 = scmp.eq.s32.totalorder %s200, 0
    %s203 = sadd.s32 %s202, 1
    %s204 = scalar_select %p201, %s202, %s203
    %p207 = pneg %p201
    %p208 = scmp.eq.s32.totalorder %s15, 7
    %p209 = por %p207, %p208
    %p210 = scmp.ne.s32.totalorder %s202, %s205
    %p211 = scmp.eq.s32.totalorder %s15, 0
    %p212 = por %p210, %p211
    %p213 = scmp.ne.s32.totalorder %s202, %s205
    %p214 = scmp.eq.s32.totalorder %s20, 7
    %p215 = por %p213, %p214
    %p216 = scmp.ne.s32.totalorder %s205, %s206
    %p217 = scmp.eq.s32.totalorder %s20, 0
    %p218 = por %p216, %p217
    %p219 = scmp.ne.s32.totalorder %s205, %s206
    %p220 = scmp.eq.s32.totalorder %s21, 7
    %p221 = por %p219, %p220
    %p223 = scmp.ne.s32.totalorder %s206, %s222
    %p224 = scmp.eq.s32.totalorder %s21, 0
    %p225 = por %p223, %p224
    %s226 = ssub.s32 %s22, %s34
    %p227 = scmp.eq.s32.totalorder %s226, 0
    %s229 = sadd.s32 %s228, 1
    %s230 = scalar_select %p227, %s228, %s229
    %p233 = pneg %p227
    %p234 = scmp.eq.s32.totalorder %s15, 7
    %p235 = por %p233, %p234
    %p236 = scmp.ne.s32.totalorder %s228, %s231
    %p237 = scmp.eq.s32.totalorder %s15, 0
    %p238 = por %p236, %p237
    %p239 = scmp.ne.s32.totalorder %s228, %s231
    %p240 = scmp.eq.s32.totalorder %s20, 7
    %p241 = por %p239, %p240
    %p242 = scmp.ne.s32.totalorder %s231, %s232
    %p243 = scmp.eq.s32.totalorder %s20, 0
    %p244 = por %p242, %p243
    %p245 = scmp.ne.s32.totalorder %s231, %s232
    %p246 = scmp.eq.s32.totalorder %s21, 7
    %p247 = por %p245, %p246
    %p249 = scmp.ne.s32.totalorder %s232, %s248
    %p250 = scmp.eq.s32.totalorder %s21, 0
    %p251 = por %p249, %p250
    %s252 = ssub.s32 %s22, %s34
    %p253 = scmp.eq.s32.totalorder %s252, 0
    %s255 = sadd.s32 %s254, 1
    %s256 = scalar_select %p253, %s254, %s255
    %p259 = pneg %p253
    %p260 = scmp.eq.s32.totalorder %s15, 7
    %p261 = por %p259, %p260
    %p262 = scmp.ne.s32.totalorder %s254, %s257
    %p263 = scmp.eq.s32.totalorder %s15, 0
    %p264 = por %p262, %p263
    %p265 = scmp.ne.s32.totalorder %s254, %s257
    %p266 = scmp.eq.s32.totalorder %s20, 7
    %p267 = por %p265, %p266
    %p268 = scmp.ne.s32.totalorder %s257, %s258
    %p269 = scmp.eq.s32.totalorder %s20, 0
    %p270 = por %p268, %p269
    %p271 = scmp.ne.s32.totalorder %s257, %s258
    %p272 = scmp.eq.s32.totalorder %s21, 7
    %p273 = por %p271, %p272
    %p275 = scmp.ne.s32.totalorder %s258, %s274
    %p276 = scmp.eq.s32.totalorder %s21, 0
    %p277 = por %p275, %p276
    %p278 = scmp.le.s32.totalorder 1, %s15
    %p279 = scmp.lt.s32.totalorder %s15, 9
    %p280 = pnand %p278, %p279
    %p281 = pneg %p280
    // Predicated region
    $region9: #{double_conv.4} parent=5 // pred_check
      _
    $region10: #{double_conv.4} parent=5 // pred_check_branch
      %283 = sbr.rel (%p280) target = $region12
    $region11: #{double_conv.4} parent=5 // pred_region
      %s284 = ssub.s32 %s15, 1
      // Predicated region
      $region13: #{double_conv.4} parent=11 // pred_check
        %p285 = pneg %p148
      $region14: #{double_conv.4} parent=11 // pred_check_branch
        %287 = sbr.rel (%p285) target = $region16
      $region15: #{double_conv.4} parent=11 // pred_region
        _
      $region16: #{double_conv.4} parent=11 // pred_fallthru
        _
      // Predicated region
      $region17: #{double_conv.4} parent=11 // pred_check
        %p288 = pneg %p169
      $region18: #{double_conv.4} parent=11 // pred_check_branch
        %290 = sbr.rel (%p288) target = $region20
      $region19: #{double_conv.4} parent=11 // pred_region
        _
      $region20: #{double_conv.4} parent=11 // pred_fallthru
        _
      // Predicated region
      $region21: #{double_conv.4} parent=11 // pred_check
        %p291 = pneg %p190
      $region22: #{double_conv.4} parent=11 // pred_check_branch
        %293 = sbr.rel (%p291) target = $region24
      $region23: #{double_conv.4} parent=11 // pred_region
        _
      $region24: #{double_conv.4} parent=11 // pred_fallthru
        _
    $region12: #{double_conv.4} parent=5 // pred_fallthru
      _
    %p294 = scmp.lt.s32.totalorder %s15, 8
    // Predicated region
    $region25: #{double_conv.4} parent=5 // pred_check
      %p295 = pneg %p294
    $region26: #{double_conv.4} parent=5 // pred_check_branch
      %297 = sbr.rel (%p295) target = $region28
    $region27: #{double_conv.4} parent=5 // pred_region
      // Predicated region
      $region29: #{double_conv.4} parent=27 // pred_check
        %p298 = pneg %p49
      $region30: #{double_conv.4} parent=27 // pred_check_branch
        %300 = sbr.rel (%p298) target = $region32
      $region31: #{double_conv.4} parent=27 // pred_region
        %s301 = smul.u32 8, %s23
        %p302 = scmp.lt.s32.totalorder %s22, 1
        %s303 = scalar_select %p302, %s22, 1
        %p304 = scmp.lt.s32.totalorder %s301, 31
        %s305 = scalar_select %p304, %s301, 31
        %s306 = smul.addr %s303, 32
        %s307 = sadd.s32 %s305, %s306
        %s308 = smul.addr %s307, 4
        %s309 = scalar_lea.vmem %s0, %s308
        %s310 = smul.u32 8, %s23
      $region32: #{double_conv.4} parent=27 // pred_fallthru
        _
      // Predicated region
      $region33: #{double_conv.4} parent=27 // pred_check
        %p311 = pneg %p85
      $region34: #{double_conv.4} parent=27 // pred_check_branch
        %313 = sbr.rel (%p311) target = $region36
      $region35: #{double_conv.4} parent=27 // pred_region
        %s314 = smul.u32 %s23, 4
        %s315 = ssub.s32 %s314, 1
        %p316 = scmp.gt.s32.totalorder %s315, 0
        %s317 = scalar_select %p316, %s315, 0
        %s318 = smul.u32 2, %s317
        %p319 = scmp.lt.s32.totalorder %s22, 1
        %s320 = scalar_select %p319, %s22, 1
        %p321 = scmp.lt.s32.totalorder %s318, 31
        %s322 = scalar_select %p321, %s318, 31
        %s323 = smul.addr %s320, 32
        %s324 = sadd.s32 %s322, %s323
        %s325 = smul.addr %s324, 4
        %s326 = scalar_lea.vmem %s1, %s325
        %s327 = smul.u32 %s23, 4
        %s328 = ssub.s32 %s327, 1
        %p329 = scmp.gt.s32.totalorder %s328, 0
        %s330 = scalar_select %p329, %s328, 0
        %s331 = smul.u32 2, %s330
      $region36: #{double_conv.4} parent=27 // pred_fallthru
        _
      // Predicated region
      $region37: #{double_conv.4} parent=27 // pred_check
        %p332 = pneg %p121
      $region38: #{double_conv.4} parent=27 // pred_check_branch
        %334 = sbr.rel (%p332) target = $region40
      $region39: #{double_conv.4} parent=27 // pred_region
        %s335 = smul.u32 %s23, 4
        %s336 = sadd.s32 %s335, 4
        %p337 = scmp.lt.s32.totalorder %s336, 15
        %s338 = scalar_select %p337, %s336, 15
        %s339 = smul.u32 2, %s338
        %p340 = scmp.lt.s32.totalorder %s22, 1
        %s341 = scalar_select %p340, %s22, 1
        %p342 = scmp.lt.s32.totalorder %s339, 31
        %s343 = scalar_select %p342, %s339, 31
        %s344 = smul.addr %s341, 32
        %s345 = sadd.s32 %s343, %s344
        %s346 = smul.addr %s345, 4
        %s347 = scalar_lea.vmem %s2, %s346
        %s348 = smul.u32 %s23, 4
        %s349 = sadd.s32 %s348, 4
        %p350 = scmp.lt.s32.totalorder %s349, 15
        %s351 = scalar_select %p350, %s349, 15
        %s352 = smul.u32 2, %s351
      $region40: #{double_conv.4} parent=27 // pred_fallthru
        _
    $region28: #{double_conv.4} parent=5 // pred_fallthru
      _
    %p353 = scmp.le.s32.totalorder 1, %s15
    %p354 = scmp.lt.s32.totalorder %s15, 9
    %p355 = pnand %p353, %p354
    %p356 = pneg %p355
    // Predicated region
    $region41: #{double_conv.4} parent=5 // pred_check
      _
    $region42: #{double_conv.4} parent=5 // pred_check_branch
      %358 = sbr.rel (%p355) target = $region44
    $region43: #{double_conv.4} parent=5 // pred_region
      %s359 = ssub.s32 %s15, 1
      %s360 = smul.u32 8, %s25
      %p361 = scmp.lt.s32.totalorder %s24, 1
      %s362 = scalar_select %p361, %s24, 1
      %p363 = scmp.lt.s32.totalorder %s360, 31
      %s364 = scalar_select %p363, %s360, 31
      %s365 = smul.addr %s362, 32
      %s366 = sadd.s32 %s364, %s365
      %s367 = smul.addr %s366, 4
      %s368 = scalar_lea.vmem %s0, %s367
      %p369 = pneg %p55
      %p370 = pneg %p52
      %s371 = smul.u32 %s25, 4
      %s372 = ssub.s32 %s371, 1
      %p373 = scmp.gt.s32.totalorder %s372, 0
      %s374 = scalar_select %p373, %s372, 0
      %s375 = smul.u32 2, %s374
      %p376 = scmp.lt.s32.totalorder %s24, 1
      %s377 = scalar_select %p376, %s24, 1
      %p378 = scmp.lt.s32.totalorder %s375, 31
      %s379 = scalar_select %p378, %s375, 31
      %s380 = smul.addr %s377, 32
      %s381 = sadd.s32 %s379, %s380
      %s382 = smul.addr %s381, 4
      %s383 = scalar_lea.vmem %s1, %s382
      %p384 = pneg %p91
      %p385 = pneg %p88
      %s386 = smul.u32 %s25, 4
      %s387 = sadd.s32 %s386, 4
      %p388 = scmp.lt.s32.totalorder %s387, 15
      %s389 = scalar_select %p388, %s387, 15
      %s390 = smul.u32 2, %s389
      %p391 = scmp.lt.s32.totalorder %s24, 1
      %s392 = scalar_select %p391, %s24, 1
      %p393 = scmp.lt.s32.totalorder %s390, 31
      %s394 = scalar_select %p393, %s390, 31
      %s395 = smul.addr %s392, 32
      %s396 = sadd.s32 %s394, %s395
      %s397 = smul.addr %s396, 4
      %s398 = scalar_lea.vmem %s2, %s397
      %p399 = pneg %p127
      %p400 = pneg %p124
      %p401 = pneg %p148
      %p402 = pneg %p145
      %p403 = pneg %p169
      %p404 = pneg %p166
      %p405 = pneg %p190
      %p406 = pneg %p187
      %p407 = pneg %p218
      %p408 = pneg %p215
      %s409 = smul.u32 8, %s25
      %p410 = scmp.lt.s32.totalorder %s24, 1
      %s411 = scalar_select %p410, %s24, 1
      %p412 = scmp.lt.s32.totalorder %s409, 31
      %s413 = scalar_select %p412, %s409, 31
      %s414 = smul.addr %s411, 32
      %s415 = sadd.s32 %s413, %s414
      %s416 = smul.addr %s415, 4
      %s417 = scalar_lea.vmem %s6, %s416
      %p418 = pneg %p244
      %p419 = pneg %p241
      %p420 = scmp.lt.s32.totalorder %s24, 1
      %s421 = scalar_select %p420, %s24, 1
      %s422 = scalar_lea.vmem %s7, %s421
      %p423 = pneg %p270
      %p424 = pneg %p267
      %p425 = scmp.lt.s32.totalorder %s24, 1
      %s426 = scalar_select %p425, %s24, 1
      %s427 = scalar_lea.vmem %s8, %s426
      %s428 = smul.u32 8, %s25
      %p429 = scmp.lt.s32.totalorder %s24, 1
      %s430 = scalar_select %p429, %s24, 1
      %p431 = scmp.lt.s32.totalorder %s428, 31
      %s432 = scalar_select %p431, %s428, 31
      %s433 = smul.addr %s430, 32
      %s434 = sadd.s32 %s432, %s433
      %s435 = smul.addr %s434, 4
      %s436 = scalar_lea.vmem %s0, %s435
      %s437 = smul.u32 8, %s25
      %s438 = smul.u32 %s25, 4
      %s439 = ssub.s32 %s438, 1
      %p440 = scmp.gt.s32.totalorder %s439, 0
      %s441 = scalar_select %p440, %s439, 0
      %s442 = smul.u32 2, %s441
      %p443 = scmp.lt.s32.totalorder %s24, 1
      %s444 = scalar_select %p443, %s24, 1
      %p445 = scmp.lt.s32.totalorder %s442, 31
      %s446 = scalar_select %p445, %s442, 31
      %s447 = smul.addr %s444, 32
      %s448 = sadd.s32 %s446, %s447
      %s449 = smul.addr %s448, 4
      %s450 = scalar_lea.vmem %s1, %s449
      %s451 = smul.u32 %s25, 4
      %s452 = ssub.s32 %s451, 1
      %p453 = scmp.gt.s32.totalorder %s452, 0
      %s454 = scalar_select %p453, %s452, 0
      %s455 = smul.u32 2, %s454
      %s456 = smul.u32 %s25, 4
      %s457 = sadd.s32 %s456, 4
      %p458 = scmp.lt.s32.totalorder %s457, 15
      %s459 = scalar_select %p458, %s457, 15
      %s460 = smul.u32 2, %s459
      %p461 = scmp.lt.s32.totalorder %s24, 1
      %s462 = scalar_select %p461, %s24, 1
      %p463 = scmp.lt.s32.totalorder %s460, 31
      %s464 = scalar_select %p463, %s460, 31
      %s465 = smul.addr %s462, 32
      %s466 = sadd.s32 %s464, %s465
      %s467 = smul.addr %s466, 4
      %s468 = scalar_lea.vmem %s2, %s467
      %s469 = smul.u32 %s25, 4
      %s470 = sadd.s32 %s469, 4
      %p471 = scmp.lt.s32.totalorder %s470, 15
      %s472 = scalar_select %p471, %s470, 15
      %s473 = smul.u32 2, %s472
      %s474 = smul.u32 8, %s25
      %p475 = scmp.lt.s32.totalorder %s24, 1
      %s476 = scalar_select %p475, %s24, 1
      %p477 = scmp.lt.s32.totalorder %s474, 31
      %s478 = scalar_select %p477, %s474, 31
      %s479 = smul.addr %s476, 32
      %s480 = sadd.s32 %s478, %s479
      %s481 = smul.addr %s480, 4
      %s482 = scalar_lea.vmem %s6, %s481
      %s483 = smul.u32 8, %s25
      %p484 = scmp.lt.s32.totalorder %s24, 1
      %s485 = scalar_select %p484, %s24, 1
      %s486 = scalar_lea.vmem %s7, %s485
      %p487 = scmp.lt.s32.totalorder %s24, 1
      %s488 = scalar_select %p487, %s24, 1
      %s489 = scalar_lea.vmem %s8, %s488
      %491 = vst [vmem:[#allocation2] sm:$0xff] 0.0
      %492 = vst [vmem:[#allocation2 + $0x68] sm:$0xff] 0.0
      %p493 = scmp.eq.s32.totalorder %s25, 0
      %s494 = scalar_select %p493, 0.0, 1.0
      %p495 = scmp.eq.s32.totalorder %s25, 3
      %s496 = scalar_select %p495, 0.0, 1.0
      %v497 = vld [vmem:[%s436] sm:$0xf]
      %v498 = vld [vmem:[%s436 + $0x4] sm:$0xf]
      %v499 = vld [vmem:[%s436 + $0x8] sm:$0xf]
      %v500 = vld [vmem:[%s436 + $0xc] sm:$0xf]
      %v501 = vld [vmem:[%s436 + $0x10] sm:$0xf]
      %v502 = vld [vmem:[%s436 + $0x14] sm:$0xf]
      %v503 = vld [vmem:[%s436 + $0x18] sm:$0xf]
      %v504 = vld [vmem:[%s436 + $0x1c] sm:$0xf]
      %v505 = vunpack.c.l.bf16 %v497
      %v506 = vunpack.c.l.bf16 %v498
      %v507 = vunpack.c.l.bf16 %v499
      %v508 = vunpack.c.l.bf16 %v500
      %v509 = vunpack.c.l.bf16 %v501
      %v510 = vunpack.c.l.bf16 %v502
      %v511 = vunpack.c.l.bf16 %v503
      %v512 = vunpack.c.l.bf16 %v504
      %v513 = vld [vmem:[%s3] sm:$0x1]
      %v515 = vlaneseq
      %v516 = vshrl.u32 %v515, 7
      %v517 = vsub.s32 0, %v516
      %v518 = vrot.slane %v513, %v517
      %v520 = vmul.f32 %v505, %v518
      %v521 = vmul.f32 %v506, %v518
      %v522 = vmul.f32 %v507, %v518
      %v523 = vmul.f32 %v508, %v518
      %v524 = vmul.f32 %v509, %v518
      %v525 = vmul.f32 %v510, %v518
      %v526 = vmul.f32 %v511, %v518
      %v527 = vmul.f32 %v512, %v518
      %v528 = vld [vmem:[%s4] sm:$0x1]
      %v530 = vlaneseq
      %v531 = vshrl.u32 %v530, 7
      %v532 = vsub.s32 0, %v531
      %v533 = vrot.slane %v528, %v532
      %v535 = vadd.f32 %v520, %v533
      %v536 = vadd.f32 %v521, %v533
      %v537 = vadd.f32 %v522, %v533
      %v538 = vadd.f32 %v523, %v533
      %v539 = vadd.f32 %v524, %v533
      %v540 = vadd.f32 %v525, %v533
      %v541 = vadd.f32 %v526, %v533
      %v542 = vadd.f32 %v527, %v533
      %v543 = vmax.f32 %v535, 0.0
      %v544 = vmax.f32 %v536, 0.0
      %v545 = vmax.f32 %v537, 0.0
      %v546 = vmax.f32 %v538, 0.0
      %v547 = vmax.f32 %v539, 0.0
      %v548 = vmax.f32 %v540, 0.0
      %v549 = vmax.f32 %v541, 0.0
      %v550 = vmax.f32 %v542, 0.0
      %551 = vst [vmem:[#allocation2 + $0x18] sm:$0xff] %v543
      %552 = vst [vmem:[#allocation2 + $0x20] sm:$0xff] %v544
      %553 = vst [vmem:[#allocation2 + $0x28] sm:$0xff] %v545
      %554 = vst [vmem:[#allocation2 + $0x30] sm:$0xff] %v546
      %555 = vst [vmem:[#allocation2 + $0x38] sm:$0xff] %v547
      %556 = vst [vmem:[#allocation2 + $0x40] sm:$0xff] %v548
      %557 = vst [vmem:[#allocation2 + $0x48] sm:$0xff] %v549
      %558 = vst [vmem:[#allocation2 + $0x50] sm:$0xff] %v550
      %v559 = vld [vmem:[%s450] sm:$0xf]
      %v560 = vld [vmem:[%s450 + $0x4] sm:$0xf]
      %v561 = vunpack.c.l.bf16 %v559
      %v562 = vunpack.c.l.bf16 %v560
      %v563 = vld [vmem:[%s3] sm:$0x1]
      %v565 = vlaneseq
      %v566 = vshrl.u32 %v565, 7
      %v567 = vsub.s32 0, %v566
      %v568 = vrot.slane %v563, %v567
      %v570 = vmul.f32 %v561, %v568
      %v571 = vmul.f32 %v562, %v568
      %v572 = vld [vmem:[%s4] sm:$0x1]
      %v574 = vlaneseq
      %v575 = vshrl.u32 %v574, 7
      %v576 = vsub.s32 0, %v575
      %v577 = vrot.slane %v572, %v576
      %v579 = vadd.f32 %v570, %v577
      %v580 = vadd.f32 %v571, %v577
      %v581 = vmax.f32 %v579, 0.0
      %v582 = vmax.f32 %v580, 0.0
      %v583 = vstv %s494
      %v584 = vmul.f32 %v581, %v583
      %v585 = vmul.f32 %v582, %v583
      %586 = vst [vmem:[#allocation2 + $0x8] sm:$0xff] %v584
      %587 = vst [vmem:[#allocation2 + $0x10] sm:$0xff] %v585
      %v588 = vld [vmem:[%s468] sm:$0xf]
      %v589 = vld [vmem:[%s468 + $0x4] sm:$0xf]
      %v590 = vunpack.c.l.bf16 %v588
      %v591 = vunpack.c.l.bf16 %v589
      %v592 = vld [vmem:[%s3] sm:$0x1]
      %v594 = vlaneseq
      %v595 = vshrl.u32 %v594, 7
      %v596 = vsub.s32 0, %v595
      %v597 = vrot.slane %v592, %v596
      %v599 = vmul.f32 %v590, %v597
      %v600 = vmul.f32 %v591, %v597
      %v601 = vld [vmem:[%s4] sm:$0x1]
      %v603 = vlaneseq
      %v604 = vshrl.u32 %v603, 7
      %v605 = vsub.s32 0, %v604
      %v606 = vrot.slane %v601, %v605
      %v608 = vadd.f32 %v599, %v606
      %v609 = vadd.f32 %v600, %v606
      %v610 = vmax.f32 %v608, 0.0
      %v611 = vmax.f32 %v609, 0.0
      %v612 = vstv %s496
      %v613 = vmul.f32 %v610, %v612
      %v614 = vmul.f32 %v611, %v612
      %615 = vst [vmem:[#allocation2 + $0x58] sm:$0xff] %v613
      %616 = vst [vmem:[#allocation2 + $0x60] sm:$0xff] %v614
      %v617 = vlaneseq
      %v618 = vshrl.u32 %v617, 7
      %v619 = vadd.s32 %v618, 8
      %v620 = vadd.s32 %v618, 16
      %v621 = vadd.s32 %v618, 24
      %v622 = vadd.s32 %v618, 32
      %v623 = vadd.s32 %v618, 40
      %v624 = vadd.s32 %v618, 48
      %v625 = vadd.s32 %v618, 56
      %vm626 = vcmp.lt.s32.totalorder %v618, 0
      %v627 = vsub.s32 0, %v618
      %v628 = vsel %vm626, %v627, %v618
      %v629 = vshrl.u32 %v628, 4
      %v630 = vand.u32 %v628, 15
      %v631 = vsub.s32 0, %v630
      %v632 = vsel %vm626, %v631, %v630
      %vm633 = vcmp.lt.s32.totalorder %v619, 0
      %v634 = vsub.s32 0, %v619
      %v635 = vsel %vm633, %v634, %v619
      %v636 = vshrl.u32 %v635, 4
      %v637 = vand.u32 %v635, 15
      %v638 = vsub.s32 0, %v637
      %v639 = vsel %vm633, %v638, %v637
      %vm640 = vcmp.lt.s32.totalorder %v620, 0
      %v641 = vsub.s32 0, %v620
      %v642 = vsel %vm640, %v641, %v620
      %v643 = vshrl.u32 %v642, 4
      %v644 = vand.u32 %v642, 15
      %v645 = vsub.s32 0, %v644
      %v646 = vsel %vm640, %v645, %v644
      %vm647 = vcmp.lt.s32.totalorder %v621, 0
      %v648 = vsub.s32 0, %v621
      %v649 = vsel %vm647, %v648, %v621
      %v650 = vshrl.u32 %v649, 4
      %v651 = vand.u32 %v649, 15
      %v652 = vsub.s32 0, %v651
      %v653 = vsel %vm647, %v652, %v651
      %vm654 = vcmp.lt.s32.totalorder %v622, 0
      %v655 = vsub.s32 0, %v622
      %v656 = vsel %vm654, %v655, %v622
      %v657 = vshrl.u32 %v656, 4
      %v658 = vand.u32 %v656, 15
      %v659 = vsub.s32 0, %v658
      %v660 = vsel %vm654, %v659, %v658
      %vm661 = vcmp.lt.s32.totalorder %v623, 0
      %v662 = vsub.s32 0, %v623
      %v663 = vsel %vm661, %v662, %v623
      %v664 = vshrl.u32 %v663, 4
      %v665 = vand.u32 %v663, 15
      %v666 = vsub.s32 0, %v665
      %v667 = vsel %vm661, %v666, %v665
      %vm668 = vcmp.lt.s32.totalorder %v624, 0
      %v669 = vsub.s32 0, %v624
      %v670 = vsel %vm668, %v669, %v624
      %v671 = vshrl.u32 %v670, 4
      %v672 = vand.u32 %v670, 15
      %v673 = vsub.s32 0, %v672
      %v674 = vsel %vm668, %v673, %v672
      %vm675 = vcmp.lt.s32.totalorder %v625, 0
      %v676 = vsub.s32 0, %v625
      %v677 = vsel %vm675, %v676, %v625
      %v678 = vshrl.u32 %v677, 4
      %v679 = vand.u32 %v677, 15
      %v680 = vsub.s32 0, %v679
      %v681 = vsel %vm675, %v680, %v679
      %vm682 = vcmp.ne.s32.totalorder %v632, 0
      %vm683 = vcmp.ne.s32.totalorder %v639, 0
      %vm684 = vcmp.ne.s32.totalorder %v646, 0
      %vm685 = vcmp.ne.s32.totalorder %v653, 0
      %vm686 = vcmp.ne.s32.totalorder %v660, 0
      %vm687 = vcmp.ne.s32.totalorder %v667, 0
      %vm688 = vcmp.ne.s32.totalorder %v674, 0
      %vm689 = vcmp.ne.s32.totalorder %v681, 0
      %vm690 = vcmp.lt.s32.totalorder %v632, 0
      %vm691 = vcmp.lt.s32.totalorder %v639, 0
      %vm692 = vcmp.lt.s32.totalorder %v646, 0
      %vm693 = vcmp.lt.s32.totalorder %v653, 0
      %vm694 = vcmp.lt.s32.totalorder %v660, 0
      %vm695 = vcmp.lt.s32.totalorder %v667, 0
      %vm696 = vcmp.lt.s32.totalorder %v674, 0
      %vm697 = vcmp.lt.s32.totalorder %v681, 0
      %vm698 = vmand %vm690, %vm682
      %vm699 = vmand %vm691, %vm683
      %vm700 = vmand %vm692, %vm684
      %vm701 = vmand %vm693, %vm685
      %vm702 = vmand %vm694, %vm686
      %vm703 = vmand %vm695, %vm687
      %vm704 = vmand %vm696, %vm688
      %vm705 = vmand %vm697, %vm689
      %v706 = vadd.s32 %v632, 16
      %v707 = vadd.s32 %v639, 16
      %v708 = vadd.s32 %v646, 16
      %v709 = vadd.s32 %v653, 16
      %v710 = vadd.s32 %v660, 16
      %v711 = vadd.s32 %v667, 16
      %v712 = vadd.s32 %v674, 16
      %v713 = vadd.s32 %v681, 16
      %v714 = vsel %vm698, %v706, %v632
      %v715 = vsel %vm699, %v707, %v639
      %v716 = vsel %vm700, %v708, %v646
      %v717 = vsel %vm701, %v709, %v653
      %v718 = vsel %vm702, %v710, %v660
      %v719 = vsel %vm703, %v711, %v667
      %v720 = vsel %vm704, %v712, %v674
      %v721 = vsel %vm705, %v713, %v681
      %vm722 = vcmp.ne.s32.totalorder %v714, 0
      %vm723 = vcmp.ne.s32.totalorder %v715, 0
      %vm724 = vcmp.ne.s32.totalorder %v716, 0
      %vm725 = vcmp.ne.s32.totalorder %v717, 0
      %vm726 = vcmp.ne.s32.totalorder %v718, 0
      %vm727 = vcmp.ne.s32.totalorder %v719, 0
      %vm728 = vcmp.ne.s32.totalorder %v720, 0
      %vm729 = vcmp.ne.s32.totalorder %v721, 0
      %v730 = vsel %vm722, 1, 0
      %v731 = vsel %vm723, 1, 0
      %v732 = vsel %vm724, 1, 0
      %v733 = vsel %vm725, 1, 0
      %v734 = vsel %vm726, 1, 0
      %v735 = vsel %vm727, 1, 0
      %v736 = vsel %vm728, 1, 0
      %v737 = vsel %vm729, 1, 0
      %v738 = vcvt.s32.f32 %v730
      %v739 = vcvt.s32.f32 %v731
      %v740 = vcvt.s32.f32 %v732
      %v741 = vcvt.s32.f32 %v733
      %v742 = vcvt.s32.f32 %v734
      %v743 = vcvt.s32.f32 %v735
      %v744 = vcvt.s32.f32 %v736
      %v745 = vcvt.s32.f32 %v737
      %vm746 = vcmp.ne.s32.totalorder %v714, 15
      %vm747 = vcmp.ne.s32.totalorder %v715, 15
      %vm748 = vcmp.ne.s32.totalorder %v716, 15
      %vm749 = vcmp.ne.s32.totalorder %v717, 15
      %vm750 = vcmp.ne.s32.totalorder %v718, 15
      %vm751 = vcmp.ne.s32.totalorder %v719, 15
      %vm752 = vcmp.ne.s32.totalorder %v720, 15
      %vm753 = vcmp.ne.s32.totalorder %v721, 15
      %v754 = vsel %vm746, 1, 0
      %v755 = vsel %vm747, 1, 0
      %v756 = vsel %vm748, 1, 0
      %v757 = vsel %vm749, 1, 0
      %v758 = vsel %vm750, 1, 0
      %v759 = vsel %vm751, 1, 0
      %v760 = vsel %vm752, 1, 0
      %v761 = vsel %vm753, 1, 0
      %v762 = vcvt.s32.f32 %v754
      %v763 = vcvt.s32.f32 %v755
      %v764 = vcvt.s32.f32 %v756
      %v765 = vcvt.s32.f32 %v757
      %v766 = vcvt.s32.f32 %v758
      %v767 = vcvt.s32.f32 %v759
      %v768 = vcvt.s32.f32 %v760
      %v769 = vcvt.s32.f32 %v761
      %v770 = vld [vmem:[#allocation2 + $0x7] sm:$0xff]
      %v771 = vld [vmem:[#allocation2 + $0xf] sm:$0xff]
      %v772 = vld [vmem:[#allocation2 + $0x17] sm:$0xff]
      %v773 = vld [vmem:[#allocation2 + $0x1f] sm:$0xff]
      %v774 = vld [vmem:[#allocation2 + $0x27] sm:$0xff]
      %v775 = vld [vmem:[#allocation2 + $0x2f] sm:$0xff]
      %v776 = vld [vmem:[#allocation2 + $0x37] sm:$0xff]
      %v777 = vld [vmem:[#allocation2 + $0x3f] sm:$0xff]
      %v778 = vmul.f32 %v770, %v738
      %v779 = vmul.f32 %v771, %v739
      %v780 = vmul.f32 %v772, %v740
      %v781 = vmul.f32 %v773, %v741
      %v782 = vmul.f32 %v774, %v742
      %v783 = vmul.f32 %v775, %v743
      %v784 = vmul.f32 %v776, %v744
      %v785 = vmul.f32 %v777, %v745
      %v786 = vpack.c.bf16 %v779, %v778
      %v787 = vpack.c.bf16 %v781, %v780
      %v788 = vpack.c.bf16 %v783, %v782
      %v789 = vpack.c.bf16 %v785, %v784
      %v790 = vld [vmem:[%s5] sm:$0xf]
      %v791 = vld [vmem:[%s5 + $0x4] sm:$0xf]
      %v792 = vld [vmem:[%s5 + $0x8] sm:$0xf]
      %v793 = vld [vmem:[%s5 + $0xc] sm:$0xf]
      %v794 = vld [vmem:[%s5 + $0x10] sm:$0xf]
      %v795 = vld [vmem:[%s5 + $0x14] sm:$0xf]
      %v796 = vld [vmem:[%s5 + $0x18] sm:$0xf]
      %v797 = vld [vmem:[%s5 + $0x1c] sm:$0xf]
      %v798 = vld [vmem:[%s5 + $0x20] sm:$0xf]
      %v799 = vld [vmem:[%s5 + $0x24] sm:$0xf]
      %v800 = vld [vmem:[%s5 + $0x28] sm:$0xf]
      %v801 = vld [vmem:[%s5 + $0x2c] sm:$0xf]
      %v802 = vld [vmem:[%s5 + $0x30] sm:$0xf]
      %v803 = vld [vmem:[%s5 + $0x34] sm:$0xf]
      %v804 = vld [vmem:[%s5 + $0x38] sm:$0xf]
      %v805 = vld [vmem:[%s5 + $0x3c] sm:$0xf]
      %v806 = vld [vmem:[#allocation2 + $0x8] sm:$0xff]
      %v807 = vld [vmem:[#allocation2 + $0x10] sm:$0xff]
      %v808 = vld [vmem:[#allocation2 + $0x18] sm:$0xff]
      %v809 = vld [vmem:[#allocation2 + $0x20] sm:$0xff]
      %v810 = vld [vmem:[#allocation2 + $0x28] sm:$0xff]
      %v811 = vld [vmem:[#allocation2 + $0x30] sm:$0xff]
      %v812 = vld [vmem:[#allocation2 + $0x38] sm:$0xff]
      %v813 = vld [vmem:[#allocation2 + $0x40] sm:$0xff]
      %v814 = vpack.c.bf16 %v807, %v806
      %v815 = vpack.c.bf16 %v809, %v808
      %v816 = vpack.c.bf16 %v811, %v810
      %v817 = vpack.c.bf16 %v813, %v812
      %s818 = scalar_lea.vmem %s5, 64
      %v819 = vld [vmem:[%s818] sm:$0xf]
      %v820 = vld [vmem:[%s818 + $0x4] sm:$0xf]
      %v821 = vld [vmem:[%s818 + $0x8] sm:$0xf]
      %v822 = vld [vmem:[%s818 + $0xc] sm:$0xf]
      %v823 = vld [vmem:[%s818 + $0x10] sm:$0xf]
      %v824 = vld [vmem:[%s818 + $0x14] sm:$0xf]
      %v825 = vld [vmem:[%s818 + $0x18] sm:$0xf]
      %v826 = vld [vmem:[%s818 + $0x1c] sm:$0xf]
      %v827 = vld [vmem:[%s818 + $0x20] sm:$0xf]
      %v828 = vld [vmem:[%s818 + $0x24] sm:$0xf]
      %v829 = vld [vmem:[%s818 + $0x28] sm:$0xf]
      %v830 = vld [vmem:[%s818 + $0x2c] sm:$0xf]
      %v831 = vld [vmem:[%s818 + $0x30] sm:$0xf]
      %v832 = vld [vmem:[%s818 + $0x34] sm:$0xf]
      %v833 = vld [vmem:[%s818 + $0x38] sm:$0xf]
      %v834 = vld [vmem:[%s818 + $0x3c] sm:$0xf]
      %v851 = vunpack.c.l.b16 %v819
      %v852 = vunpack.c.l.b16 %v820
      %v853 = vunpack.c.l.b16 %v821
      %v854 = vunpack.c.l.b16 %v822
      %v855 = vunpack.c.l.b16 %v823
      %v856 = vunpack.c.l.b16 %v824
      %v857 = vunpack.c.l.b16 %v825
      %v858 = vunpack.c.l.b16 %v826
      %v859 = vunpack.c.l.b16 %v827
      %v860 = vunpack.c.l.b16 %v828
      %v861 = vunpack.c.l.b16 %v829
      %v862 = vunpack.c.l.b16 %v830
      %v863 = vunpack.c.l.b16 %v831
      %v864 = vunpack.c.l.b16 %v832
      %v865 = vunpack.c.l.b16 %v833
      %v866 = vunpack.c.l.b16 %v834
      %v867 = vpack.c.b16 %v852, %v851
      %v868 = vpack.c.b16 %v854, %v853
      %v869 = vpack.c.b16 %v856, %v855
      %v870 = vpack.c.b16 %v858, %v857
      %v871 = vpack.c.b16 %v860, %v859
      %v872 = vpack.c.b16 %v862, %v861
      %v873 = vpack.c.b16 %v864, %v863
      %v874 = vpack.c.b16 %v866, %v865
      %883 = vmatprep.subr.bf16.mxu0 0
      %884 = vmatpush1.bf16.msra.mxu0 %v867
      %885 = vmatprep.subr.bf16.mxu0 0
      %886 = vmatpush1.bf16.msra.mxu0 %v868
      %887 = vmatprep.subr.bf16.mxu0 0
      %888 = vmatpush1.bf16.msra.mxu0 %v869
      %889 = vmatprep.subr.bf16.mxu0 0
      %890 = vmatpush1.bf16.msra.mxu0 %v870
      %891 = vmatprep.subr.bf16.mxu0 0
      %892 = vmatpush1.bf16.msra.mxu0 %v871
      %893 = vmatprep.subr.bf16.mxu0 0
      %894 = vmatpush1.bf16.msra.mxu0 %v872
      %895 = vmatprep.subr.bf16.mxu0 0
      %896 = vmatpush1.bf16.msra.mxu0 %v873
      %897 = vmatprep.subr.bf16.mxu0 0
      %898 = vmatpush1.bf16.msra.mxu0 %v874
      %899 = vmatprep.subr.bf16.mxu0 0
      %900 = vmatpush1.bf16.msra.mxu0 0
      %901 = vmatprep.subr.bf16.mxu0 0
      %902 = vmatpush1.bf16.msra.mxu0 0
      %903 = vmatprep.subr.bf16.mxu0 0
      %904 = vmatpush1.bf16.msra.mxu0 0
      %905 = vmatprep.subr.bf16.mxu0 0
      %906 = vmatpush1.bf16.msra.mxu0 0
      %907 = vmatprep.subr.bf16.mxu0 0
      %908 = vmatpush1.bf16.msra.mxu0 0
      %909 = vmatprep.subr.bf16.mxu0 0
      %910 = vmatpush1.bf16.msra.mxu0 0
      %911 = vmatprep.subr.bf16.mxu0 0
      %912 = vmatpush1.bf16.msra.mxu0 0
      %913 = vmatprep.subr.bf16.mxu0 0
      %914 = vmatpush1.bf16.msra.mxu0 0
      %915 = vmatprep.mubr.bf16.mxu0 0
      %916 = vmatmul.mubr.bf16.gmra.mrb[0].mxu0 %v814
      %v917 = vpop.f32.mrb[0].mxu0
      %v918 = vadd.f32 0.0, %v917
      %v919 = vpop.f32.mrb[0].mxu0
      %v920 = vpop.f32.mrb[0].mxu0
      %v921 = vadd.f32 0.0, %v920
      %v922 = vpop.f32.mrb[0].mxu0
      %923 = vmatprep.mubr.bf16.mxu0 0
      %924 = vmatmul.mubr.bf16.gmra.mrb[0].mxu0 %v815
      %v925 = vpop.f32.mrb[0].mxu0
      %v926 = vadd.f32 0.0, %v925
      %v927 = vpop.f32.mrb[0].mxu0
      %v928 = vpop.f32.mrb[0].mxu0
      %v929 = vadd.f32 0.0, %v928
      %v930 = vpop.f32.mrb[0].mxu0
      %931 = vmatprep.mubr.bf16.mxu0 0
      %932 = vmatmul.mubr.bf16.gmra.mrb[0].mxu0 %v816
      %v933 = vpop.f32.mrb[0].mxu0
      %v934 = vadd.f32 0.0, %v933
      %v935 = vpop.f32.mrb[0].mxu0
      %v936 = vpop.f32.mrb[0].mxu0
      %v937 = vadd.f32 0.0, %v936
      %v938 = vpop.f32.mrb[0].mxu0
      %939 = vmatprep.mubr.bf16.mxu0 0
      %940 = vmatmul.mubr.bf16.gmra.mrb[0].mxu0 %v817
      %v941 = vpop.f32.mrb[0].mxu0
      %v942 = vadd.f32 0.0, %v941
      %v943 = vpop.f32.mrb[0].mxu0
      %v944 = vpop.f32.mrb[0].mxu0
      %v945 = vadd.f32 0.0, %v944
      %v946 = vpop.f32.mrb[0].mxu0
      %947 = vdwg.mxu0
      %v964 = vunpack.c.l.b16 %v790
      %v965 = vunpack.c.l.b16 %v791
      %v966 = vunpack.c.l.b16 %v792
      %v967 = vunpack.c.l.b16 %v793
      %v968 = vunpack.c.l.b16 %v794
      %v969 = vunpack.c.l.b16 %v795
      %v970 = vunpack.c.l.b16 %v796
      %v971 = vunpack.c.l.b16 %v797
      %v972 = vunpack.c.l.b16 %v798
      %v973 = vunpack.c.l.b16 %v799
      %v974 = vunpack.c.l.b16 %v800
      %v975 = vunpack.c.l.b16 %v801
      %v976 = vunpack.c.l.b16 %v802
      %v977 = vunpack.c.l.b16 %v803
      %v978 = vunpack.c.l.b16 %v804
      %v979 = vunpack.c.l.b16 %v805
      %v980 = vpack.c.b16 %v965, %v964
      %v981 = vpack.c.b16 %v967, %v966
      %v982 = vpack.c.b16 %v969, %v968
      %v983 = vpack.c.b16 %v971, %v970
      %v984 = vpack.c.b16 %v973, %v972
      %v985 = vpack.c.b16 %v975, %v974
      %v986 = vpack.c.b16 %v977, %v976
      %v987 = vpack.c.b16 %v979, %v978
      %996 = vmatprep.subr.bf16.mxu0 0
      %997 = vmatpush1.bf16.msra.mxu0 %v980
      %998 = vmatprep.subr.bf16.mxu0 0
      %999 = vmatpush1.bf16.msra.mxu0 %v981
      %1000 = vmatprep.subr.bf16.mxu0 0
      %1001 = vmatpush1.bf16.msra.mxu0 %v982
      %1002 = vmatprep.subr.bf16.mxu0 0
      %1003 = vmatpush1.bf16.msra.mxu0 %v983
      %1004 = vmatprep.subr.bf16.mxu0 0
      %1005 = vmatpush1.bf16.msra.mxu0 %v984
      %1006 = vmatprep.subr.bf16.mxu0 0
      %1007 = vmatpush1.bf16.msra.mxu0 %v985
      %1008 = vmatprep.subr.bf16.mxu0 0
      %1009 = vmatpush1.bf16.msra.mxu0 %v986
      %1010 = vmatprep.subr.bf16.mxu0 0
      %1011 = vmatpush1.bf16.msra.mxu0 %v987
      %1012 = vmatprep.subr.bf16.mxu0 0
      %1013 = vmatpush1.bf16.msra.mxu0 0
      %1014 = vmatprep.subr.bf16.mxu0 0
      %1015 = vmatpush1.bf16.msra.mxu0 0
      %1016 = vmatprep.subr.bf16.mxu0 0
      %1017 = vmatpush1.bf16.msra.mxu0 0
      %1018 = vmatprep.subr.bf16.mxu0 0
      %1019 = vmatpush1.bf16.msra.mxu0 0
      %1020 = vmatprep.subr.bf16.mxu0 0
      %1021 = vmatpush1.bf16.msra.mxu0 0
      %1022 = vmatprep.subr.bf16.mxu0 0
      %1023 = vmatpush1.bf16.msra.mxu0 0
      %1024 = vmatprep.subr.bf16.mxu0 0
      %1025 = vmatpush1.bf16.msra.mxu0 0
      %1026 = vmatprep.subr.bf16.mxu0 0
      %1027 = vmatpush1.bf16.msra.mxu0 0
      %1028 = vmatprep.mubr.bf16.mxu0 0
      %1029 = vmatmul.mubr.bf16.gmra.mrb[0].mxu0 %v786
      %v1030 = vpop.f32.mrb[0].mxu0
      %v1031 = vadd.f32 %v918, %v1030
      %v1032 = vpop.f32.mrb[0].mxu0
      %v1033 = vpop.f32.mrb[0].mxu0
      %v1034 = vadd.f32 %v921, %v1033
      %v1035 = vpop.f32.mrb[0].mxu0
      %1036 = vmatprep.mubr.bf16.mxu0 0
      %1037 = vmatmul.mubr.bf16.gmra.mrb[0].mxu0 %v787
      %v1038 = vpop.f32.mrb[0].mxu0
      %v1039 = vadd.f32 %v926, %v1038
      %v1040 = vpop.f32.mrb[0].mxu0
      %v1041 = vpop.f32.mrb[0].mxu0
      %v1042 = vadd.f32 %v929, %v1041
      %v1043 = vpop.f32.mrb[0].mxu0
      %1044 = vmatprep.mubr.bf16.mxu0 0
      %1045 = vmatmul.mubr.bf16.gmra.mrb[0].mxu0 %v788
      %v1046 = vpop.f32.mrb[0].mxu0
      %v1047 = vadd.f32 %v934, %v1046
      %v1048 = vpop.f32.mrb[0].mxu0
      %v1049 = vpop.f32.mrb[0].mxu0
      %v1050 = vadd.f32 %v937, %v1049
      %v1051 = vpop.f32.mrb[0].mxu0
      %1052 = vmatprep.mubr.bf16.mxu0 0
      %1053 = vmatmul.mubr.bf16.gmra.mrb[0].mxu0 %v789
      %v1054 = vpop.f32.mrb[0].mxu0
      %v1055 = vadd.f32 %v942, %v1054
      %v1056 = vpop.f32.mrb[0].mxu0
      %v1057 = vpop.f32.mrb[0].mxu0
      %v1058 = vadd.f32 %v945, %v1057
      %v1059 = vpop.f32.mrb[0].mxu0
      %1060 = vdwg.mxu0
      %v1061 = vld [vmem:[#allocation2 + $0x9] sm:$0xff]
      %v1062 = vld [vmem:[#allocation2 + $0x11] sm:$0xff]
      %v1063 = vld [vmem:[#allocation2 + $0x19] sm:$0xff]
      %v1064 = vld [vmem:[#allocation2 + $0x21] sm:$0xff]
      %v1065 = vld [vmem:[#allocation2 + $0x29] sm:$0xff]
      %v1066 = vld [vmem:[#allocation2 + $0x31] sm:$0xff]
      %v1067 = vld [vmem:[#allocation2 + $0x39] sm:$0xff]
      %v1068 = vld [vmem:[#allocation2 + $0x41] sm:$0xff]
      %v1069 = vmul.f32 %v1061, %v762
      %v1070 = vmul.f32 %v1062, %v763
      %v1071 = vmul.f32 %v1063, %v764
      %v1072 = vmul.f32 %v1064, %v765
      %v1073 = vmul.f32 %v1065, %v766
      %v1074 = vmul.f32 %v1066, %v767
      %v1075 = vmul.f32 %v1067, %v768
      %v1076 = vmul.f32 %v1068, %v769
      %v1077 = vpack.c.bf16 %v1070, %v1069
      %v1078 = vpack.c.bf16 %v1072, %v1071
      %v1079 = vpack.c.bf16 %v1074, %v1073
      %v1080 = vpack.c.bf16 %v1076, %v1075
      %s1081 = scalar_lea.vmem %s5, 128
      %v1082 = vld [vmem:[%s1081] sm:$0xf]
      %v1083 = vld [vmem:[%s1081 + $0x4] sm:$0xf]
      %v1084 = vld [vmem:[%s1081 + $0x8] sm:$0xf]
      %v1085 = vld [vmem:[%s1081 + $0xc] sm:$0xf]
      %v1086 = vld [vmem:[%s1081 + $0x10] sm:$0xf]
      %v1087 = vld [vmem:[%s1081 + $0x14] sm:$0xf]
      %v1088 = vld [vmem:[%s1081 + $0x18] sm:$0xf]
      %v1089 = vld [vmem:[%s1081 + $0x1c] sm:$0xf]
      %v1090 = vld [vmem:[%s1081 + $0x20] sm:$0xf]
      %v1091 = vld [vmem:[%s1081 + $0x24] sm:$0xf]
      %v1092 = vld [vmem:[%s1081 + $0x28] sm:$0xf]
      %v1093 = vld [vmem:[%s1081 + $0x2c] sm:$0xf]
      %v1094 = vld [vmem:[%s1081 + $0x30] sm:$0xf]
      %v1095 = vld [vmem:[%s1081 + $0x34] sm:$0xf]
      %v1096 = vld [vmem:[%s1081 + $0x38] sm:$0xf]
      %v1097 = vld [vmem:[%s1081 + $0x3c] sm:$0xf]
      %v1114 = vunpack.c.l.b16 %v1082
      %v1115 = vunpack.c.l.b16 %v1083
      %v1116 = vunpack.c.l.b16 %v1084
      %v1117 = vunpack.c.l.b16 %v1085
      %v1118 = vunpack.c.l.b16 %v1086
      %v1119 = vunpack.c.l.b16 %v1087
      %v1120 = vunpack.c.l.b16 %v1088
      %v1121 = vunpack.c.l.b16 %v1089
      %v1122 = vunpack.c.l.b16 %v1090
      %v1123 = vunpack.c.l.b16 %v1091
      %v1124 = vunpack.c.l.b16 %v1092
      %v1125 = vunpack.c.l.b16 %v1093
      %v1126 = vunpack.c.l.b16 %v1094
      %v1127 = vunpack.c.l.b16 %v1095
      %v1128 = vunpack.c.l.b16 %v1096
      %v1129 = vunpack.c.l.b16 %v1097
      %v1130 = vpack.c.b16 %v1115, %v1114
      %v1131 = vpack.c.b16 %v1117, %v1116
      %v1132 = vpack.c.b16 %v1119, %v1118
      %v1133 = vpack.c.b16 %v1121, %v1120
      %v1134 = vpack.c.b16 %v1123, %v1122
      %v1135 = vpack.c.b16 %v1125, %v1124
      %v1136 = vpack.c.b16 %v1127, %v1126
      %v1137 = vpack.c.b16 %v1129, %v1128
      %1146 = vmatprep.subr.bf16.mxu0 0
      %1147 = vmatpush1.bf16.msra.mxu0 %v1130
      %1148 = vmatprep.subr.bf16.mxu0 0
      %1149 = vmatpush1.bf16.msra.mxu0 %v1131
      %1150 = vmatprep.subr.bf16.mxu0 0
      %1151 = vmatpush1.bf16.msra.mxu0 %v1132
      %1152 = vmatprep.subr.bf16.mxu0 0
      %1153 = vmatpush1.bf16.msra.mxu0 %v1133
      %1154 = vmatprep.subr.bf16.mxu0 0
      %1155 = vmatpush1.bf16.msra.mxu0 %v1134
      %1156 = vmatprep.subr.bf16.mxu0 0
      %1157 = vmatpush1.bf16.msra.mxu0 %v1135
      %1158 = vmatprep.subr.bf16.mxu0 0
      %1159 = vmatpush1.bf16.msra.mxu0 %v1136
      %1160 = vmatprep.subr.bf16.mxu0 0
      %1161 = vmatpush1.bf16.msra.mxu0 %v1137
      %1162 = vmatprep.subr.bf16.mxu0 0
      %1163 = vmatpush1.bf16.msra.mxu0 0
      %1164 = vmatprep.subr.bf16.mxu0 0
      %1165 = vmatpush1.bf16.msra.mxu0 0
      %1166 = vmatprep.subr.bf16.mxu0 0
      %1167 = vmatpush1.bf16.msra.mxu0 0
      %1168 = vmatprep.subr.bf16.mxu0 0
      %1169 = vmatpush1.bf16.msra.mxu0 0
      %1170 = vmatprep.subr.bf16.mxu0 0
      %1171 = vmatpush1.bf16.msra.mxu0 0
      %1172 = vmatprep.subr.bf16.mxu0 0
      %1173 = vmatpush1.bf16.msra.mxu0 0
      %1174 = vmatprep.subr.bf16.mxu0 0
      %1175 = vmatpush1.bf16.msra.mxu0 0
      %1176 = vmatprep.subr.bf16.mxu0 0
      %1177 = vmatpush1.bf16.msra.mxu0 0
      %1178 = vmatprep.mubr.bf16.mxu0 0
      %1179 = vmatmul.mubr.bf16.gmra.mrb[0].mxu0 %v1077
      %v1180 = vpop.f32.mrb[0].mxu0
      %v1181 = vadd.f32 0.0, %v1180
      %v1182 = vpop.f32.mrb[0].mxu0
      %v1183 = vpop.f32.mrb[0].mxu0
      %v1184 = vadd.f32 0.0, %v1183
      %v1185 = vpop.f32.mrb[0].mxu0
      %1186 = vmatprep.mubr.bf16.mxu0 0
      %1187 = vmatmul.mubr.bf16.gmra.mrb[0].mxu0 %v1078
      %v1188 = vpop.f32.mrb[0].mxu0
      %v1189 = vadd.f32 0.0, %v1188
      %v1190 = vpop.f32.mrb[0].mxu0
      %v1191 = vpop.f32.mrb[0].mxu0
      %v1192 = vadd.f32 0.0, %v1191
      %v1193 = vpop.f32.mrb[0].mxu0
      %1194 = vmatprep.mubr.bf16.mxu0 0
      %1195 = vmatmul.mubr.bf16.gmra.mrb[0].mxu0 %v1079
      %v1196 = vpop.f32.mrb[0].mxu0
      %v1197 = vadd.f32 0.0, %v1196
      %v1198 = vpop.f32.mrb[0].mxu0
      %v1199 = vpop.f32.mrb[0].mxu0
      %v1200 = vadd.f32 0.0, %v1199
      %v1201 = vpop.f32.mrb[0].mxu0
      %1202 = vmatprep.mubr.bf16.mxu0 0
      %1203 = vmatmul.mubr.bf16.gmra.mrb[0].mxu0 %v1080
      %v1204 = vpop.f32.mrb[0].mxu0
      %v1205 = vadd.f32 0.0, %v1204
      %v1206 = vpop.f32.mrb[0].mxu0
      %v1207 = vpop.f32.mrb[0].mxu0
      %v1208 = vadd.f32 0.0, %v1207
      %v1209 = vpop.f32.mrb[0].mxu0
      %1210 = vdwg.mxu0
      %v1211 = vadd.f32 %v1031, %v1181
      %v1212 = vadd.f32 %v1034, %v1184
      %v1213 = vadd.f32 %v1039, %v1189
      %v1214 = vadd.f32 %v1042, %v1192
      %v1215 = vadd.f32 %v1047, %v1197
      %v1216 = vadd.f32 %v1050, %v1200
      %v1217 = vadd.f32 %v1055, %v1205
      %v1218 = vadd.f32 %v1058, %v1208
      %v1219 = vld [vmem:[#allocation2 + $0x17] sm:$0xff]
      %v1220 = vld [vmem:[#allocation2 + $0x1f] sm:$0xff]
      %v1221 = vld [vmem:[#allocation2 + $0x27] sm:$0xff]
      %v1222 = vld [vmem:[#allocation2 + $0x2f] sm:$0xff]
      %v1223 = vld [vmem:[#allocation2 + $0x37] sm:$0xff]
      %v1224 = vld [vmem:[#allocation2 + $0x3f] sm:$0xff]
      %v1225 = vld [vmem:[#allocation2 + $0x47] sm:$0xff]
      %v1226 = vld [vmem:[#allocation2 + $0x4f] sm:$0xff]
      %v1227 = vmul.f32 %v1219, %v738
      %v1228 = vmul.f32 %v1220, %v739
      %v1229 = vmul.f32 %v1221, %v740
      %v1230 = vmul.f32 %v1222, %v741
      %v1231 = vmul.f32 %v1223, %v742
      %v1232 = vmul.f32 %v1224, %v743
      %v1233 = vmul.f32 %v1225, %v744
      %v1234 = vmul.f32 %v1226, %v745
      %v1235 = vpack.c.bf16 %v1228, %v1227
      %v1236 = vpack.c.bf16 %v1230, %v1229
      %v1237 = vpack.c.bf16 %v1232, %v1231
      %v1238 = vpack.c.bf16 %v1234, %v1233
      %s1239 = scalar_lea.vmem %s5, 192
      %v1240 = vld [vmem:[%s1239] sm:$0xf]
      %v1241 = vld [vmem:[%s1239 + $0x4] sm:$0xf]
      %v1242 = vld [vmem:[%s1239 + $0x8] sm:$0xf]
      %v1243 = vld [vmem:[%s1239 + $0xc] sm:$0xf]
      %v1244 = vld [vmem:[%s1239 + $0x10] sm:$0xf]
      %v1245 = vld [vmem:[%s1239 + $0x14] sm:$0xf]
      %v1246 = vld [vmem:[%s1239 + $0x18] sm:$0xf]
      %v1247 = vld [vmem:[%s1239 + $0x1c] sm:$0xf]
      %v1248 = vld [vmem:[%s1239 + $0x20] sm:$0xf]
      %v1249 = vld [vmem:[%s1239 + $0x24] sm:$0xf]
      %v1250 = vld [vmem:[%s1239 + $0x28] sm:$0xf]
      %v1251 = vld [vmem:[%s1239 + $0x2c] sm:$0xf]
      %v1252 = vld [vmem:[%s1239 + $0x30] sm:$0xf]
      %v1253 = vld [vmem:[%s1239 + $0x34] sm:$0xf]
      %v1254 = vld [vmem:[%s1239 + $0x38] sm:$0xf]
      %v1255 = vld [vmem:[%s1239 + $0x3c] sm:$0xf]
      %v1272 = vunpack.c.l.b16 %v1240
      %v1273 = vunpack.c.l.b16 %v1241
      %v1274 = vunpack.c.l.b16 %v1242
      %v1275 = vunpack.c.l.b16 %v1243
      %v1276 = vunpack.c.l.b16 %v1244
      %v1277 = vunpack.c.l.b16 %v1245
      %v1278 = vunpack.c.l.b16 %v1246
      %v1279 = vunpack.c.l.b16 %v1247
      %v1280 = vunpack.c.l.b16 %v1248
      %v1281 = vunpack.c.l.b16 %v1249
      %v1282 = vunpack.c.l.b16 %v1250
      %v1283 = vunpack.c.l.b16 %v1251
      %v1284 = vunpack.c.l.b16 %v1252
      %v1285 = vunpack.c.l.b16 %v1253
      %v1286 = vunpack.c.l.b16 %v1254
      %v1287 = vunpack.c.l.b16 %v1255
      %v1288 = vpack.c.b16 %v1273, %v1272
      %v1289 = vpack.c.b16 %v1275, %v1274
      %v1290 = vpack.c.b16 %v1277, %v1276
      %v1291 = vpack.c.b16 %v1279, %v1278
      %v1292 = vpack.c.b16 %v1281, %v1280
      %v1293 = vpack.c.b16 %v1283, %v1282
      %v1294 = vpack.c.b16 %v1285, %v1284
      %v1295 = vpack.c.b16 %v1287, %v1286
      %1304 = vmatprep.subr.bf16.mxu0 0
      %1305 = vmatpush1.bf16.msra.mxu0 %v1288
      %1306 = vmatprep.subr.bf16.mxu0 0
      %1307 = vmatpush1.bf16.msra.mxu0 %v1289
      %1308 = vmatprep.subr.bf16.mxu0 0
      %1309 = vmatpush1.bf16.msra.mxu0 %v1290
      %1310 = vmatprep.subr.bf16.mxu0 0
      %1311 = vmatpush1.bf16.msra.mxu0 %v1291
      %1312 = vmatprep.subr.bf16.mxu0 0
      %1313 = vmatpush1.bf16.msra.mxu0 %v1292
      %1314 = vmatprep.subr.bf16.mxu0 0
      %1315 = vmatpush1.bf16.msra.mxu0 %v1293
      %1316 = vmatprep.subr.bf16.mxu0 0
      %1317 = vmatpush1.bf16.msra.mxu0 %v1294
      %1318 = vmatprep.subr.bf16.mxu0 0
      %1319 = vmatpush1.bf16.msra.mxu0 %v1295
      %1320 = vmatprep.subr.bf16.mxu0 0
      %1321 = vmatpush1.bf16.msra.mxu0 0
      %1322 = vmatprep.subr.bf16.mxu0 0
      %1323 = vmatpush1.bf16.msra.mxu0 0
      %1324 = vmatprep.subr.bf16.mxu0 0
      %1325 = vmatpush1.bf16.msra.mxu0 0
      %1326 = vmatprep.subr.bf16.mxu0 0
      %1327 = vmatpush1.bf16.msra.mxu0 0
      %1328 = vmatprep.subr.bf16.mxu0 0
      %1329 = vmatpush1.bf16.msra.mxu0 0
      %1330 = vmatprep.subr.bf16.mxu0 0
      %1331 = vmatpush1.bf16.msra.mxu0 0
      %1332 = vmatprep.subr.bf16.mxu0 0
      %1333 = vmatpush1.bf16.msra.mxu0 0
      %1334 = vmatprep.subr.bf16.mxu0 0
      %1335 = vmatpush1.bf16.msra.mxu0 0
      %1336 = vmatprep.mubr.bf16.mxu0 0
      %1337 = vmatmul.mubr.bf16.gmra.mrb[0].mxu0 %v1235
      %v1338 = vpop.f32.mrb[0].mxu0
      %v1339 = vadd.f32 0.0, %v1338
      %v1340 = vpop.f32.mrb[0].mxu0
      %v1341 = vpop.f32.mrb[0].mxu0
      %v1342 = vadd.f32 0.0, %v1341
      %v1343 = vpop.f32.mrb[0].mxu0
      %1344 = vmatprep.mubr.bf16.mxu0 0
      %1345 = vmatmul.mubr.bf16.gmra.mrb[0].mxu0 %v1236
      %v1346 = vpop.f32.mrb[0].mxu0
      %v1347 = vadd.f32 0.0, %v1346
      %v1348 = vpop.f32.mrb[0].mxu0
      %v1349 = vpop.f32.mrb[0].mxu0
      %v1350 = vadd.f32 0.0, %v1349
      %v1351 = vpop.f32.mrb[0].mxu0
      %1352 = vmatprep.mubr.bf16.mxu0 0
      %1353 = vmatmul.mubr.bf16.gmra.mrb[0].mxu0 %v1237
      %v1354 = vpop.f32.mrb[0].mxu0
      %v1355 = vadd.f32 0.0, %v1354
      %v1356 = vpop.f32.mrb[0].mxu0
      %v1357 = vpop.f32.mrb[0].mxu0
      %v1358 = vadd.f32 0.0, %v1357
      %v1359 = vpop.f32.mrb[0].mxu0
      %1360 = vmatprep.mubr.bf16.mxu0 0
      %1361 = vmatmul.mubr.bf16.gmra.mrb[0].mxu0 %v1238
      %v1362 = vpop.f32.mrb[0].mxu0
      %v1363 = vadd.f32 0.0, %v1362
      %v1364 = vpop.f32.mrb[0].mxu0
      %v1365 = vpop.f32.mrb[0].mxu0
      %v1366 = vadd.f32 0.0, %v1365
      %v1367 = vpop.f32.mrb[0].mxu0
      %1368 = vdwg.mxu0
      %v1369 = vadd.f32 %v1211, %v1339
      %v1370 = vadd.f32 %v1212, %v1342
      %v1371 = vadd.f32 %v1213, %v1347
      %v1372 = vadd.f32 %v1214, %v1350
      %v1373 = vadd.f32 %v1215, %v1355
      %v1374 = vadd.f32 %v1216, %v1358
      %v1375 = vadd.f32 %v1217, %v1363
      %v1376 = vadd.f32 %v1218, %v1366
      %v1377 = vld [vmem:[#allocation2 + $0x18] sm:$0xff]
      %v1378 = vld [vmem:[#allocation2 + $0x20] sm:$0xff]
      %v1379 = vld [vmem:[#allocation2 + $0x28] sm:$0xff]
      %v1380 = vld [vmem:[#allocation2 + $0x30] sm:$0xff]
      %v1381 = vld [vmem:[#allocation2 + $0x38] sm:$0xff]
      %v1382 = vld [vmem:[#allocation2 + $0x40] sm:$0xff]
      %v1383 = vld [vmem:[#allocation2 + $0x48] sm:$0xff]
      %v1384 = vld [vmem:[#allocation2 + $0x50] sm:$0xff]
      %v1385 = vpack.c.bf16 %v1378, %v1377
      %v1386 = vpack.c.bf16 %v1380, %v1379
      %v1387 = vpack.c.bf16 %v1382, %v1381
      %v1388 = vpack.c.bf16 %v1384, %v1383
      %s1389 = scalar_lea.vmem %s5, 256
      %v1390 = vld [vmem:[%s1389] sm:$0xf]
      %v1391 = vld [vmem:[%s1389 + $0x4] sm:$0xf]
      %v1392 = vld [vmem:[%s1389 + $0x8] sm:$0xf]
      %v1393 = vld [vmem:[%s1389 + $0xc] sm:$0xf]
      %v1394 = vld [vmem:[%s1389 + $0x10] sm:$0xf]
      %v1395 = vld [vmem:[%s1389 + $0x14] sm:$0xf]
      %v1396 = vld [vmem:[%s1389 + $0x18] sm:$0xf]
      %v1397 = vld [vmem:[%s1389 + $0x1c] sm:$0xf]
      %v1398 = vld [vmem:[%s1389 + $0x20] sm:$0xf]
      %v1399 = vld [vmem:[%s1389 + $0x24] sm:$0xf]
      %v1400 = vld [vmem:[%s1389 + $0x28] sm:$0xf]
      %v1401 = vld [vmem:[%s1389 + $0x2c] sm:$0xf]
      %v1402 = vld [vmem:[%s1389 + $0x30] sm:$0xf]
      %v1403 = vld [vmem:[%s1389 + $0x34] sm:$0xf]
      %v1404 = vld [vmem:[%s1389 + $0x38] sm:$0xf]
      %v1405 = vld [vmem:[%s1389 + $0x3c] sm:$0xf]
      %v1422 = vunpack.c.l.b16 %v1390
      %v1423 = vunpack.c.l.b16 %v1391
      %v1424 = vunpack.c.l.b16 %v1392
      %v1425 = vunpack.c.l.b16 %v1393
      %v1426 = vunpack.c.l.b16 %v1394
      %v1427 = vunpack.c.l.b16 %v1395
      %v1428 = vunpack.c.l.b16 %v1396
      %v1429 = vunpack.c.l.b16 %v1397
      %v1430 = vunpack.c.l.b16 %v1398
      %v1431 = vunpack.c.l.b16 %v1399
      %v1432 = vunpack.c.l.b16 %v1400
      %v1433 = vunpack.c.l.b16 %v1401
      %v1434 = vunpack.c.l.b16 %v1402
      %v1435 = vunpack.c.l.b16 %v1403
      %v1436 = vunpack.c.l.b16 %v1404
      %v1437 = vunpack.c.l.b16 %v1405
      %v1438 = vpack.c.b16 %v1423, %v1422
      %v1439 = vpack.c.b16 %v1425, %v1424
      %v1440 = vpack.c.b16 %v1427, %v1426
      %v1441 = vpack.c.b16 %v1429, %v1428
      %v1442 = vpack.c.b16 %v1431, %v1430
      %v1443 = vpack.c.b16 %v1433, %v1432
      %v1444 = vpack.c.b16 %v1435, %v1434
      %v1445 = vpack.c.b16 %v1437, %v1436
      %1454 = vmatprep.subr.bf16.mxu0 0
      %1455 = vmatpush1.bf16.msra.mxu0 %v1438
      %1456 = vmatprep.subr.bf16.mxu0 0
      %1457 = vmatpush1.bf16.msra.mxu0 %v1439
      %1458 = vmatprep.subr.bf16.mxu0 0
      %1459 = vmatpush1.bf16.msra.mxu0 %v1440
      %1460 = vmatprep.subr.bf16.mxu0 0
      %1461 = vmatpush1.bf16.msra.mxu0 %v1441
      %1462 = vmatprep.subr.bf16.mxu0 0
      %1463 = vmatpush1.bf16.msra.mxu0 %v1442
      %1464 = vmatprep.subr.bf16.mxu0 0
      %1465 = vmatpush1.bf16.msra.mxu0 %v1443
      %1466 = vmatprep.subr.bf16.mxu0 0
      %1467 = vmatpush1.bf16.msra.mxu0 %v1444
      %1468 = vmatprep.subr.bf16.mxu0 0
      %1469 = vmatpush1.bf16.msra.mxu0 %v1445
      %1470 = vmatprep.subr.bf16.mxu0 0
      %1471 = vmatpush1.bf16.msra.mxu0 0
      %1472 = vmatprep.subr.bf16.mxu0 0
      %1473 = vmatpush1.bf16.msra.mxu0 0
      %1474 = vmatprep.subr.bf16.mxu0 0
      %1475 = vmatpush1.bf16.msra.mxu0 0
      %1476 = vmatprep.subr.bf16.mxu0 0
      %1477 = vmatpush1.bf16.msra.mxu0 0
      %1478 = vmatprep.subr.bf16.mxu0 0
      %1479 = vmatpush1.bf16.msra.mxu0 0
      %1480 = vmatprep.subr.bf16.mxu0 0
      %1481 = vmatpush1.bf16.msra.mxu0 0
      %1482 = vmatprep.subr.bf16.mxu0 0
      %1483 = vmatpush1.bf16.msra.mxu0 0
      %1484 = vmatprep.subr.bf16.mxu0 0
      %1485 = vmatpush1.bf16.msra.mxu0 0
      %1486 = vmatprep.mubr.bf16.mxu0 0
      %1487 = vmatmul.mubr.bf16.gmra.mrb[0].mxu0 %v1385
      %v1488 = vpop.f32.mrb[0].mxu0
      %v1489 = vadd.f32 0.0, %v1488
      %v1490 = vpop.f32.mrb[0].mxu0
      %v1491 = vpop.f32.mrb[0].mxu0
      %v1492 = vadd.f32 0.0, %v1491
      %v1493 = vpop.f32.mrb[0].mxu0
      %1494 = vmatprep.mubr.bf16.mxu0 0
      %1495 = vmatmul.mubr.bf16.gmra.mrb[0].mxu0 %v1386
      %v1496 = vpop.f32.mrb[0].mxu0
      %v1497 = vadd.f32 0.0, %v1496
      %v1498 = vpop.f32.mrb[0].mxu0
      %v1499 = vpop.f32.mrb[0].mxu0
      %v1500 = vadd.f32 0.0, %v1499
      %v1501 = vpop.f32.mrb[0].mxu0
      %1502 = vmatprep.mubr.bf16.mxu0 0
      %1503 = vmatmul.mubr.bf16.gmra.mrb[0].mxu0 %v1387
      %v1504 = vpop.f32.mrb[0].mxu0
      %v1505 = vadd.f32 0.0, %v1504
      %v1506 = vpop.f32.mrb[0].mxu0
      %v1507 = vpop.f32.mrb[0].mxu0
      %v1508 = vadd.f32 0.0, %v1507
      %v1509 = vpop.f32.mrb[0].mxu0
      %1510 = vmatprep.mubr.bf16.mxu0 0
      %1511 = vmatmul.mubr.bf16.gmra.mrb[0].mxu0 %v1388
      %v1512 = vpop.f32.mrb[0].mxu0
      %v1513 = vadd.f32 0.0, %v1512
      %v1514 = vpop.f32.mrb[0].mxu0
      %v1515 = vpop.f32.mrb[0].mxu0
      %v1516 = vadd.f32 0.0, %v1515
      %v1517 = vpop.f32.mrb[0].mxu0
      %1518 = vdwg.mxu0
      %v1519 = vadd.f32 %v1369, %v1489
      %v1520 = vadd.f32 %v1370, %v1492
      %v1521 = vadd.f32 %v1371, %v1497
      %v1522 = vadd.f32 %v1372, %v1500
      %v1523 = vadd.f32 %v1373, %v1505
      %v1524 = vadd.f32 %v1374, %v1508
      %v1525 = vadd.f32 %v1375, %v1513
      %v1526 = vadd.f32 %v1376, %v1516
      %v1527 = vld [vmem:[#allocation2 + $0x19] sm:$0xff]
      %v1528 = vld [vmem:[#allocation2 + $0x21] sm:$0xff]
      %v1529 = vld [vmem:[#allocation2 + $0x29] sm:$0xff]
      %v1530 = vld [vmem:[#allocation2 + $0x31] sm:$0xff]
      %v1531 = vld [vmem:[#allocation2 + $0x39] sm:$0xff]
      %v1532 = vld [vmem:[#allocation2 + $0x41] sm:$0xff]
      %v1533 = vld [vmem:[#allocation2 + $0x49] sm:$0xff]
      %v1534 = vld [vmem:[#allocation2 + $0x51] sm:$0xff]
      %v1535 = vmul.f32 %v1527, %v762
      %v1536 = vmul.f32 %v1528, %v763
      %v1537 = vmul.f32 %v1529, %v764
      %v1538 = vmul.f32 %v1530, %v765
      %v1539 = vmul.f32 %v1531, %v766
      %v1540 = vmul.f32 %v1532, %v767
      %v1541 = vmul.f32 %v1533, %v768
      %v1542 = vmul.f32 %v1534, %v769
      %v1543 = vpack.c.bf16 %v1536, %v1535
      %v1544 = vpack.c.bf16 %v1538, %v1537
      %v1545 = vpack.c.bf16 %v1540, %v1539
      %v1546 = vpack.c.bf16 %v1542, %v1541
      %s1547 = scalar_lea.vmem %s5, 320
      %v1548 = vld [vmem:[%s1547] sm:$0xf]
      %v1549 = vld [vmem:[%s1547 + $0x4] sm:$0xf]
      %v1550 = vld [vmem:[%s1547 + $0x8] sm:$0xf]
      %v1551 = vld [vmem:[%s1547 + $0xc] sm:$0xf]
      %v1552 = vld [vmem:[%s1547 + $0x10] sm:$0xf]
      %v1553 = vld [vmem:[%s1547 + $0x14] sm:$0xf]
      %v1554 = vld [vmem:[%s1547 + $0x18] sm:$0xf]
      %v1555 = vld [vmem:[%s1547 + $0x1c] sm:$0xf]
      %v1556 = vld [vmem:[%s1547 + $0x20] sm:$0xf]
      %v1557 = vld [vmem:[%s1547 + $0x24] sm:$0xf]
      %v1558 = vld [vmem:[%s1547 + $0x28] sm:$0xf]
      %v1559 = vld [vmem:[%s1547 + $0x2c] sm:$0xf]
      %v1560 = vld [vmem:[%s1547 + $0x30] sm:$0xf]
      %v1561 = vld [vmem:[%s1547 + $0x34] sm:$0xf]
      %v1562 = vld [vmem:[%s1547 + $0x38] sm:$0xf]
      %v1563 = vld [vmem:[%s1547 + $0x3c] sm:$0xf]
      %v1580 = vunpack.c.l.b16 %v1548
      %v1581 = vunpack.c.l.b16 %v1549
      %v1582 = vunpack.c.l.b16 %v1550
      %v1583 = vunpack.c.l.b16 %v1551
      %v1584 = vunpack.c.l.b16 %v1552
      %v1585 = vunpack.c.l.b16 %v1553
      %v1586 = vunpack.c.l.b16 %v1554
      %v1587 = vunpack.c.l.b16 %v1555
      %v1588 = vunpack.c.l.b16 %v1556
      %v1589 = vunpack.c.l.b16 %v1557
      %v1590 = vunpack.c.l.b16 %v1558
      %v1591 = vunpack.c.l.b16 %v1559
      %v1592 = vunpack.c.l.b16 %v1560
      %v1593 = vunpack.c.l.b16 %v1561
      %v1594 = vunpack.c.l.b16 %v1562
      %v1595 = vunpack.c.l.b16 %v1563
      %v1596 = vpack.c.b16 %v1581, %v1580
      %v1597 = vpack.c.b16 %v1583, %v1582
      %v1598 = vpack.c.b16 %v1585, %v1584
      %v1599 = vpack.c.b16 %v1587, %v1586
      %v1600 = vpack.c.b16 %v1589, %v1588
      %v1601 = vpack.c.b16 %v1591, %v1590
      %v1602 = vpack.c.b16 %v1593, %v1592
      %v1603 = vpack.c.b16 %v1595, %v1594
      %1612 = vmatprep.subr.bf16.mxu0 0
      %1613 = vmatpush1.bf16.msra.mxu0 %v1596
      %1614 = vmatprep.subr.bf16.mxu0 0
      %1615 = vmatpush1.bf16.msra.mxu0 %v1597
      %1616 = vmatprep.subr.bf16.mxu0 0
      %1617 = vmatpush1.bf16.msra.mxu0 %v1598
      %1618 = vmatprep.subr.bf16.mxu0 0
      %1619 = vmatpush1.bf16.msra.mxu0 %v1599
      %1620 = vmatprep.subr.bf16.mxu0 0
      %1621 = vmatpush1.bf16.msra.mxu0 %v1600
      %1622 = vmatprep.subr.bf16.mxu0 0
      %1623 = vmatpush1.bf16.msra.mxu0 %v1601
      %1624 = vmatprep.subr.bf16.mxu0 0
      %1625 = vmatpush1.bf16.msra.mxu0 %v1602
      %1626 = vmatprep.subr.bf16.mxu0 0
      %1627 = vmatpush1.bf16.msra.mxu0 %v1603
      %1628 = vmatprep.subr.bf16.mxu0 0
      %1629 = vmatpush1.bf16.msra.mxu0 0
      %1630 = vmatprep.subr.bf16.mxu0 0
      %1631 = vmatpush1.bf16.msra.mxu0 0
      %1632 = vmatprep.subr.bf16.mxu0 0
      %1633 = vmatpush1.bf16.msra.mxu0 0
      %1634 = vmatprep.subr.bf16.mxu0 0
      %1635 = vmatpush1.bf16.msra.mxu0 0
      %1636 = vmatprep.subr.bf16.mxu0 0
      %1637 = vmatpush1.bf16.msra.mxu0 0
      %1638 = vmatprep.subr.bf16.mxu0 0
      %1639 = vmatpush1.bf16.msra.mxu0 0
      %1640 = vmatprep.subr.bf16.mxu0 0
      %1641 = vmatpush1.bf16.msra.mxu0 0
      %1642 = vmatprep.subr.bf16.mxu0 0
      %1643 = vmatpush1.bf16.msra.mxu0 0
      %1644 = vmatprep.mubr.bf16.mxu0 0
      %1645 = vmatmul.mubr.bf16.gmra.mrb[0].mxu0 %v1543
      %v1646 = vpop.f32.mrb[0].mxu0
      %v1647 = vadd.f32 0.0, %v1646
      %v1648 = vpop.f32.mrb[0].mxu0
      %v1649 = vpop.f32.mrb[0].mxu0
      %v1650 = vadd.f32 0.0, %v1649
      %v1651 = vpop.f32.mrb[0].mxu0
      %1652 = vmatprep.mubr.bf16.mxu0 0
      %1653 = vmatmul.mubr.bf16.gmra.mrb[0].mxu0 %v1544
      %v1654 = vpop.f32.mrb[0].mxu0
      %v1655 = vadd.f32 0.0, %v1654
      %v1656 = vpop.f32.mrb[0].mxu0
      %v1657 = vpop.f32.mrb[0].mxu0
      %v1658 = vadd.f32 0.0, %v1657
      %v1659 = vpop.f32.mrb[0].mxu0
      %1660 = vmatprep.mubr.bf16.mxu0 0
      %1661 = vmatmul.mubr.bf16.gmra.mrb[0].mxu0 %v1545
      %v1662 = vpop.f32.mrb[0].mxu0
      %v1663 = vadd.f32 0.0, %v1662
      %v1664 = vpop.f32.mrb[0].mxu0
      %v1665 = vpop.f32.mrb[0].mxu0
      %v1666 = vadd.f32 0.0, %v1665
      %v1667 = vpop.f32.mrb[0].mxu0
      %1668 = vmatprep.mubr.bf16.mxu0 0
      %1669 = vmatmul.mubr.bf16.gmra.mrb[0].mxu0 %v1546
      %v1670 = vpop.f32.mrb[0].mxu0
      %v1671 = vadd.f32 0.0, %v1670
      %v1672 = vpop.f32.mrb[0].mxu0
      %v1673 = vpop.f32.mrb[0].mxu0
      %v1674 = vadd.f32 0.0, %v1673
      %v1675 = vpop.f32.mrb[0].mxu0
      %1676 = vdwg.mxu0
      %v1677 = vadd.f32 %v1519, %v1647
      %v1678 = vadd.f32 %v1520, %v1650
      %v1679 = vadd.f32 %v1521, %v1655
      %v1680 = vadd.f32 %v1522, %v1658
      %v1681 = vadd.f32 %v1523, %v1663
      %v1682 = vadd.f32 %v1524, %v1666
      %v1683 = vadd.f32 %v1525, %v1671
      %v1684 = vadd.f32 %v1526, %v1674
      %v1685 = vld [vmem:[#allocation2 + $0x27] sm:$0xff]
      %v1686 = vld [vmem:[#allocation2 + $0x2f] sm:$0xff]
      %v1687 = vld [vmem:[#allocation2 + $0x37] sm:$0xff]
      %v1688 = vld [vmem:[#allocation2 + $0x3f] sm:$0xff]
      %v1689 = vld [vmem:[#allocation2 + $0x47] sm:$0xff]
      %v1690 = vld [vmem:[#allocation2 + $0x4f] sm:$0xff]
      %v1691 = vld [vmem:[#allocation2 + $0x57] sm:$0xff]
      %v1692 = vld [vmem:[#allocation2 + $0x5f] sm:$0xff]
      %v1693 = vmul.f32 %v1685, %v738
      %v1694 = vmul.f32 %v1686, %v739
      %v1695 = vmul.f32 %v1687, %v740
      %v1696 = vmul.f32 %v1688, %v741
      %v1697 = vmul.f32 %v1689, %v742
      %v1698 = vmul.f32 %v1690, %v743
      %v1699 = vmul.f32 %v1691, %v744
      %v1700 = vmul.f32 %v1692, %v745
      %v1701 = vpack.c.bf16 %v1694, %v1693
      %v1702 = vpack.c.bf16 %v1696, %v1695
      %v1703 = vpack.c.bf16 %v1698, %v1697
      %v1704 = vpack.c.bf16 %v1700, %v1699
      %s1705 = scalar_lea.vmem %s5, 384
      %v1706 = vld [vmem:[%s1705] sm:$0xf]
      %v1707 = vld [vmem:[%s1705 + $0x4] sm:$0xf]
      %v1708 = vld [vmem:[%s1705 + $0x8] sm:$0xf]
      %v1709 = vld [vmem:[%s1705 + $0xc] sm:$0xf]
      %v1710 = vld [vmem:[%s1705 + $0x10] sm:$0xf]
      %v1711 = vld [vmem:[%s1705 + $0x14] sm:$0xf]
      %v1712 = vld [vmem:[%s1705 + $0x18] sm:$0xf]
      %v1713 = vld [vmem:[%s1705 + $0x1c] sm:$0xf]
      %v1714 = vld [vmem:[%s1705 + $0x20] sm:$0xf]
      %v1715 = vld [vmem:[%s1705 + $0x24] sm:$0xf]
      %v1716 = vld [vmem:[%s1705 + $0x28] sm:$0xf]
      %v1717 = vld [vmem:[%s1705 + $0x2c] sm:$0xf]
      %v1718 = vld [vmem:[%s1705 + $0x30] sm:$0xf]
      %v1719 = vld [vmem:[%s1705 + $0x34] sm:$0xf]
      %v1720 = vld [vmem:[%s1705 + $0x38] sm:$0xf]
      %v1721 = vld [vmem:[%s1705 + $0x3c] sm:$0xf]
      %v1738 = vunpack.c.l.b16 %v1706
      %v1739 = vunpack.c.l.b16 %v1707
      %v1740 = vunpack.c.l.b16 %v1708
      %v1741 = vunpack.c.l.b16 %v1709
      %v1742 = vunpack.c.l.b16 %v1710
      %v1743 = vunpack.c.l.b16 %v1711
      %v1744 = vunpack.c.l.b16 %v1712
      %v1745 = vunpack.c.l.b16 %v1713
      %v1746 = vunpack.c.l.b16 %v1714
      %v1747 = vunpack.c.l.b16 %v1715
      %v1748 = vunpack.c.l.b16 %v1716
      %v1749 = vunpack.c.l.b16 %v1717
      %v1750 = vunpack.c.l.b16 %v1718
      %v1751 = vunpack.c.l.b16 %v1719
      %v1752 = vunpack.c.l.b16 %v1720
      %v1753 = vunpack.c.l.b16 %v1721
      %v1754 = vpack.c.b16 %v1739, %v1738
      %v1755 = vpack.c.b16 %v1741, %v1740
      %v1756 = vpack.c.b16 %v1743, %v1742
      %v1757 = vpack.c.b16 %v1745, %v1744
      %v1758 = vpack.c.b16 %v1747, %v1746
      %v1759 = vpack.c.b16 %v1749, %v1748
      %v1760 = vpack.c.b16 %v1751, %v1750
      %v1761 = vpack.c.b16 %v1753, %v1752
      %1770 = vmatprep.subr.bf16.mxu0 0
      %1771 = vmatpush1.bf16.msra.mxu0 %v1754
      %1772 = vmatprep.subr.bf16.mxu0 0
      %1773 = vmatpush1.bf16.msra.mxu0 %v1755
      %1774 = vmatprep.subr.bf16.mxu0 0
      %1775 = vmatpush1.bf16.msra.mxu0 %v1756
      %1776 = vmatprep.subr.bf16.mxu0 0
      %1777 = vmatpush1.bf16.msra.mxu0 %v1757
      %1778 = vmatprep.subr.bf16.mxu0 0
      %1779 = vmatpush1.bf16.msra.mxu0 %v1758
      %1780 = vmatprep.subr.bf16.mxu0 0
      %1781 = vmatpush1.bf16.msra.mxu0 %v1759
      %1782 = vmatprep.subr.bf16.mxu0 0
      %1783 = vmatpush1.bf16.msra.mxu0 %v1760
      %1784 = vmatprep.subr.bf16.mxu0 0
      %1785 = vmatpush1.bf16.msra.mxu0 %v1761
      %1786 = vmatprep.subr.bf16.mxu0 0
      %1787 = vmatpush1.bf16.msra.mxu0 0
      %1788 = vmatprep.subr.bf16.mxu0 0
      %1789 = vmatpush1.bf16.msra.mxu0 0
      %1790 = vmatprep.subr.bf16.mxu0 0
      %1791 = vmatpush1.bf16.msra.mxu0 0
      %1792 = vmatprep.subr.bf16.mxu0 0
      %1793 = vmatpush1.bf16.msra.mxu0 0
      %1794 = vmatprep.subr.bf16.mxu0 0
      %1795 = vmatpush1.bf16.msra.mxu0 0
      %1796 = vmatprep.subr.bf16.mxu0 0
      %1797 = vmatpush1.bf16.msra.mxu0 0
      %1798 = vmatprep.subr.bf16.mxu0 0
      %1799 = vmatpush1.bf16.msra.mxu0 0
      %1800 = vmatprep.subr.bf16.mxu0 0
      %1801 = vmatpush1.bf16.msra.mxu0 0
      %1802 = vmatprep.mubr.bf16.mxu0 0
      %1803 = vmatmul.mubr.bf16.gmra.mrb[0].mxu0 %v1701
      %v1804 = vpop.f32.mrb[0].mxu0
      %v1805 = vadd.f32 0.0, %v1804
      %v1806 = vpop.f32.mrb[0].mxu0
      %v1807 = vpop.f32.mrb[0].mxu0
      %v1808 = vadd.f32 0.0, %v1807
      %v1809 = vpop.f32.mrb[0].mxu0
      %1810 = vmatprep.mubr.bf16.mxu0 0
      %1811 = vmatmul.mubr.bf16.gmra.mrb[0].mxu0 %v1702
      %v1812 = vpop.f32.mrb[0].mxu0
      %v1813 = vadd.f32 0.0, %v1812
      %v1814 = vpop.f32.mrb[0].mxu0
      %v1815 = vpop.f32.mrb[0].mxu0
      %v1816 = vadd.f32 0.0, %v1815
      %v1817 = vpop.f32.mrb[0].mxu0
      %1818 = vmatprep.mubr.bf16.mxu0 0
      %1819 = vmatmul.mubr.bf16.gmra.mrb[0].mxu0 %v1703
      %v1820 = vpop.f32.mrb[0].mxu0
      %v1821 = vadd.f32 0.0, %v1820
      %v1822 = vpop.f32.mrb[0].mxu0
      %v1823 = vpop.f32.mrb[0].mxu0
      %v1824 = vadd.f32 0.0, %v1823
      %v1825 = vpop.f32.mrb[0].mxu0
      %1826 = vmatprep.mubr.bf16.mxu0 0
      %1827 = vmatmul.mubr.bf16.gmra.mrb[0].mxu0 %v1704
      %v1828 = vpop.f32.mrb[0].mxu0
      %v1829 = vadd.f32 0.0, %v1828
      %v1830 = vpop.f32.mrb[0].mxu0
      %v1831 = vpop.f32.mrb[0].mxu0
      %v1832 = vadd.f32 0.0, %v1831
      %v1833 = vpop.f32.mrb[0].mxu0
      %1834 = vdwg.mxu0
      %v1835 = vadd.f32 %v1677, %v1805
      %v1836 = vadd.f32 %v1678, %v1808
      %v1837 = vadd.f32 %v1679, %v1813
      %v1838 = vadd.f32 %v1680, %v1816
      %v1839 = vadd.f32 %v1681, %v1821
      %v1840 = vadd.f32 %v1682, %v1824
      %v1841 = vadd.f32 %v1683, %v1829
      %v1842 = vadd.f32 %v1684, %v1832
      %v1843 = vld [vmem:[#allocation2 + $0x28] sm:$0xff]
      %v1844 = vld [vmem:[#allocation2 + $0x30] sm:$0xff]
      %v1845 = vld [vmem:[#allocation2 + $0x38] sm:$0xff]
      %v1846 = vld [vmem:[#allocation2 + $0x40] sm:$0xff]
      %v1847 = vld [vmem:[#allocation2 + $0x48] sm:$0xff]
      %v1848 = vld [vmem:[#allocation2 + $0x50] sm:$0xff]
      %v1849 = vld [vmem:[#allocation2 + $0x58] sm:$0xff]
      %v1850 = vld [vmem:[#allocation2 + $0x60] sm:$0xff]
      %v1851 = vpack.c.bf16 %v1844, %v1843
      %v1852 = vpack.c.bf16 %v1846, %v1845
      %v1853 = vpack.c.bf16 %v1848, %v1847
      %v1854 = vpack.c.bf16 %v1850, %v1849
      %s1855 = scalar_lea.vmem %s5, 448
      %v1856 = vld [vmem:[%s1855] sm:$0xf]
      %v1857 = vld [vmem:[%s1855 + $0x4] sm:$0xf]
      %v1858 = vld [vmem:[%s1855 + $0x8] sm:$0xf]
      %v1859 = vld [vmem:[%s1855 + $0xc] sm:$0xf]
      %v1860 = vld [vmem:[%s1855 + $0x10] sm:$0xf]
      %v1861 = vld [vmem:[%s1855 + $0x14] sm:$0xf]
      %v1862 = vld [vmem:[%s1855 + $0x18] sm:$0xf]
      %v1863 = vld [vmem:[%s1855 + $0x1c] sm:$0xf]
      %v1864 = vld [vmem:[%s1855 + $0x20] sm:$0xf]
      %v1865 = vld [vmem:[%s1855 + $0x24] sm:$0xf]
      %v1866 = vld [vmem:[%s1855 + $0x28] sm:$0xf]
      %v1867 = vld [vmem:[%s1855 + $0x2c] sm:$0xf]
      %v1868 = vld [vmem:[%s1855 + $0x30] sm:$0xf]
      %v1869 = vld [vmem:[%s1855 + $0x34] sm:$0xf]
      %v1870 = vld [vmem:[%s1855 + $0x38] sm:$0xf]
      %v1871 = vld [vmem:[%s1855 + $0x3c] sm:$0xf]
      %v1888 = vunpack.c.l.b16 %v1856
      %v1889 = vunpack.c.l.b16 %v1857
      %v1890 = vunpack.c.l.b16 %v1858
      %v1891 = vunpack.c.l.b16 %v1859
      %v1892 = vunpack.c.l.b16 %v1860
      %v1893 = vunpack.c.l.b16 %v1861
      %v1894 = vunpack.c.l.b16 %v1862
      %v1895 = vunpack.c.l.b16 %v1863
      %v1896 = vunpack.c.l.b16 %v1864
      %v1897 = vunpack.c.l.b16 %v1865
      %v1898 = vunpack.c.l.b16 %v1866
      %v1899 = vunpack.c.l.b16 %v1867
      %v1900 = vunpack.c.l.b16 %v1868
      %v1901 = vunpack.c.l.b16 %v1869
      %v1902 = vunpack.c.l.b16 %v1870
      %v1903 = vunpack.c.l.b16 %v1871
      %v1904 = vpack.c.b16 %v1889, %v1888
      %v1905 = vpack.c.b16 %v1891, %v1890
      %v1906 = vpack.c.b16 %v1893, %v1892
      %v1907 = vpack.c.b16 %v1895, %v1894
      %v1908 = vpack.c.b16 %v1897, %v1896
      %v1909 = vpack.c.b16 %v1899, %v1898
      %v1910 = vpack.c.b16 %v1901, %v1900
      %v1911 = vpack.c.b16 %v1903, %v1902
      %1920 = vmatprep.subr.bf16.mxu0 0
      %1921 = vmatpush1.bf16.msra.mxu0 %v1904
      %1922 = vmatprep.subr.bf16.mxu0 0
      %1923 = vmatpush1.bf16.msra.mxu0 %v1905
      %1924 = vmatprep.subr.bf16.mxu0 0
      %1925 = vmatpush1.bf16.msra.mxu0 %v1906
      %1926 = vmatprep.subr.bf16.mxu0 0
      %1927 = vmatpush1.bf16.msra.mxu0 %v1907
      %1928 = vmatprep.subr.bf16.mxu0 0
      %1929 = vmatpush1.bf16.msra.mxu0 %v1908
      %1930 = vmatprep.subr.bf16.mxu0 0
      %1931 = vmatpush1.bf16.msra.mxu0 %v1909
      %1932 = vmatprep.subr.bf16.mxu0 0
      %1933 = vmatpush1.bf16.msra.mxu0 %v1910
      %1934 = vmatprep.subr.bf16.mxu0 0
      %1935 = vmatpush1.bf16.msra.mxu0 %v1911
      %1936 = vmatprep.subr.bf16.mxu0 0
      %1937 = vmatpush1.bf16.msra.mxu0 0
      %1938 = vmatprep.subr.bf16.mxu0 0
      %1939 = vmatpush1.bf16.msra.mxu0 0
      %1940 = vmatprep.subr.bf16.mxu0 0
      %1941 = vmatpush1.bf16.msra.mxu0 0
      %1942 = vmatprep.subr.bf16.mxu0 0
      %1943 = vmatpush1.bf16.msra.mxu0 0
      %1944 = vmatprep.subr.bf16.mxu0 0
      %1945 = vmatpush1.bf16.msra.mxu0 0
      %1946 = vmatprep.subr.bf16.mxu0 0
      %1947 = vmatpush1.bf16.msra.mxu0 0
      %1948 = vmatprep.subr.bf16.mxu0 0
      %1949 = vmatpush1.bf16.msra.mxu0 0
      %1950 = vmatprep.subr.bf16.mxu0 0
      %1951 = vmatpush1.bf16.msra.mxu0 0
      %1952 = vmatprep.mubr.bf16.mxu0 0
      %1953 = vmatmul.mubr.bf16.gmra.mrb[0].mxu0 %v1851
      %v1954 = vpop.f32.mrb[0].mxu0
      %v1955 = vadd.f32 0.0, %v1954
      %v1956 = vpop.f32.mrb[0].mxu0
      %v1957 = vpop.f32.mrb[0].mxu0
      %v1958 = vadd.f32 0.0, %v1957
      %v1959 = vpop.f32.mrb[0].mxu0
      %1960 = vmatprep.mubr.bf16.mxu0 0
      %1961 = vmatmul.mubr.bf16.gmra.mrb[0].mxu0 %v1852
      %v1962 = vpop.f32.mrb[0].mxu0
      %v1963 = vadd.f32 0.0, %v1962
      %v1964 = vpop.f32.mrb[0].mxu0
      %v1965 = vpop.f32.mrb[0].mxu0
      %v1966 = vadd.f32 0.0, %v1965
      %v1967 = vpop.f32.mrb[0].mxu0
      %1968 = vmatprep.mubr.bf16.mxu0 0
      %1969 = vmatmul.mubr.bf16.gmra.mrb[0].mxu0 %v1853
      %v1970 = vpop.f32.mrb[0].mxu0
      %v1971 = vadd.f32 0.0, %v1970
      %v1972 = vpop.f32.mrb[0].mxu0
      %v1973 = vpop.f32.mrb[0].mxu0
      %v1974 = vadd.f32 0.0, %v1973
      %v1975 = vpop.f32.mrb[0].mxu0
      %1976 = vmatprep.mubr.bf16.mxu0 0
      %1977 = vmatmul.mubr.bf16.gmra.mrb[0].mxu0 %v1854
      %v1978 = vpop.f32.mrb[0].mxu0
      %v1979 = vadd.f32 0.0, %v1978
      %v1980 = vpop.f32.mrb[0].mxu0
      %v1981 = vpop.f32.mrb[0].mxu0
      %v1982 = vadd.f32 0.0, %v1981
      %v1983 = vpop.f32.mrb[0].mxu0
      %1984 = vdwg.mxu0
      %v1985 = vadd.f32 %v1835, %v1955
      %v1986 = vadd.f32 %v1836, %v1958
      %v1987 = vadd.f32 %v1837, %v1963
      %v1988 = vadd.f32 %v1838, %v1966
      %v1989 = vadd.f32 %v1839, %v1971
      %v1990 = vadd.f32 %v1840, %v1974
      %v1991 = vadd.f32 %v1841, %v1979
      %v1992 = vadd.f32 %v1842, %v1982
      %v1993 = vld [vmem:[#allocation2 + $0x29] sm:$0xff]
      %v1994 = vld [vmem:[#allocation2 + $0x31] sm:$0xff]
      %v1995 = vld [vmem:[#allocation2 + $0x39] sm:$0xff]
      %v1996 = vld [vmem:[#allocation2 + $0x41] sm:$0xff]
      %v1997 = vld [vmem:[#allocation2 + $0x49] sm:$0xff]
      %v1998 = vld [vmem:[#allocation2 + $0x51] sm:$0xff]
      %v1999 = vld [vmem:[#allocation2 + $0x59] sm:$0xff]
      %v2000 = vld [vmem:[#allocation2 + $0x61] sm:$0xff]
      %v2001 = vmul.f32 %v1993, %v762
      %v2002 = vmul.f32 %v1994, %v763
      %v2003 = vmul.f32 %v1995, %v764
      %v2004 = vmul.f32 %v1996, %v765
      %v2005 = vmul.f32 %v1997, %v766
      %v2006 = vmul.f32 %v1998, %v767
      %v2007 = vmul.f32 %v1999, %v768
      %v2008 = vmul.f32 %v2000, %v769
      %v2009 = vpack.c.bf16 %v2002, %v2001
      %v2010 = vpack.c.bf16 %v2004, %v2003
      %v2011 = vpack.c.bf16 %v2006, %v2005
      %v2012 = vpack.c.bf16 %v2008, %v2007
      %s2013 = scalar_lea.vmem %s5, 512
      %v2014 = vld [vmem:[%s2013] sm:$0xf]
      %v2015 = vld [vmem:[%s2013 + $0x4] sm:$0xf]
      %v2016 = vld [vmem:[%s2013 + $0x8] sm:$0xf]
      %v2017 = vld [vmem:[%s2013 + $0xc] sm:$0xf]
      %v2018 = vld [vmem:[%s2013 + $0x10] sm:$0xf]
      %v2019 = vld [vmem:[%s2013 + $0x14] sm:$0xf]
      %v2020 = vld [vmem:[%s2013 + $0x18] sm:$0xf]
      %v2021 = vld [vmem:[%s2013 + $0x1c] sm:$0xf]
      %v2022 = vld [vmem:[%s2013 + $0x20] sm:$0xf]
      %v2023 = vld [vmem:[%s2013 + $0x24] sm:$0xf]
      %v2024 = vld [vmem:[%s2013 + $0x28] sm:$0xf]
      %v2025 = vld [vmem:[%s2013 + $0x2c] sm:$0xf]
      %v2026 = vld [vmem:[%s2013 + $0x30] sm:$0xf]
      %v2027 = vld [vmem:[%s2013 + $0x34] sm:$0xf]
      %v2028 = vld [vmem:[%s2013 + $0x38] sm:$0xf]
      %v2029 = vld [vmem:[%s2013 + $0x3c] sm:$0xf]
      %v2046 = vunpack.c.l.b16 %v2014
      %v2047 = vunpack.c.l.b16 %v2015
      %v2048 = vunpack.c.l.b16 %v2016
      %v2049 = vunpack.c.l.b16 %v2017
      %v2050 = vunpack.c.l.b16 %v2018
      %v2051 = vunpack.c.l.b16 %v2019
      %v2052 = vunpack.c.l.b16 %v2020
      %v2053 = vunpack.c.l.b16 %v2021
      %v2054 = vunpack.c.l.b16 %v2022
      %v2055 = vunpack.c.l.b16 %v2023
      %v2056 = vunpack.c.l.b16 %v2024
      %v2057 = vunpack.c.l.b16 %v2025
      %v2058 = vunpack.c.l.b16 %v2026
      %v2059 = vunpack.c.l.b16 %v2027
      %v2060 = vunpack.c.l.b16 %v2028
      %v2061 = vunpack.c.l.b16 %v2029
      %v2062 = vpack.c.b16 %v2047, %v2046
      %v2063 = vpack.c.b16 %v2049, %v2048
      %v2064 = vpack.c.b16 %v2051, %v2050
      %v2065 = vpack.c.b16 %v2053, %v2052
      %v2066 = vpack.c.b16 %v2055, %v2054
      %v2067 = vpack.c.b16 %v2057, %v2056
      %v2068 = vpack.c.b16 %v2059, %v2058
      %v2069 = vpack.c.b16 %v2061, %v2060
      %2078 = vmatprep.subr.bf16.mxu0 0
      %2079 = vmatpush1.bf16.msra.mxu0 %v2062
      %2080 = vmatprep.subr.bf16.mxu0 0
      %2081 = vmatpush1.bf16.msra.mxu0 %v2063
      %2082 = vmatprep.subr.bf16.mxu0 0
      %2083 = vmatpush1.bf16.msra.mxu0 %v2064
      %2084 = vmatprep.subr.bf16.mxu0 0
      %2085 = vmatpush1.bf16.msra.mxu0 %v2065
      %2086 = vmatprep.subr.bf16.mxu0 0
      %2087 = vmatpush1.bf16.msra.mxu0 %v2066
      %2088 = vmatprep.subr.bf16.mxu0 0
      %2089 = vmatpush1.bf16.msra.mxu0 %v2067
      %2090 = vmatprep.subr.bf16.mxu0 0
      %2091 = vmatpush1.bf16.msra.mxu0 %v2068
      %2092 = vmatprep.subr.bf16.mxu0 0
      %2093 = vmatpush1.bf16.msra.mxu0 %v2069
      %2094 = vmatprep.subr.bf16.mxu0 0
      %2095 = vmatpush1.bf16.msra.mxu0 0
      %2096 = vmatprep.subr.bf16.mxu0 0
      %2097 = vmatpush1.bf16.msra.mxu0 0
      %2098 = vmatprep.subr.bf16.mxu0 0
      %2099 = vmatpush1.bf16.msra.mxu0 0
      %2100 = vmatprep.subr.bf16.mxu0 0
      %2101 = vmatpush1.bf16.msra.mxu0 0
      %2102 = vmatprep.subr.bf16.mxu0 0
      %2103 = vmatpush1.bf16.msra.mxu0 0
      %2104 = vmatprep.subr.bf16.mxu0 0
      %2105 = vmatpush1.bf16.msra.mxu0 0
      %2106 = vmatprep.subr.bf16.mxu0 0
      %2107 = vmatpush1.bf16.msra.mxu0 0
      %2108 = vmatprep.subr.bf16.mxu0 0
      %2109 = vmatpush1.bf16.msra.mxu0 0
      %2110 = vmatprep.mubr.bf16.mxu0 0
      %2111 = vmatmul.mubr.bf16.gmra.mrb[0].mxu0 %v2009
      %v2112 = vpop.f32.mrb[0].mxu0
      %v2113 = vadd.f32 0.0, %v2112
      %v2114 = vpop.f32.mrb[0].mxu0
      %v2115 = vpop.f32.mrb[0].mxu0
      %v2116 = vadd.f32 0.0, %v2115
      %v2117 = vpop.f32.mrb[0].mxu0
      %2118 = vmatprep.mubr.bf16.mxu0 0
      %2119 = vmatmul.mubr.bf16.gmra.mrb[0].mxu0 %v2010
      %v2120 = vpop.f32.mrb[0].mxu0
      %v2121 = vadd.f32 0.0, %v2120
      %v2122 = vpop.f32.mrb[0].mxu0
      %v2123 = vpop.f32.mrb[0].mxu0
      %v2124 = vadd.f32 0.0, %v2123
      %v2125 = vpop.f32.mrb[0].mxu0
      %2126 = vmatprep.mubr.bf16.mxu0 0
      %2127 = vmatmul.mubr.bf16.gmra.mrb[0].mxu0 %v2011
      %v2128 = vpop.f32.mrb[0].mxu0
      %v2129 = vadd.f32 0.0, %v2128
      %v2130 = vpop.f32.mrb[0].mxu0
      %v2131 = vpop.f32.mrb[0].mxu0
      %v2132 = vadd.f32 0.0, %v2131
      %v2133 = vpop.f32.mrb[0].mxu0
      %2134 = vmatprep.mubr.bf16.mxu0 0
      %2135 = vmatmul.mubr.bf16.gmra.mrb[0].mxu0 %v2012
      %v2136 = vpop.f32.mrb[0].mxu0
      %v2137 = vadd.f32 0.0, %v2136
      %v2138 = vpop.f32.mrb[0].mxu0
      %v2139 = vpop.f32.mrb[0].mxu0
      %v2140 = vadd.f32 0.0, %v2139
      %v2141 = vpop.f32.mrb[0].mxu0
      %2142 = vdwg.mxu0
      %v2143 = vadd.f32 %v1985, %v2113
      %v2144 = vadd.f32 %v1986, %v2116
      %v2145 = vadd.f32 %v1987, %v2121
      %v2146 = vadd.f32 %v1988, %v2124
      %v2147 = vadd.f32 %v1989, %v2129
      %v2148 = vadd.f32 %v1990, %v2132
      %v2149 = vadd.f32 %v1991, %v2137
      %v2150 = vadd.f32 %v1992, %v2140
      %v2151 = vpack.c.bf16 %v2144, %v2143
      %v2152 = vpack.c.bf16 %v2146, %v2145
      %v2153 = vpack.c.bf16 %v2148, %v2147
      %v2154 = vpack.c.bf16 %v2150, %v2149
      %v2159 = vunpack.c.l.b16 %v2151
      %v2160 = vunpack.c.h.b16 %v2151
      %v2161 = vunpack.c.l.b16 %v2152
      %v2162 = vunpack.c.h.b16 %v2152
      %v2163 = vunpack.c.l.b16 %v2153
      %v2164 = vunpack.c.h.b16 %v2153
      %v2165 = vunpack.c.l.b16 %v2154
      %v2166 = vunpack.c.h.b16 %v2154
      %v2167 = vpack.c.b16 %v2159, %v2159
      %v2168 = vpack.c.b16 %v2160, %v2160
      %v2169 = vpack.c.b16 %v2161, %v2161
      %v2170 = vpack.c.b16 %v2162, %v2162
      %v2171 = vpack.c.b16 %v2163, %v2163
      %v2172 = vpack.c.b16 %v2164, %v2164
      %v2173 = vpack.c.b16 %v2165, %v2165
      %v2174 = vpack.c.b16 %v2166, %v2166
      %2183 = vst [vmem:[%s482] sm:$0xf] %v2167
      %2184 = vst [vmem:[%s482 + $0x4] sm:$0xf] %v2168
      %2185 = vst [vmem:[%s482 + $0x8] sm:$0xf] %v2169
      %2186 = vst [vmem:[%s482 + $0xc] sm:$0xf] %v2170
      %2187 = vst [vmem:[%s482 + $0x10] sm:$0xf] %v2171
      %2188 = vst [vmem:[%s482 + $0x14] sm:$0xf] %v2172
      %2189 = vst [vmem:[%s482 + $0x18] sm:$0xf] %v2173
      %2190 = vst [vmem:[%s482 + $0x1c] sm:$0xf] %v2174
      // Predicated region
      $region45: #{double_conv.4} parent=43 // pred_check
        %p2191 = pneg %p493
      $region46: #{double_conv.4} parent=43 // pred_check_branch
        %2193 = sbr.rel (%p2191) target = $region48
      $region47: #{double_conv.4} parent=43 // pred_region
        %2194 = vst [vmem:[%s486] sm:$0x1] 0.0
        %2195 = vst [vmem:[%s489] sm:$0x1] 0.0
      $region48: #{double_conv.4} parent=43 // pred_fallthru
        _
      %v2196 = vld [vmem:[%s486] sm:$0x1]
      %v2197 = vadd.f32 %v2143, %v2144
      %v2198 = vadd.f32 %v2197, %v2145
      %v2199 = vadd.f32 %v2198, %v2146
      %v2200 = vadd.f32 %v2199, %v2147
      %v2201 = vadd.f32 %v2200, %v2148
      %v2202 = vadd.f32 %v2201, %v2149
      %v2203 = vadd.f32 %v2202, %v2150
      %v2204 = vrot.slane %v2203, 4
      %v2205 = vadd.f32 %v2203, %v2204
      %v2206 = vrot.slane %v2205, 2
      %v2207 = vadd.f32 %v2205, %v2206
      %v2208 = vrot.slane %v2207, 1
      %v2209 = vadd.f32 %v2207, %v2208
      %v2210 = vadd.f32 %v2196, %v2209
      %2211 = vst [vmem:[%s486] sm:$0x1] %v2210
      %v2212 = vld [vmem:[%s489] sm:$0x1]
      %v2213 = vmul.f32 %v2143, %v2143
      %v2214 = vmul.f32 %v2144, %v2144
      %v2215 = vmul.f32 %v2145, %v2145
      %v2216 = vmul.f32 %v2146, %v2146
      %v2217 = vmul.f32 %v2147, %v2147
      %v2218 = vmul.f32 %v2148, %v2148
      %v2219 = vmul.f32 %v2149, %v2149
      %v2220 = vmul.f32 %v2150, %v2150
      %v2221 = vadd.f32 %v2213, %v2214
      %v2222 = vadd.f32 %v2221, %v2215
      %v2223 = vadd.f32 %v2222, %v2216
      %v2224 = vadd.f32 %v2223, %v2217
      %v2225 = vadd.f32 %v2224, %v2218
      %v2226 = vadd.f32 %v2225, %v2219
      %v2227 = vadd.f32 %v2226, %v2220
      %v2228 = vrot.slane %v2227, 4
      %v2229 = vadd.f32 %v2227, %v2228
      %v2230 = vrot.slane %v2229, 2
      %v2231 = vadd.f32 %v2229, %v2230
      %v2232 = vrot.slane %v2231, 1
      %v2233 = vadd.f32 %v2231, %v2232
      %v2234 = vadd.f32 %v2212, %v2233
      %2235 = vst [vmem:[%s489] sm:$0x1] %v2234
      %s2236 = smul.u32 8, %s25
      %p2237 = scmp.lt.s32.totalorder %s24, 1
      %s2238 = scalar_select %p2237, %s24, 1
      %p2239 = scmp.lt.s32.totalorder %s2236, 31
      %s2240 = scalar_select %p2239, %s2236, 31
      %s2241 = smul.addr %s2238, 32
      %s2242 = sadd.s32 %s2240, %s2241
      %s2243 = smul.addr %s2242, 4
      %s2244 = scalar_lea.vmem %s6, %s2243
      %p2245 = scmp.lt.s32.totalorder %s24, 1
      %s2246 = scalar_select %p2245, %s24, 1
      %s2247 = scalar_lea.vmem %s7, %s2246
      %p2248 = scmp.lt.s32.totalorder %s24, 1
      %s2249 = scalar_select %p2248, %s24, 1
      %s2250 = scalar_lea.vmem %s8, %s2249
      // Predicated region
      $region49: #{double_conv.4} parent=43 // pred_check
        %p2251 = pneg %p215
      $region50: #{double_conv.4} parent=43 // pred_check_branch
        %2253 = sbr.rel (%p2251) target = $region52
      $region51: #{double_conv.4} parent=43 // pred_region
        %s2254 = smul.u32 8, %s25
      $region52: #{double_conv.4} parent=43 // pred_fallthru
        _
      // Predicated region
      $region53: #{double_conv.4} parent=43 // pred_check
        %p2255 = pneg %p241
      $region54: #{double_conv.4} parent=43 // pred_check_branch
        %2257 = sbr.rel (%p2255) target = $region56
      $region55: #{double_conv.4} parent=43 // pred_region
        _
      $region56: #{double_conv.4} parent=43 // pred_fallthru
        _
      // Predicated region
      $region57: #{double_conv.4} parent=43 // pred_check
        %p2258 = pneg %p267
      $region58: #{double_conv.4} parent=43 // pred_check_branch
        %2260 = sbr.rel (%p2258) target = $region60
      $region59: #{double_conv.4} parent=43 // pred_region
        _
      $region60: #{double_conv.4} parent=43 // pred_fallthru
        _
    $region44: #{double_conv.4} parent=5 // pred_fallthru
      _
    %p2261 = scmp.le.s32.totalorder 2, %s15
    // Predicated region
    $region61: #{double_conv.4} parent=5 // pred_check
      %p2262 = pneg %p2261
    $region62: #{double_conv.4} parent=5 // pred_check_branch
      %2264 = sbr.rel (%p2262) target = $region64
    $region63: #{double_conv.4} parent=5 // pred_region
      %s2265 = ssub.s32 %s15, 2
      // Predicated region
      $region65: #{double_conv.4} parent=63 // pred_check
        %p2266 = pneg %p221
      $region66: #{double_conv.4} parent=63 // pred_check_branch
        %2268 = sbr.rel (%p2266) target = $region68
      $region67: #{double_conv.4} parent=63 // pred_region
        %s2269 = smul.u32 8, %s27
        %p2270 = scmp.lt.s32.totalorder %s26, 1
        %s2271 = scalar_select %p2270, %s26, 1
        %p2272 = scmp.lt.s32.totalorder %s2269, 31
        %s2273 = scalar_select %p2272, %s2269, 31
        %s2274 = smul.addr %s2271, 32
        %s2275 = sadd.s32 %s2273, %s2274
        %s2276 = smul.addr %s2275, 4
        %s2277 = scalar_lea.vmem %s6, %s2276
      $region68: #{double_conv.4} parent=63 // pred_fallthru
        _
      // Predicated region
      $region69: #{double_conv.4} parent=63 // pred_check
        %p2278 = pneg %p247
      $region70: #{double_conv.4} parent=63 // pred_check_branch
        %2280 = sbr.rel (%p2278) target = $region72
      $region71: #{double_conv.4} parent=63 // pred_region
        %p2281 = scmp.lt.s32.totalorder %s26, 1
        %s2282 = scalar_select %p2281, %s26, 1
        %s2283 = scalar_lea.vmem %s7, %s2282
      $region72: #{double_conv.4} parent=63 // pred_fallthru
        _
      // Predicated region
      $region73: #{double_conv.4} parent=63 // pred_check
        %p2284 = pneg %p273
      $region74: #{double_conv.4} parent=63 // pred_check_branch
        %2286 = sbr.rel (%p2284) target = $region76
      $region75: #{double_conv.4} parent=63 // pred_region
        %p2287 = scmp.lt.s32.totalorder %s26, 1
        %s2288 = scalar_select %p2287, %s26, 1
        %s2289 = scalar_lea.vmem %s8, %s2288
      $region76: #{double_conv.4} parent=63 // pred_fallthru
        _
    $region64: #{double_conv.4} parent=5 // pred_fallthru
      _
  $region6: #{double_conv.4} parent=0 // loop_footer
    %s19 = sadd.s32 1, %s15
  $region7: #{double_conv.4} parent=0 // loop_footer_branch
    %14 = sbr.rel target = $region3
  $region8: #{double_conv.4} parent=0 // loop_exit
    _

</llo_original>
